<compile_context>
chip_gen: v6e
topology: v6e:2x2x1
jax: 0.10.0
libtpu: 0.0.40
codegen_flags: <defaults>
</compile_context>

<pallas_src>
import functools

import jax
import jax.numpy as jnp
import numpy as np
from jax.experimental import pallas as pl
from jax.experimental.pallas import tpu as pltpu

IN_DIM = 7056          # 84 * 84
HID = 200
K_PAD = 7168           # 56 * 128 (lane aligned)
HID_PAD = 256          # 200 -> 2 * 128
N_PAD = 128            # action logits padded to one full lane tile
NEG_INF = -1e30        # bias filler for padded action columns (softmax -> 0)


def pong_policy_kernel(x_ref, w1_ref, s1_ref, b1_ref, w2_ref, b2_ref,
                       w3_ref, b3_ref, out_ref):
    # fc1: int8 weights dequantized in VMEM (lossless int8->bf16), f32 MXU acc,
    # per-column scale folded into the f32 accumulator.
    x = x_ref[...]                                              # (B_PAD, K_PAD) bf16
    w1 = w1_ref[...].astype(jnp.bfloat16)                       # (K_PAD, HID_PAD)
    acc = jnp.dot(x, w1, preferred_element_type=jnp.float32)    # (B_PAD, HID_PAD) f32
    h1 = jnp.maximum(acc * s1_ref[...] + b1_ref[...], 0.0)

    # fc2 + ReLU
    h2 = jnp.dot(h1.astype(jnp.bfloat16), w2_ref[...],
                 preferred_element_type=jnp.float32) + b2_ref[...]
    h2 = jnp.maximum(h2, 0.0)

    # fc3 + numerically stable softmax (padded columns carry -1e30 bias -> 0)
    s = jnp.dot(h2.astype(jnp.bfloat16), w3_ref[...],
                preferred_element_type=jnp.float32) + b3_ref[...]   # (B_PAD, N_PAD)
    m = jnp.max(s, axis=-1, keepdims=True)
    e = jnp.exp(s - m)
    out_ref[...] = (e / jnp.sum(e, axis=-1, keepdims=True)).astype(out_ref.dtype)


def pad_params(params, n_actions):
    """f32 (in,out)-layout params -> padded kernel params.

    w1 -> int8 (per-output-column symmetric quant) + f32 scales,
    w2/w3 -> bf16, biases -> f32. All padded to (8,128)-friendly shapes.
    """
    w1, b1, w2, b2, w3, b3 = params

    amax = jnp.maximum(jnp.max(jnp.abs(w1), axis=0, keepdims=True), 1e-30)  # (1, HID)
    scale = amax / 127.0
    w1_q = jnp.clip(jnp.round(w1 / scale), -127, 127).astype(jnp.int8)

    w1p = jnp.zeros((K_PAD, HID_PAD), jnp.int8).at[:IN_DIM, :HID].set(w1_q)
    s1p = jnp.ones((1, HID_PAD), jnp.float32).at[:, :HID].set(scale)
    b1p = jnp.zeros((1, HID_PAD), jnp.float32).at[:, :HID].set(b1)

    w2p = jnp.zeros((HID_PAD, HID_PAD), jnp.bfloat16)
    w2p = w2p.at[:HID, :HID].set(w2.astype(jnp.bfloat16))
    b2p = jnp.zeros((1, HID_PAD), jnp.float32).at[:, :HID].set(b2)

    w3p = jnp.zeros((HID_PAD, N_PAD), jnp.bfloat16)
    w3p = w3p.at[:HID, :n_actions].set(w3.astype(jnp.bfloat16))
    b3p = jnp.full((1, N_PAD), NEG_INF, jnp.float32).at[:, :n_actions].set(b3)
    return w1p, s1p, b1p, w2p, b2p, w3p, b3p


@functools.partial(jax.jit, static_argnums=2)
def pong_policy_forward(x_nchw, padded_params, n_actions):
    """x_nchw: (B, 1, 84, 84) float32 (NCHW, as in PyTorch). Returns (B, n)."""
    w1, s1, b1, w2, b2, w3, b3 = padded_params
    B = x_nchw.shape[0]
    B_PAD = max(8, ((B + 7) // 8) * 8)                       # sublane-aligned batch

    x_flat = x_nchw.reshape(B, -1).astype(jnp.bfloat16)      # == torch .view(B, -1)
    x_pad = jnp.pad(x_flat, ((0, B_PAD - B), (0, K_PAD - IN_DIM)))   # (B_PAD, 7168)

    out = pl.pallas_call(
        pong_policy_kernel,
        out_shape=jax.ShapeDtypeStruct((B_PAD, N_PAD), jnp.float32),
        grid=(1,),                                           # single fused shot
        in_specs=[
            pl.BlockSpec((B_PAD, K_PAD), lambda k: (0, 0)),      # x (resident)
            pl.BlockSpec((K_PAD, HID_PAD), lambda k: (0, 0)),    # w1 int8
            pl.BlockSpec((1, HID_PAD), lambda k: (0, 0)),        # w1 scales
            pl.BlockSpec((1, HID_PAD), lambda k: (0, 0)),        # b1
            pl.BlockSpec((HID_PAD, HID_PAD), lambda k: (0, 0)),  # w2 bf16
            pl.BlockSpec((1, HID_PAD), lambda k: (0, 0)),        # b2
            pl.BlockSpec((HID_PAD, N_PAD), lambda k: (0, 0)),    # w3 bf16
            pl.BlockSpec((1, N_PAD), lambda k: (0, 0)),          # b3 (-1e30 pad)
        ],
        out_specs=pl.BlockSpec((B_PAD, N_PAD), lambda k: (0, 0)),
        compiler_params=pltpu.CompilerParams(
            dimension_semantics=("arbitrary",),
            vmem_limit_bytes=32 << 20,
        ),
    )(x_pad, w1, s1, b1, w2, b2, w3, b3)
    return out[:B, :n_actions]


def init_params(key, n_actions):
    """Deterministic init mimicking PyTorch nn.Linear (U[-1/sqrt(fan_in), +1/sqrt(fan_in)])."""
    def linear(k, fan_in, fan_out):
        kw, kb = jax.random.split(k)
        bound = 1.0 / np.sqrt(fan_in)
        w = jax.random.uniform(kw, (fan_in, fan_out), jnp.float32, -bound, bound)
        b = jax.random.uniform(kb, (1, fan_out), jnp.float32, -bound, bound)
        return w, b

    k1, k2, k3 = jax.random.split(key, 3)
    w1, b1 = linear(k1, IN_DIM, HID)
    w2, b2 = linear(k2, HID, HID)
    w3, b3 = linear(k3, HID, n_actions)
    return (w1, b1, w2, b2, w3, b3)


def reference_forward(x_nchw, params):
    """Pure-f32 JAX reference matching the PyTorch module."""
    w1, b1, w2, b2, w3, b3 = params
    x = x_nchw.reshape(x_nchw.shape[0], -1)
    h1 = jax.nn.relu(x @ w1 + b1)
    h2 = jax.nn.relu(h1 @ w2 + b2)
    return jax.nn.softmax(h2 @ w3 + b3, axis=-1)


if __name__ == "__main__":
    key = jax.random.PRNGKey(0)
    k_params, k_x = jax.random.split(key)

    n_actions = 6   # Pong action space
    batch = 2
    params = init_params(k_params, n_actions)
    padded = pad_params(params, n_actions)
    # Input consistent with the 7056 = 84*84 flatten in forward: NCHW (B,1,84,84)
    x = jax.random.uniform(k_x, (batch, 1, 84, 84), jnp.float32)

    out = pong_policy_forward(x, padded, n_actions)
    out = jax.block_until_ready(out)

    ref = reference_forward(x, params)
    # bf16 activations + int8 w1 (per-column scales) => loosened tolerance vs f32 ref.
    np.testing.assert_allclose(np.asarray(out), np.asarray(ref), rtol=5e-2, atol=1e-2)
    assert out.shape == (batch, n_actions)
    # exact softmax division -> rows sum to 1 up to f32 rounding
    np.testing.assert_allclose(np.asarray(out).sum(-1), np.ones(batch), atol=1e-4)

    print("KERNEL_OK")
</pallas_src>

<mosaic_0001>
module attributes {stable_mosaic.version = 11 : i64} {
  func.func @pong_policy_kernel(%arg0: i32, %arg1: memref<8x7168xbf16, #tpu.memory_space<vmem>>, %arg2: memref<7168x256xi8, #tpu.memory_space<vmem>>, %arg3: memref<1x256xf32, #tpu.memory_space<vmem>>, %arg4: memref<1x256xf32, #tpu.memory_space<vmem>>, %arg5: memref<256x256xbf16, #tpu.memory_space<vmem>>, %arg6: memref<1x256xf32, #tpu.memory_space<vmem>>, %arg7: memref<256x128xbf16, #tpu.memory_space<vmem>>, %arg8: memref<1x128xf32, #tpu.memory_space<vmem>>, %arg9: memref<8x128xf32, #tpu.memory_space<vmem>>) attributes {dimension_semantics = [#tpu.dimension_semantics<arbitrary>], iteration_bounds = array<i64: 1>, scalar_prefetch = 0 : i64, scratch_operands = 0 : i64, tpu.core_type = #tpu.core_type<tc>, window_params = [{pipeline_mode = #tpu.pipeline_mode<synchronous>, transform_indices = @transform_0, window_bounds = array<i64: 8, 7168>}, {pipeline_mode = #tpu.pipeline_mode<synchronous>, transform_indices = @transform_1, window_bounds = array<i64: 7168, 256>}, {pipeline_mode = #tpu.pipeline_mode<synchronous>, transform_indices = @transform_2, window_bounds = array<i64: 1, 256>}, {pipeline_mode = #tpu.pipeline_mode<synchronous>, transform_indices = @transform_3, window_bounds = array<i64: 1, 256>}, {pipeline_mode = #tpu.pipeline_mode<synchronous>, transform_indices = @transform_4, window_bounds = array<i64: 256, 256>}, {pipeline_mode = #tpu.pipeline_mode<synchronous>, transform_indices = @transform_5, window_bounds = array<i64: 1, 256>}, {pipeline_mode = #tpu.pipeline_mode<synchronous>, transform_indices = @transform_6, window_bounds = array<i64: 256, 128>}, {pipeline_mode = #tpu.pipeline_mode<synchronous>, transform_indices = @transform_7, window_bounds = array<i64: 1, 128>}, {pipeline_mode = #tpu.pipeline_mode<synchronous>, transform_indices = @transform_8, window_bounds = array<i64: 8, 128>}]} {
    %c0 = arith.constant 0 : index
    %c0_0 = arith.constant 0 : index
    %0 = vector.load %arg1[%c0, %c0_0] : memref<8x7168xbf16, #tpu.memory_space<vmem>>, vector<8x7168xbf16>
    %c0_1 = arith.constant 0 : index
    %c0_2 = arith.constant 0 : index
    %1 = vector.load %arg2[%c0_1, %c0_2] : memref<7168x256xi8, #tpu.memory_space<vmem>>, vector<7168x256xi8>
    %2 = arith.sitofp %1 : vector<7168x256xi8> to vector<7168x256xbf16>
    %cst = arith.constant dense<0.000000e+00> : vector<8x256xf32>
    %3 = tpu.matmul %0, %2, %cst {dimension_numbers = #tpu.dot_dimension_numbers<[1], [0], [0], [1], [0, 0, 1, 1], [], []>} : vector<8x7168xbf16>, vector<7168x256xbf16>, vector<8x256xf32> -> vector<8x256xf32>
    %c0_3 = arith.constant 0 : index
    %c0_4 = arith.constant 0 : index
    %4 = vector.load %arg3[%c0_3, %c0_4] : memref<1x256xf32, #tpu.memory_space<vmem>>, vector<1x256xf32>
    %5 = vector.broadcast %4 : vector<1x256xf32> to vector<8x256xf32>
    %6 = arith.mulf %3, %5 : vector<8x256xf32>
    %c0_5 = arith.constant 0 : index
    %c0_6 = arith.constant 0 : index
    %7 = vector.load %arg4[%c0_5, %c0_6] : memref<1x256xf32, #tpu.memory_space<vmem>>, vector<1x256xf32>
    %8 = vector.broadcast %7 : vector<1x256xf32> to vector<8x256xf32>
    %9 = arith.addf %6, %8 : vector<8x256xf32>
    %cst_7 = arith.constant 0.000000e+00 : f32
    %10 = vector.broadcast %cst_7 : f32 to vector<8x256xf32>
    %11 = arith.maximumf %9, %10 : vector<8x256xf32>
    %12 = arith.truncf %11 : vector<8x256xf32> to vector<8x256xbf16>
    %c0_8 = arith.constant 0 : index
    %c0_9 = arith.constant 0 : index
    %13 = vector.load %arg5[%c0_8, %c0_9] : memref<256x256xbf16, #tpu.memory_space<vmem>>, vector<256x256xbf16>
    %cst_10 = arith.constant dense<0.000000e+00> : vector<8x256xf32>
    %14 = tpu.matmul %12, %13, %cst_10 {dimension_numbers = #tpu.dot_dimension_numbers<[1], [0], [0], [1], [0, 0, 1, 1], [], []>} : vector<8x256xbf16>, vector<256x256xbf16>, vector<8x256xf32> -> vector<8x256xf32>
    %c0_11 = arith.constant 0 : index
    %c0_12 = arith.constant 0 : index
    %15 = vector.load %arg6[%c0_11, %c0_12] : memref<1x256xf32, #tpu.memory_space<vmem>>, vector<1x256xf32>
    %16 = vector.broadcast %15 : vector<1x256xf32> to vector<8x256xf32>
    %17 = arith.addf %14, %16 : vector<8x256xf32>
    %cst_13 = arith.constant 0.000000e+00 : f32
    %18 = vector.broadcast %cst_13 : f32 to vector<8x256xf32>
    %19 = arith.maximumf %17, %18 : vector<8x256xf32>
    %20 = arith.truncf %19 : vector<8x256xf32> to vector<8x256xbf16>
    %c0_14 = arith.constant 0 : index
    %c0_15 = arith.constant 0 : index
    %21 = vector.load %arg7[%c0_14, %c0_15] : memref<256x128xbf16, #tpu.memory_space<vmem>>, vector<256x128xbf16>
    %cst_16 = arith.constant dense<0.000000e+00> : vector<8x128xf32>
    %22 = tpu.matmul %20, %21, %cst_16 {dimension_numbers = #tpu.dot_dimension_numbers<[1], [0], [0], [1], [0, 0, 1, 1], [], []>} : vector<8x256xbf16>, vector<256x128xbf16>, vector<8x128xf32> -> vector<8x128xf32>
    %c0_17 = arith.constant 0 : index
    %c0_18 = arith.constant 0 : index
    %23 = vector.load %arg8[%c0_17, %c0_18] : memref<1x128xf32, #tpu.memory_space<vmem>>, vector<1x128xf32>
    %24 = vector.broadcast %23 : vector<1x128xf32> to vector<8x128xf32>
    %25 = arith.addf %22, %24 : vector<8x128xf32>
    %cst_19 = arith.constant dense<0xFF800000> : vector<8xf32>
    %26 = vector.multi_reduction <maximumf>, %25, %cst_19 [1] : vector<8x128xf32> to vector<8xf32>
    %27 = vector.shape_cast %26 : vector<8xf32> to vector<8x1xf32>
    %28 = vector.broadcast %27 : vector<8x1xf32> to vector<8x128xf32>
    %29 = arith.subf %25, %28 : vector<8x128xf32>
    %30 = math.exp %29 : vector<8x128xf32>
    %cst_20 = arith.constant dense<0.000000e+00> : vector<8xf32>
    %31 = vector.multi_reduction <add>, %30, %cst_20 [1] : vector<8x128xf32> to vector<8xf32>
    %32 = vector.shape_cast %31 : vector<8xf32> to vector<8x1xf32>
    %33 = vector.broadcast %32 : vector<8x1xf32> to vector<8x128xf32>
    %34 = arith.divf %30, %33 : vector<8x128xf32>
    %c0_21 = arith.constant 0 : index
    %c0_22 = arith.constant 0 : index
    %35 = vector.load %arg9[%c0_21, %c0_22] : memref<8x128xf32, #tpu.memory_space<vmem>>, vector<8x128xf32>
    tpu.vector_store %arg9[%c0_21, %c0_22], %34 {strides = array<i32>} : memref<8x128xf32, #tpu.memory_space<vmem>>, vector<8x128xf32>,
    return
  }
  func.func @transform_0(%arg0: i32) -> (i32, i32) {
    %c0_i32 = arith.constant 0 : i32
    %c0_i32_0 = arith.constant 0 : i32
    %c0_i32_1 = arith.constant 0 : i32
    return %c0_i32, %c0_i32_0 : i32, i32
  }
  func.func @transform_1(%arg0: i32) -> (i32, i32) {
    %c0_i32 = arith.constant 0 : i32
    %c0_i32_0 = arith.constant 0 : i32
    %c0_i32_1 = arith.constant 0 : i32
    return %c0_i32, %c0_i32_0 : i32, i32
  }
  func.func @transform_2(%arg0: i32) -> (i32, i32) {
    %c0_i32 = arith.constant 0 : i32
    %c0_i32_0 = arith.constant 0 : i32
    %c0_i32_1 = arith.constant 0 : i32
    return %c0_i32, %c0_i32_0 : i32, i32
  }
  func.func @transform_3(%arg0: i32) -> (i32, i32) {
    %c0_i32 = arith.constant 0 : i32
    %c0_i32_0 = arith.constant 0 : i32
    %c0_i32_1 = arith.constant 0 : i32
    return %c0_i32, %c0_i32_0 : i32, i32
  }
  func.func @transform_4(%arg0: i32) -> (i32, i32) {
    %c0_i32 = arith.constant 0 : i32
    %c0_i32_0 = arith.constant 0 : i32
    %c0_i32_1 = arith.constant 0 : i32
    return %c0_i32, %c0_i32_0 : i32, i32
  }
  func.func @transform_5(%arg0: i32) -> (i32, i32) {
    %c0_i32 = arith.constant 0 : i32
    %c0_i32_0 = arith.constant 0 : i32
    %c0_i32_1 = arith.constant 0 : i32
    return %c0_i32, %c0_i32_0 : i32, i32
  }
  func.func @transform_6(%arg0: i32) -> (i32, i32) {
    %c0_i32 = arith.constant 0 : i32
    %c0_i32_0 = arith.constant 0 : i32
    %c0_i32_1 = arith.constant 0 : i32
    return %c0_i32, %c0_i32_0 : i32, i32
  }
  func.func @transform_7(%arg0: i32) -> (i32, i32) {
    %c0_i32 = arith.constant 0 : i32
    %c0_i32_0 = arith.constant 0 : i32
    %c0_i32_1 = arith.constant 0 : i32
    return %c0_i32, %c0_i32_0 : i32, i32
  }
  func.func @transform_8(%arg0: i32) -> (i32, i32) {
    %c0_i32 = arith.constant 0 : i32
    %c0_i32_0 = arith.constant 0 : i32
    %c0_i32_1 = arith.constant 0 : i32
    return %c0_i32, %c0_i32_0 : i32, i32
  }
}

</mosaic_0001>

<llo_original>
// kernel: pong_policy_forward.1
$region0: #{pong_policy_forward.1}
  #allocation0 [shape = 'u32[]', space=smem, size = 0x4, offset = 0x4, fixed_abs, tag = 'smem constant byte address 0x4 - core index']
  #allocation1 [shape = 'u32[144,128]{1,0:T(1,128)}', space=vmem, size = 0x12000, scoped, tag = 'internal scratch']
  %s0 = inlined_call_operand.vmem [shape: bf16[8,7168], index: 0, kind: input, shape index: {}]
  %s1 = inlined_call_operand.hbm [shape: s8[7168,256], index: 1, kind: input, shape index: {}]
  %s2 = inlined_call_operand.hbm [shape: f32[1,256], index: 2, kind: input, shape index: {}]
  %s3 = inlined_call_operand.hbm [shape: f32[1,256], index: 3, kind: input, shape index: {}]
  %s4 = inlined_call_operand.hbm [shape: bf16[256,256], index: 4, kind: input, shape index: {}]
  %s5 = inlined_call_operand.hbm [shape: f32[1,256], index: 5, kind: input, shape index: {}]
  %s6 = inlined_call_operand.hbm [shape: bf16[256,128], index: 6, kind: input, shape index: {}]
  %s7 = inlined_call_operand.hbm [shape: f32[1,128], index: 7, kind: input, shape index: {}]
  %s8 = inlined_call_operand.vmem [shape: f32[8,128], index: 8, kind: output, shape index: {}]
  %s9 = sld [smem:[#allocation0]]
  $region70: #{pong_policy_forward.1} parent=0
    _
  %s11 = ssub.s32 1, %s9
  %s12 = scalar_select 0, %s11, %s9
  $region1: #{pong_policy_forward.1} parent=0
    #allocation2 [shape = 'u8[1835008]{0}', space=vmem, size = 0x1c0000, scoped, tag = 'input window, operand 1, single buffered']
    #allocation3 [shape = 's32[1]{0}', space=sflag, size = 0x4, scoped, tag = 'scoped memory for pong_policy_forward.1']
    #allocation4 [shape = 'u8[1024]{0}', space=vmem, size = 0x400, scoped, tag = 'input window, operand 2, single buffered']
    #allocation5 [shape = 's32[1]{0}', space=sflag, size = 0x4, scoped, tag = 'scoped memory for pong_policy_forward.1']
    #allocation6 [shape = 'u8[1024]{0}', space=vmem, size = 0x400, scoped, tag = 'input window, operand 3, single buffered']
    #allocation7 [shape = 'u8[131072]{0}', space=vmem, size = 0x20000, scoped, tag = 'input window, operand 4, single buffered']
    #allocation8 [shape = 's32[1]{0}', space=sflag, size = 0x4, scoped, tag = 'scoped memory for pong_policy_forward.1']
    #allocation9 [shape = 'u8[1024]{0}', space=vmem, size = 0x400, scoped, tag = 'input window, operand 5, single buffered']
    #allocation10 [shape = 'u8[65536]{0}', space=vmem, size = 0x10000, scoped, tag = 'input window, operand 6, single buffered']
    #allocation11 [shape = 's32[1]{0}', space=sflag, size = 0x4, scoped, tag = 'scoped memory for pong_policy_forward.1']
    #allocation12 [shape = 'u8[512]{0}', space=vmem, size = 0x400, scoped, tag = 'input window, operand 7, single buffered']
    %13 = vsyncpa [#allocation3], 0
    %14 = vsyncpa [#allocation5], 0
    %15 = vsyncpa [#allocation8], 0
    %16 = vsyncpa [#allocation11], 0
    // Predicated region
    $region2: #{pong_policy_forward.1} parent=1 // pred_check
      _
    $region3: #{pong_policy_forward.1} parent=1 // pred_check_branch
      %18 = sbr.rel (0) target = $region5
    $region4: #{pong_policy_forward.1} parent=1 // pred_region
      _
    $region5: #{pong_policy_forward.1} parent=1 // pred_fallthru
      _
    // Predicated region
    $region6: #{pong_policy_forward.1} parent=1 // pred_check
      _
    $region7: #{pong_policy_forward.1} parent=1 // pred_check_branch
      %20 = sbr.rel (0) target = $region9
    $region8: #{pong_policy_forward.1} parent=1 // pred_region
      %s22 = ssub.s32 57344, 57344
      %23 = vsyncadd [#allocation3], %s22
      %s24 = sshll.u32 [#allocation2], 4
      %s25 = int_to_ptr.vmem [resolvable:$true] %s24
      %30 = dma.hbm_to_vmem [thread:$0]  %s1, 57344, %s25, [#allocation3], 256, 256, 16
    $region9: #{pong_policy_forward.1} parent=1 // pred_fallthru
      _
    // Predicated region
    $region10: #{pong_policy_forward.1} parent=1 // pred_check
      _
    $region11: #{pong_policy_forward.1} parent=1 // pred_check_branch
      %32 = sbr.rel (0) target = $region13
    $region12: #{pong_policy_forward.1} parent=1 // pred_region
      %s34 = ssub.s32 32, 32
      %35 = vsyncadd [#allocation5], %s34
      %s37 = sshll.u32 [#allocation4], 4
      %s38 = int_to_ptr.vmem [resolvable:$true] %s37
      %40 = dma.hbm_to_vmem [thread:$0]  %s2, 32, %s38, [#allocation5]
    $region13: #{pong_policy_forward.1} parent=1 // pred_fallthru
      _
    // Predicated region
    $region14: #{pong_policy_forward.1} parent=1 // pred_check
      _
    $region15: #{pong_policy_forward.1} parent=1 // pred_check_branch
      %42 = sbr.rel (0) target = $region17
    $region16: #{pong_policy_forward.1} parent=1 // pred_region
      %s44 = ssub.s32 32, 32
      %45 = vsyncadd [#allocation5], %s44
      %s47 = sshll.u32 [#allocation6], 4
      %s48 = int_to_ptr.vmem [resolvable:$true] %s47
      %50 = dma.hbm_to_vmem [thread:$0]  %s3, 32, %s48, [#allocation5]
    $region17: #{pong_policy_forward.1} parent=1 // pred_fallthru
      _
    // Predicated region
    $region18: #{pong_policy_forward.1} parent=1 // pred_check
      _
    $region19: #{pong_policy_forward.1} parent=1 // pred_check_branch
      %52 = sbr.rel (0) target = $region21
    $region20: #{pong_policy_forward.1} parent=1 // pred_region
      %s54 = ssub.s32 4096, 4096
      %55 = vsyncadd [#allocation8], %s54
      %s56 = sshll.u32 [#allocation7], 4
      %s57 = int_to_ptr.vmem [resolvable:$true] %s56
      %62 = dma.hbm_to_vmem [thread:$0]  %s4, 4096, %s57, [#allocation8], 128, 128, 8
    $region21: #{pong_policy_forward.1} parent=1 // pred_fallthru
      _
    // Predicated region
    $region22: #{pong_policy_forward.1} parent=1 // pred_check
      _
    $region23: #{pong_policy_forward.1} parent=1 // pred_check_branch
      %64 = sbr.rel (0) target = $region25
    $region24: #{pong_policy_forward.1} parent=1 // pred_region
      %s66 = ssub.s32 32, 32
      %67 = vsyncadd [#allocation8], %s66
      %s69 = sshll.u32 [#allocation9], 4
      %s70 = int_to_ptr.vmem [resolvable:$true] %s69
      %72 = dma.hbm_to_vmem [thread:$0]  %s5, 32, %s70, [#allocation8]
    $region25: #{pong_policy_forward.1} parent=1 // pred_fallthru
      _
    // Predicated region
    $region26: #{pong_policy_forward.1} parent=1 // pred_check
      _
    $region27: #{pong_policy_forward.1} parent=1 // pred_check_branch
      %74 = sbr.rel (0) target = $region29
    $region28: #{pong_policy_forward.1} parent=1 // pred_region
      %s76 = ssub.s32 2048, 2048
      %77 = vsyncadd [#allocation11], %s76
      %s78 = sshll.u32 [#allocation10], 4
      %s79 = int_to_ptr.vmem [resolvable:$true] %s78
      %84 = dma.hbm_to_vmem [thread:$0]  %s6, 2048, %s79, [#allocation11], 64, 64, 4
    $region29: #{pong_policy_forward.1} parent=1 // pred_fallthru
      _
    // Predicated region
    $region30: #{pong_policy_forward.1} parent=1 // pred_check
      _
    $region31: #{pong_policy_forward.1} parent=1 // pred_check_branch
      %86 = sbr.rel (0) target = $region33
    $region32: #{pong_policy_forward.1} parent=1 // pred_region
      %s88 = ssub.s32 16, 16
      %89 = vsyncadd [#allocation11], %s88
      %s91 = sshll.u32 [#allocation12], 4
      %s92 = int_to_ptr.vmem [resolvable:$true] %s91
      %94 = dma.hbm_to_vmem [thread:$0]  %s7, 16, %s92, [#allocation11]
    $region33: #{pong_policy_forward.1} parent=1 // pred_fallthru
      _
    // Predicated region
    $region34: #{pong_policy_forward.1} parent=1 // pred_check
      _
    $region35: #{pong_policy_forward.1} parent=1 // pred_check_branch
      %96 = sbr.rel (0) target = $region37
    $region36: #{pong_policy_forward.1} parent=1 // pred_region
      %97 = dma.done [#allocation3], 57344
    $region37: #{pong_policy_forward.1} parent=1 // pred_fallthru
      _
    // Predicated region
    $region38: #{pong_policy_forward.1} parent=1 // pred_check
      _
    $region39: #{pong_policy_forward.1} parent=1 // pred_check_branch
      %99 = sbr.rel (0) target = $region41
    $region40: #{pong_policy_forward.1} parent=1 // pred_region
      %100 = dma.done [#allocation5], 32
    $region41: #{pong_policy_forward.1} parent=1 // pred_fallthru
      _
    // Predicated region
    $region42: #{pong_policy_forward.1} parent=1 // pred_check
      _
    $region43: #{pong_policy_forward.1} parent=1 // pred_check_branch
      %102 = sbr.rel (0) target = $region45
    $region44: #{pong_policy_forward.1} parent=1 // pred_region
      %103 = dma.done [#allocation5], 32
    $region45: #{pong_policy_forward.1} parent=1 // pred_fallthru
      _
    // Predicated region
    $region46: #{pong_policy_forward.1} parent=1 // pred_check
      _
    $region47: #{pong_policy_forward.1} parent=1 // pred_check_branch
      %105 = sbr.rel (0) target = $region49
    $region48: #{pong_policy_forward.1} parent=1 // pred_region
      %106 = dma.done [#allocation8], 4096
    $region49: #{pong_policy_forward.1} parent=1 // pred_fallthru
      _
    // Predicated region
    $region50: #{pong_policy_forward.1} parent=1 // pred_check
      _
    $region51: #{pong_policy_forward.1} parent=1 // pred_check_branch
      %108 = sbr.rel (0) target = $region53
    $region52: #{pong_policy_forward.1} parent=1 // pred_region
      %109 = dma.done [#allocation8], 32
    $region53: #{pong_policy_forward.1} parent=1 // pred_fallthru
      _
    // Predicated region
    $region54: #{pong_policy_forward.1} parent=1 // pred_check
      _
    $region55: #{pong_policy_forward.1} parent=1 // pred_check_branch
      %111 = sbr.rel (0) target = $region57
    $region56: #{pong_policy_forward.1} parent=1 // pred_region
      %112 = dma.done [#allocation11], 2048
    $region57: #{pong_policy_forward.1} parent=1 // pred_fallthru
      _
    // Predicated region
    $region58: #{pong_policy_forward.1} parent=1 // pred_check
      _
    $region59: #{pong_policy_forward.1} parent=1 // pred_check_branch
      %114 = sbr.rel (0) target = $region61
    $region60: #{pong_policy_forward.1} parent=1 // pred_region
      %115 = dma.done [#allocation11], 16
    $region61: #{pong_policy_forward.1} parent=1 // pred_fallthru
      _
    %v117 = vld [vmem:[%s0] sm:$0xff]
    %v118 = vld [vmem:[%s0 + $0x8] sm:$0xff]
    %v119 = vld [vmem:[%s0 + $0x10] sm:$0xff]
    %v120 = vld [vmem:[%s0 + $0x18] sm:$0xff]
    %v121 = vld [vmem:[%s0 + $0x20] sm:$0xff]
    %v122 = vld [vmem:[%s0 + $0x28] sm:$0xff]
    %v123 = vld [vmem:[%s0 + $0x30] sm:$0xff]
    %v124 = vld [vmem:[%s0 + $0x38] sm:$0xff]
    %v125 = vld [vmem:[%s0 + $0x40] sm:$0xff]
    %v126 = vld [vmem:[%s0 + $0x48] sm:$0xff]
    %v127 = vld [vmem:[%s0 + $0x50] sm:$0xff]
    %v128 = vld [vmem:[%s0 + $0x58] sm:$0xff]
    %v129 = vld [vmem:[%s0 + $0x60] sm:$0xff]
    %v130 = vld [vmem:[%s0 + $0x68] sm:$0xff]
    %v131 = vld [vmem:[%s0 + $0x70] sm:$0xff]
    %v132 = vld [vmem:[%s0 + $0x78] sm:$0xff]
    %v133 = vld [vmem:[%s0 + $0x80] sm:$0xff]
    %v134 = vld [vmem:[%s0 + $0x88] sm:$0xff]
    %v135 = vld [vmem:[%s0 + $0x90] sm:$0xff]
    %v136 = vld [vmem:[%s0 + $0x98] sm:$0xff]
    %v137 = vld [vmem:[%s0 + $0xa0] sm:$0xff]
    %v138 = vld [vmem:[%s0 + $0xa8] sm:$0xff]
    %v139 = vld [vmem:[%s0 + $0xb0] sm:$0xff]
    %v140 = vld [vmem:[%s0 + $0xb8] sm:$0xff]
    %v141 = vld [vmem:[%s0 + $0xc0] sm:$0xff]
    %v142 = vld [vmem:[%s0 + $0xc8] sm:$0xff]
    %v143 = vld [vmem:[%s0 + $0xd0] sm:$0xff]
    %v144 = vld [vmem:[%s0 + $0xd8] sm:$0xff]
    %v145 = vld [vmem:[#allocation2] sm:$0xff]
    %v146 = vld [vmem:[#allocation2 + $0x8] sm:$0xff]
    %v147 = vld [vmem:[#allocation2 + $0x10] sm:$0xff]
    %v148 = vld [vmem:[#allocation2 + $0x18] sm:$0xff]
    %v149 = vld [vmem:[#allocation2 + $0x20] sm:$0xff]
    %v150 = vld [vmem:[#allocation2 + $0x28] sm:$0xff]
    %v151 = vld [vmem:[#allocation2 + $0x30] sm:$0xff]
    %v152 = vld [vmem:[#allocation2 + $0x38] sm:$0xff]
    %v153 = vld [vmem:[#allocation2 + $0x40] sm:$0xff]
    %v154 = vld [vmem:[#allocation2 + $0x48] sm:$0xff]
    %v155 = vld [vmem:[#allocation2 + $0x50] sm:$0xff]
    %v156 = vld [vmem:[#allocation2 + $0x58] sm:$0xff]
    %v157 = vld [vmem:[#allocation2 + $0x60] sm:$0xff]
    %v158 = vld [vmem:[#allocation2 + $0x68] sm:$0xff]
    %v159 = vld [vmem:[#allocation2 + $0x70] sm:$0xff]
    %v160 = vld [vmem:[#allocation2 + $0x78] sm:$0xff]
    %v161 = vld [vmem:[#allocation2 + $0x80] sm:$0xff]
    %v162 = vld [vmem:[#allocation2 + $0x88] sm:$0xff]
    %v163 = vld [vmem:[#allocation2 + $0x90] sm:$0xff]
    %v164 = vld [vmem:[#allocation2 + $0x98] sm:$0xff]
    %v165 = vld [vmem:[#allocation2 + $0xa0] sm:$0xff]
    %v166 = vld [vmem:[#allocation2 + $0xa8] sm:$0xff]
    %v167 = vld [vmem:[#allocation2 + $0xb0] sm:$0xff]
    %v168 = vld [vmem:[#allocation2 + $0xb8] sm:$0xff]
    %v169 = vld [vmem:[#allocation2 + $0xc0] sm:$0xff]
    %v170 = vld [vmem:[#allocation2 + $0xc8] sm:$0xff]
    %v171 = vld [vmem:[#allocation2 + $0xd0] sm:$0xff]
    %v172 = vld [vmem:[#allocation2 + $0xd8] sm:$0xff]
    %v173 = vld [vmem:[#allocation2 + $0xe0] sm:$0xff]
    %v174 = vld [vmem:[#allocation2 + $0xe8] sm:$0xff]
    %v175 = vld [vmem:[#allocation2 + $0xf0] sm:$0xff]
    %v176 = vld [vmem:[#allocation2 + $0xf8] sm:$0xff]
    %v177 = vld [vmem:[#allocation2 + $0x100] sm:$0xff]
    %v178 = vld [vmem:[#allocation2 + $0x108] sm:$0xff]
    %v179 = vld [vmem:[#allocation2 + $0x110] sm:$0xff]
    %v180 = vld [vmem:[#allocation2 + $0x118] sm:$0xff]
    %v181 = vld [vmem:[#allocation2 + $0x120] sm:$0xff]
    %v182 = vld [vmem:[#allocation2 + $0x128] sm:$0xff]
    %v183 = vld [vmem:[#allocation2 + $0x130] sm:$0xff]
    %v184 = vld [vmem:[#allocation2 + $0x138] sm:$0xff]
    %v185 = vld [vmem:[#allocation2 + $0x140] sm:$0xff]
    %v186 = vld [vmem:[#allocation2 + $0x148] sm:$0xff]
    %v187 = vld [vmem:[#allocation2 + $0x150] sm:$0xff]
    %v188 = vld [vmem:[#allocation2 + $0x158] sm:$0xff]
    %v189 = vld [vmem:[#allocation2 + $0x160] sm:$0xff]
    %v190 = vld [vmem:[#allocation2 + $0x168] sm:$0xff]
    %v191 = vld [vmem:[#allocation2 + $0x170] sm:$0xff]
    %v192 = vld [vmem:[#allocation2 + $0x178] sm:$0xff]
    %v193 = vld [vmem:[#allocation2 + $0x180] sm:$0xff]
    %v194 = vld [vmem:[#allocation2 + $0x188] sm:$0xff]
    %v195 = vld [vmem:[#allocation2 + $0x190] sm:$0xff]
    %v196 = vld [vmem:[#allocation2 + $0x198] sm:$0xff]
    %v197 = vld [vmem:[#allocation2 + $0x1a0] sm:$0xff]
    %v198 = vld [vmem:[#allocation2 + $0x1a8] sm:$0xff]
    %v199 = vld [vmem:[#allocation2 + $0x1b0] sm:$0xff]
    %v200 = vld [vmem:[#allocation2 + $0x1b8] sm:$0xff]
    %v201 = vld [vmem:[#allocation2 + $0x1c0] sm:$0xff]
    %v202 = vld [vmem:[#allocation2 + $0x1c8] sm:$0xff]
    %v203 = vld [vmem:[#allocation2 + $0x1d0] sm:$0xff]
    %v204 = vld [vmem:[#allocation2 + $0x1d8] sm:$0xff]
    %v205 = vld [vmem:[#allocation2 + $0x1e0] sm:$0xff]
    %v206 = vld [vmem:[#allocation2 + $0x1e8] sm:$0xff]
    %v207 = vld [vmem:[#allocation2 + $0x1f0] sm:$0xff]
    %v208 = vld [vmem:[#allocation2 + $0x1f8] sm:$0xff]
    %v209 = vld [vmem:[#allocation2 + $0x200] sm:$0xff]
    %v210 = vld [vmem:[#allocation2 + $0x208] sm:$0xff]
    %v211 = vld [vmem:[#allocation2 + $0x210] sm:$0xff]
    %v212 = vld [vmem:[#allocation2 + $0x218] sm:$0xff]
    %v213 = vld [vmem:[#allocation2 + $0x220] sm:$0xff]
    %v214 = vld [vmem:[#allocation2 + $0x228] sm:$0xff]
    %v215 = vld [vmem:[#allocation2 + $0x230] sm:$0xff]
    %v216 = vld [vmem:[#allocation2 + $0x238] sm:$0xff]
    %v217 = vld [vmem:[#allocation2 + $0x240] sm:$0xff]
    %v218 = vld [vmem:[#allocation2 + $0x248] sm:$0xff]
    %v219 = vld [vmem:[#allocation2 + $0x250] sm:$0xff]
    %v220 = vld [vmem:[#allocation2 + $0x258] sm:$0xff]
    %v221 = vld [vmem:[#allocation2 + $0x260] sm:$0xff]
    %v222 = vld [vmem:[#allocation2 + $0x268] sm:$0xff]
    %v223 = vld [vmem:[#allocation2 + $0x270] sm:$0xff]
    %v224 = vld [vmem:[#allocation2 + $0x278] sm:$0xff]
    %v225 = vld [vmem:[#allocation2 + $0x280] sm:$0xff]
    %v226 = vld [vmem:[#allocation2 + $0x288] sm:$0xff]
    %v227 = vld [vmem:[#allocation2 + $0x290] sm:$0xff]
    %v228 = vld [vmem:[#allocation2 + $0x298] sm:$0xff]
    %v229 = vld [vmem:[#allocation2 + $0x2a0] sm:$0xff]
    %v230 = vld [vmem:[#allocation2 + $0x2a8] sm:$0xff]
    %v231 = vld [vmem:[#allocation2 + $0x2b0] sm:$0xff]
    %v232 = vld [vmem:[#allocation2 + $0x2b8] sm:$0xff]
    %v233 = vld [vmem:[#allocation2 + $0x2c0] sm:$0xff]
    %v234 = vld [vmem:[#allocation2 + $0x2c8] sm:$0xff]
    %v235 = vld [vmem:[#allocation2 + $0x2d0] sm:$0xff]
    %v236 = vld [vmem:[#allocation2 + $0x2d8] sm:$0xff]
    %v237 = vld [vmem:[#allocation2 + $0x2e0] sm:$0xff]
    %v238 = vld [vmem:[#allocation2 + $0x2e8] sm:$0xff]
    %v239 = vld [vmem:[#allocation2 + $0x2f0] sm:$0xff]
    %v240 = vld [vmem:[#allocation2 + $0x2f8] sm:$0xff]
    %v241 = vld [vmem:[#allocation2 + $0x300] sm:$0xff]
    %v242 = vld [vmem:[#allocation2 + $0x308] sm:$0xff]
    %v243 = vld [vmem:[#allocation2 + $0x310] sm:$0xff]
    %v244 = vld [vmem:[#allocation2 + $0x318] sm:$0xff]
    %v245 = vld [vmem:[#allocation2 + $0x320] sm:$0xff]
    %v246 = vld [vmem:[#allocation2 + $0x328] sm:$0xff]
    %v247 = vld [vmem:[#allocation2 + $0x330] sm:$0xff]
    %v248 = vld [vmem:[#allocation2 + $0x338] sm:$0xff]
    %v249 = vld [vmem:[#allocation2 + $0x340] sm:$0xff]
    %v250 = vld [vmem:[#allocation2 + $0x348] sm:$0xff]
    %v251 = vld [vmem:[#allocation2 + $0x350] sm:$0xff]
    %v252 = vld [vmem:[#allocation2 + $0x358] sm:$0xff]
    %v253 = vld [vmem:[#allocation2 + $0x360] sm:$0xff]
    %v254 = vld [vmem:[#allocation2 + $0x368] sm:$0xff]
    %v255 = vld [vmem:[#allocation2 + $0x370] sm:$0xff]
    %v256 = vld [vmem:[#allocation2 + $0x378] sm:$0xff]
    %v257 = vld [vmem:[#allocation2 + $0x380] sm:$0xff]
    %v258 = vld [vmem:[#allocation2 + $0x388] sm:$0xff]
    %v259 = vld [vmem:[#allocation2 + $0x390] sm:$0xff]
    %v260 = vld [vmem:[#allocation2 + $0x398] sm:$0xff]
    %v261 = vld [vmem:[#allocation2 + $0x3a0] sm:$0xff]
    %v262 = vld [vmem:[#allocation2 + $0x3a8] sm:$0xff]
    %v263 = vld [vmem:[#allocation2 + $0x3b0] sm:$0xff]
    %v264 = vld [vmem:[#allocation2 + $0x3b8] sm:$0xff]
    %v265 = vld [vmem:[#allocation2 + $0x3c0] sm:$0xff]
    %v266 = vld [vmem:[#allocation2 + $0x3c8] sm:$0xff]
    %v267 = vld [vmem:[#allocation2 + $0x3d0] sm:$0xff]
    %v268 = vld [vmem:[#allocation2 + $0x3d8] sm:$0xff]
    %v269 = vld [vmem:[#allocation2 + $0x3e0] sm:$0xff]
    %v270 = vld [vmem:[#allocation2 + $0x3e8] sm:$0xff]
    %v271 = vld [vmem:[#allocation2 + $0x3f0] sm:$0xff]
    %v272 = vld [vmem:[#allocation2 + $0x3f8] sm:$0xff]
    %v273 = vld [vmem:[#allocation2 + $0x400] sm:$0xff]
    %v274 = vld [vmem:[#allocation2 + $0x408] sm:$0xff]
    %v275 = vld [vmem:[#allocation2 + $0x410] sm:$0xff]
    %v276 = vld [vmem:[#allocation2 + $0x418] sm:$0xff]
    %v277 = vld [vmem:[#allocation2 + $0x420] sm:$0xff]
    %v278 = vld [vmem:[#allocation2 + $0x428] sm:$0xff]
    %v279 = vld [vmem:[#allocation2 + $0x430] sm:$0xff]
    %v280 = vld [vmem:[#allocation2 + $0x438] sm:$0xff]
    %v281 = vld [vmem:[#allocation2 + $0x440] sm:$0xff]
    %v282 = vld [vmem:[#allocation2 + $0x448] sm:$0xff]
    %v283 = vld [vmem:[#allocation2 + $0x450] sm:$0xff]
    %v284 = vld [vmem:[#allocation2 + $0x458] sm:$0xff]
    %v285 = vld [vmem:[#allocation2 + $0x460] sm:$0xff]
    %v286 = vld [vmem:[#allocation2 + $0x468] sm:$0xff]
    %v287 = vld [vmem:[#allocation2 + $0x470] sm:$0xff]
    %v288 = vld [vmem:[#allocation2 + $0x478] sm:$0xff]
    %v289 = vld [vmem:[#allocation2 + $0x480] sm:$0xff]
    %v290 = vld [vmem:[#allocation2 + $0x488] sm:$0xff]
    %v291 = vld [vmem:[#allocation2 + $0x490] sm:$0xff]
    %v292 = vld [vmem:[#allocation2 + $0x498] sm:$0xff]
    %v293 = vld [vmem:[#allocation2 + $0x4a0] sm:$0xff]
    %v294 = vld [vmem:[#allocation2 + $0x4a8] sm:$0xff]
    %v295 = vld [vmem:[#allocation2 + $0x4b0] sm:$0xff]
    %v296 = vld [vmem:[#allocation2 + $0x4b8] sm:$0xff]
    %v297 = vld [vmem:[#allocation2 + $0x4c0] sm:$0xff]
    %v298 = vld [vmem:[#allocation2 + $0x4c8] sm:$0xff]
    %v299 = vld [vmem:[#allocation2 + $0x4d0] sm:$0xff]
    %v300 = vld [vmem:[#allocation2 + $0x4d8] sm:$0xff]
    %v301 = vld [vmem:[#allocation2 + $0x4e0] sm:$0xff]
    %v302 = vld [vmem:[#allocation2 + $0x4e8] sm:$0xff]
    %v303 = vld [vmem:[#allocation2 + $0x4f0] sm:$0xff]
    %v304 = vld [vmem:[#allocation2 + $0x4f8] sm:$0xff]
    %v305 = vld [vmem:[#allocation2 + $0x500] sm:$0xff]
    %v306 = vld [vmem:[#allocation2 + $0x508] sm:$0xff]
    %v307 = vld [vmem:[#allocation2 + $0x510] sm:$0xff]
    %v308 = vld [vmem:[#allocation2 + $0x518] sm:$0xff]
    %v309 = vld [vmem:[#allocation2 + $0x520] sm:$0xff]
    %v310 = vld [vmem:[#allocation2 + $0x528] sm:$0xff]
    %v311 = vld [vmem:[#allocation2 + $0x530] sm:$0xff]
    %v312 = vld [vmem:[#allocation2 + $0x538] sm:$0xff]
    %v313 = vld [vmem:[#allocation2 + $0x540] sm:$0xff]
    %v314 = vld [vmem:[#allocation2 + $0x548] sm:$0xff]
    %v315 = vld [vmem:[#allocation2 + $0x550] sm:$0xff]
    %v316 = vld [vmem:[#allocation2 + $0x558] sm:$0xff]
    %v317 = vld [vmem:[#allocation2 + $0x560] sm:$0xff]
    %v318 = vld [vmem:[#allocation2 + $0x568] sm:$0xff]
    %v319 = vld [vmem:[#allocation2 + $0x570] sm:$0xff]
    %v320 = vld [vmem:[#allocation2 + $0x578] sm:$0xff]
    %v321 = vld [vmem:[#allocation2 + $0x580] sm:$0xff]
    %v322 = vld [vmem:[#allocation2 + $0x588] sm:$0xff]
    %v323 = vld [vmem:[#allocation2 + $0x590] sm:$0xff]
    %v324 = vld [vmem:[#allocation2 + $0x598] sm:$0xff]
    %v325 = vld [vmem:[#allocation2 + $0x5a0] sm:$0xff]
    %v326 = vld [vmem:[#allocation2 + $0x5a8] sm:$0xff]
    %v327 = vld [vmem:[#allocation2 + $0x5b0] sm:$0xff]
    %v328 = vld [vmem:[#allocation2 + $0x5b8] sm:$0xff]
    %v329 = vld [vmem:[#allocation2 + $0x5c0] sm:$0xff]
    %v330 = vld [vmem:[#allocation2 + $0x5c8] sm:$0xff]
    %v331 = vld [vmem:[#allocation2 + $0x5d0] sm:$0xff]
    %v332 = vld [vmem:[#allocation2 + $0x5d8] sm:$0xff]
    %v333 = vld [vmem:[#allocation2 + $0x5e0] sm:$0xff]
    %v334 = vld [vmem:[#allocation2 + $0x5e8] sm:$0xff]
    %v335 = vld [vmem:[#allocation2 + $0x5f0] sm:$0xff]
    %v336 = vld [vmem:[#allocation2 + $0x5f8] sm:$0xff]
    %v337 = vld [vmem:[#allocation2 + $0x600] sm:$0xff]
    %v338 = vld [vmem:[#allocation2 + $0x608] sm:$0xff]
    %v339 = vld [vmem:[#allocation2 + $0x610] sm:$0xff]
    %v340 = vld [vmem:[#allocation2 + $0x618] sm:$0xff]
    %v341 = vld [vmem:[#allocation2 + $0x620] sm:$0xff]
    %v342 = vld [vmem:[#allocation2 + $0x628] sm:$0xff]
    %v343 = vld [vmem:[#allocation2 + $0x630] sm:$0xff]
    %v344 = vld [vmem:[#allocation2 + $0x638] sm:$0xff]
    %v345 = vld [vmem:[#allocation2 + $0x640] sm:$0xff]
    %v346 = vld [vmem:[#allocation2 + $0x648] sm:$0xff]
    %v347 = vld [vmem:[#allocation2 + $0x650] sm:$0xff]
    %v348 = vld [vmem:[#allocation2 + $0x658] sm:$0xff]
    %v349 = vld [vmem:[#allocation2 + $0x660] sm:$0xff]
    %v350 = vld [vmem:[#allocation2 + $0x668] sm:$0xff]
    %v351 = vld [vmem:[#allocation2 + $0x670] sm:$0xff]
    %v352 = vld [vmem:[#allocation2 + $0x678] sm:$0xff]
    %v353 = vld [vmem:[#allocation2 + $0x680] sm:$0xff]
    %v354 = vld [vmem:[#allocation2 + $0x688] sm:$0xff]
    %v355 = vld [vmem:[#allocation2 + $0x690] sm:$0xff]
    %v356 = vld [vmem:[#allocation2 + $0x698] sm:$0xff]
    %v357 = vld [vmem:[#allocation2 + $0x6a0] sm:$0xff]
    %v358 = vld [vmem:[#allocation2 + $0x6a8] sm:$0xff]
    %v359 = vld [vmem:[#allocation2 + $0x6b0] sm:$0xff]
    %v360 = vld [vmem:[#allocation2 + $0x6b8] sm:$0xff]
    %v361 = vld [vmem:[#allocation2 + $0x6c0] sm:$0xff]
    %v362 = vld [vmem:[#allocation2 + $0x6c8] sm:$0xff]
    %v363 = vld [vmem:[#allocation2 + $0x6d0] sm:$0xff]
    %v364 = vld [vmem:[#allocation2 + $0x6d8] sm:$0xff]
    %v365 = vld [vmem:[#allocation2 + $0x6e0] sm:$0xff]
    %v366 = vld [vmem:[#allocation2 + $0x6e8] sm:$0xff]
    %v367 = vld [vmem:[#allocation2 + $0x6f0] sm:$0xff]
    %v368 = vld [vmem:[#allocation2 + $0x6f8] sm:$0xff]
    %v369 = vld [vmem:[#allocation2 + $0x700] sm:$0xff]
    %v370 = vld [vmem:[#allocation2 + $0x708] sm:$0xff]
    %v371 = vld [vmem:[#allocation2 + $0x710] sm:$0xff]
    %v372 = vld [vmem:[#allocation2 + $0x718] sm:$0xff]
    %v373 = vld [vmem:[#allocation2 + $0x720] sm:$0xff]
    %v374 = vld [vmem:[#allocation2 + $0x728] sm:$0xff]
    %v375 = vld [vmem:[#allocation2 + $0x730] sm:$0xff]
    %v376 = vld [vmem:[#allocation2 + $0x738] sm:$0xff]
    %v377 = vld [vmem:[#allocation2 + $0x740] sm:$0xff]
    %v378 = vld [vmem:[#allocation2 + $0x748] sm:$0xff]
    %v379 = vld [vmem:[#allocation2 + $0x750] sm:$0xff]
    %v380 = vld [vmem:[#allocation2 + $0x758] sm:$0xff]
    %v381 = vld [vmem:[#allocation2 + $0x760] sm:$0xff]
    %v382 = vld [vmem:[#allocation2 + $0x768] sm:$0xff]
    %v383 = vld [vmem:[#allocation2 + $0x770] sm:$0xff]
    %v384 = vld [vmem:[#allocation2 + $0x778] sm:$0xff]
    %v385 = vld [vmem:[#allocation2 + $0x780] sm:$0xff]
    %v386 = vld [vmem:[#allocation2 + $0x788] sm:$0xff]
    %v387 = vld [vmem:[#allocation2 + $0x790] sm:$0xff]
    %v388 = vld [vmem:[#allocation2 + $0x798] sm:$0xff]
    %v389 = vld [vmem:[#allocation2 + $0x7a0] sm:$0xff]
    %v390 = vld [vmem:[#allocation2 + $0x7a8] sm:$0xff]
    %v391 = vld [vmem:[#allocation2 + $0x7b0] sm:$0xff]
    %v392 = vld [vmem:[#allocation2 + $0x7b8] sm:$0xff]
    %v393 = vld [vmem:[#allocation2 + $0x7c0] sm:$0xff]
    %v394 = vld [vmem:[#allocation2 + $0x7c8] sm:$0xff]
    %v395 = vld [vmem:[#allocation2 + $0x7d0] sm:$0xff]
    %v396 = vld [vmem:[#allocation2 + $0x7d8] sm:$0xff]
    %v397 = vld [vmem:[#allocation2 + $0x7e0] sm:$0xff]
    %v398 = vld [vmem:[#allocation2 + $0x7e8] sm:$0xff]
    %v399 = vld [vmem:[#allocation2 + $0x7f0] sm:$0xff]
    %v400 = vld [vmem:[#allocation2 + $0x7f8] sm:$0xff]
    %v401 = vld [vmem:[#allocation2 + $0x800] sm:$0xff]
    %v402 = vld [vmem:[#allocation2 + $0x808] sm:$0xff]
    %v403 = vld [vmem:[#allocation2 + $0x810] sm:$0xff]
    %v404 = vld [vmem:[#allocation2 + $0x818] sm:$0xff]
    %v405 = vld [vmem:[#allocation2 + $0x820] sm:$0xff]
    %v406 = vld [vmem:[#allocation2 + $0x828] sm:$0xff]
    %v407 = vld [vmem:[#allocation2 + $0x830] sm:$0xff]
    %v408 = vld [vmem:[#allocation2 + $0x838] sm:$0xff]
    %v409 = vld [vmem:[#allocation2 + $0x840] sm:$0xff]
    %v410 = vld [vmem:[#allocation2 + $0x848] sm:$0xff]
    %v411 = vld [vmem:[#allocation2 + $0x850] sm:$0xff]
    %v412 = vld [vmem:[#allocation2 + $0x858] sm:$0xff]
    %v413 = vld [vmem:[#allocation2 + $0x860] sm:$0xff]
    %v414 = vld [vmem:[#allocation2 + $0x868] sm:$0xff]
    %v415 = vld [vmem:[#allocation2 + $0x870] sm:$0xff]
    %v416 = vld [vmem:[#allocation2 + $0x878] sm:$0xff]
    %v417 = vld [vmem:[#allocation2 + $0x880] sm:$0xff]
    %v418 = vld [vmem:[#allocation2 + $0x888] sm:$0xff]
    %v419 = vld [vmem:[#allocation2 + $0x890] sm:$0xff]
    %v420 = vld [vmem:[#allocation2 + $0x898] sm:$0xff]
    %v421 = vld [vmem:[#allocation2 + $0x8a0] sm:$0xff]
    %v422 = vld [vmem:[#allocation2 + $0x8a8] sm:$0xff]
    %v423 = vld [vmem:[#allocation2 + $0x8b0] sm:$0xff]
    %v424 = vld [vmem:[#allocation2 + $0x8b8] sm:$0xff]
    %v425 = vld [vmem:[#allocation2 + $0x8c0] sm:$0xff]
    %v426 = vld [vmem:[#allocation2 + $0x8c8] sm:$0xff]
    %v427 = vld [vmem:[#allocation2 + $0x8d0] sm:$0xff]
    %v428 = vld [vmem:[#allocation2 + $0x8d8] sm:$0xff]
    %v429 = vld [vmem:[#allocation2 + $0x8e0] sm:$0xff]
    %v430 = vld [vmem:[#allocation2 + $0x8e8] sm:$0xff]
    %v431 = vld [vmem:[#allocation2 + $0x8f0] sm:$0xff]
    %v432 = vld [vmem:[#allocation2 + $0x8f8] sm:$0xff]
    %v433 = vld [vmem:[#allocation2 + $0x900] sm:$0xff]
    %v434 = vld [vmem:[#allocation2 + $0x908] sm:$0xff]
    %v435 = vld [vmem:[#allocation2 + $0x910] sm:$0xff]
    %v436 = vld [vmem:[#allocation2 + $0x918] sm:$0xff]
    %v437 = vld [vmem:[#allocation2 + $0x920] sm:$0xff]
    %v438 = vld [vmem:[#allocation2 + $0x928] sm:$0xff]
    %v439 = vld [vmem:[#allocation2 + $0x930] sm:$0xff]
    %v440 = vld [vmem:[#allocation2 + $0x938] sm:$0xff]
    %v441 = vld [vmem:[#allocation2 + $0x940] sm:$0xff]
    %v442 = vld [vmem:[#allocation2 + $0x948] sm:$0xff]
    %v443 = vld [vmem:[#allocation2 + $0x950] sm:$0xff]
    %v444 = vld [vmem:[#allocation2 + $0x958] sm:$0xff]
    %v445 = vld [vmem:[#allocation2 + $0x960] sm:$0xff]
    %v446 = vld [vmem:[#allocation2 + $0x968] sm:$0xff]
    %v447 = vld [vmem:[#allocation2 + $0x970] sm:$0xff]
    %v448 = vld [vmem:[#allocation2 + $0x978] sm:$0xff]
    %v449 = vld [vmem:[#allocation2 + $0x980] sm:$0xff]
    %v450 = vld [vmem:[#allocation2 + $0x988] sm:$0xff]
    %v451 = vld [vmem:[#allocation2 + $0x990] sm:$0xff]
    %v452 = vld [vmem:[#allocation2 + $0x998] sm:$0xff]
    %v453 = vld [vmem:[#allocation2 + $0x9a0] sm:$0xff]
    %v454 = vld [vmem:[#allocation2 + $0x9a8] sm:$0xff]
    %v455 = vld [vmem:[#allocation2 + $0x9b0] sm:$0xff]
    %v456 = vld [vmem:[#allocation2 + $0x9b8] sm:$0xff]
    %v457 = vld [vmem:[#allocation2 + $0x9c0] sm:$0xff]
    %v458 = vld [vmem:[#allocation2 + $0x9c8] sm:$0xff]
    %v459 = vld [vmem:[#allocation2 + $0x9d0] sm:$0xff]
    %v460 = vld [vmem:[#allocation2 + $0x9d8] sm:$0xff]
    %v461 = vld [vmem:[#allocation2 + $0x9e0] sm:$0xff]
    %v462 = vld [vmem:[#allocation2 + $0x9e8] sm:$0xff]
    %v463 = vld [vmem:[#allocation2 + $0x9f0] sm:$0xff]
    %v464 = vld [vmem:[#allocation2 + $0x9f8] sm:$0xff]
    %v465 = vld [vmem:[#allocation2 + $0xa00] sm:$0xff]
    %v466 = vld [vmem:[#allocation2 + $0xa08] sm:$0xff]
    %v467 = vld [vmem:[#allocation2 + $0xa10] sm:$0xff]
    %v468 = vld [vmem:[#allocation2 + $0xa18] sm:$0xff]
    %v469 = vld [vmem:[#allocation2 + $0xa20] sm:$0xff]
    %v470 = vld [vmem:[#allocation2 + $0xa28] sm:$0xff]
    %v471 = vld [vmem:[#allocation2 + $0xa30] sm:$0xff]
    %v472 = vld [vmem:[#allocation2 + $0xa38] sm:$0xff]
    %v473 = vld [vmem:[#allocation2 + $0xa40] sm:$0xff]
    %v474 = vld [vmem:[#allocation2 + $0xa48] sm:$0xff]
    %v475 = vld [vmem:[#allocation2 + $0xa50] sm:$0xff]
    %v476 = vld [vmem:[#allocation2 + $0xa58] sm:$0xff]
    %v477 = vld [vmem:[#allocation2 + $0xa60] sm:$0xff]
    %v478 = vld [vmem:[#allocation2 + $0xa68] sm:$0xff]
    %v479 = vld [vmem:[#allocation2 + $0xa70] sm:$0xff]
    %v480 = vld [vmem:[#allocation2 + $0xa78] sm:$0xff]
    %v481 = vld [vmem:[#allocation2 + $0xa80] sm:$0xff]
    %v482 = vld [vmem:[#allocation2 + $0xa88] sm:$0xff]
    %v483 = vld [vmem:[#allocation2 + $0xa90] sm:$0xff]
    %v484 = vld [vmem:[#allocation2 + $0xa98] sm:$0xff]
    %v485 = vld [vmem:[#allocation2 + $0xaa0] sm:$0xff]
    %v486 = vld [vmem:[#allocation2 + $0xaa8] sm:$0xff]
    %v487 = vld [vmem:[#allocation2 + $0xab0] sm:$0xff]
    %v488 = vld [vmem:[#allocation2 + $0xab8] sm:$0xff]
    %v489 = vld [vmem:[#allocation2 + $0xac0] sm:$0xff]
    %v490 = vld [vmem:[#allocation2 + $0xac8] sm:$0xff]
    %v491 = vld [vmem:[#allocation2 + $0xad0] sm:$0xff]
    %v492 = vld [vmem:[#allocation2 + $0xad8] sm:$0xff]
    %v493 = vld [vmem:[#allocation2 + $0xae0] sm:$0xff]
    %v494 = vld [vmem:[#allocation2 + $0xae8] sm:$0xff]
    %v495 = vld [vmem:[#allocation2 + $0xaf0] sm:$0xff]
    %v496 = vld [vmem:[#allocation2 + $0xaf8] sm:$0xff]
    %v497 = vld [vmem:[#allocation2 + $0xb00] sm:$0xff]
    %v498 = vld [vmem:[#allocation2 + $0xb08] sm:$0xff]
    %v499 = vld [vmem:[#allocation2 + $0xb10] sm:$0xff]
    %v500 = vld [vmem:[#allocation2 + $0xb18] sm:$0xff]
    %v501 = vld [vmem:[#allocation2 + $0xb20] sm:$0xff]
    %v502 = vld [vmem:[#allocation2 + $0xb28] sm:$0xff]
    %v503 = vld [vmem:[#allocation2 + $0xb30] sm:$0xff]
    %v504 = vld [vmem:[#allocation2 + $0xb38] sm:$0xff]
    %v505 = vld [vmem:[#allocation2 + $0xb40] sm:$0xff]
    %v506 = vld [vmem:[#allocation2 + $0xb48] sm:$0xff]
    %v507 = vld [vmem:[#allocation2 + $0xb50] sm:$0xff]
    %v508 = vld [vmem:[#allocation2 + $0xb58] sm:$0xff]
    %v509 = vld [vmem:[#allocation2 + $0xb60] sm:$0xff]
    %v510 = vld [vmem:[#allocation2 + $0xb68] sm:$0xff]
    %v511 = vld [vmem:[#allocation2 + $0xb70] sm:$0xff]
    %v512 = vld [vmem:[#allocation2 + $0xb78] sm:$0xff]
    %v513 = vld [vmem:[#allocation2 + $0xb80] sm:$0xff]
    %v514 = vld [vmem:[#allocation2 + $0xb88] sm:$0xff]
    %v515 = vld [vmem:[#allocation2 + $0xb90] sm:$0xff]
    %v516 = vld [vmem:[#allocation2 + $0xb98] sm:$0xff]
    %v517 = vld [vmem:[#allocation2 + $0xba0] sm:$0xff]
    %v518 = vld [vmem:[#allocation2 + $0xba8] sm:$0xff]
    %v519 = vld [vmem:[#allocation2 + $0xbb0] sm:$0xff]
    %v520 = vld [vmem:[#allocation2 + $0xbb8] sm:$0xff]
    %v521 = vld [vmem:[#allocation2 + $0xbc0] sm:$0xff]
    %v522 = vld [vmem:[#allocation2 + $0xbc8] sm:$0xff]
    %v523 = vld [vmem:[#allocation2 + $0xbd0] sm:$0xff]
    %v524 = vld [vmem:[#allocation2 + $0xbd8] sm:$0xff]
    %v525 = vld [vmem:[#allocation2 + $0xbe0] sm:$0xff]
    %v526 = vld [vmem:[#allocation2 + $0xbe8] sm:$0xff]
    %v527 = vld [vmem:[#allocation2 + $0xbf0] sm:$0xff]
    %v528 = vld [vmem:[#allocation2 + $0xbf8] sm:$0xff]
    %v529 = vld [vmem:[#allocation2 + $0xc00] sm:$0xff]
    %v530 = vld [vmem:[#allocation2 + $0xc08] sm:$0xff]
    %v531 = vld [vmem:[#allocation2 + $0xc10] sm:$0xff]
    %v532 = vld [vmem:[#allocation2 + $0xc18] sm:$0xff]
    %v533 = vld [vmem:[#allocation2 + $0xc20] sm:$0xff]
    %v534 = vld [vmem:[#allocation2 + $0xc28] sm:$0xff]
    %v535 = vld [vmem:[#allocation2 + $0xc30] sm:$0xff]
    %v536 = vld [vmem:[#allocation2 + $0xc38] sm:$0xff]
    %v537 = vld [vmem:[#allocation2 + $0xc40] sm:$0xff]
    %v538 = vld [vmem:[#allocation2 + $0xc48] sm:$0xff]
    %v539 = vld [vmem:[#allocation2 + $0xc50] sm:$0xff]
    %v540 = vld [vmem:[#allocation2 + $0xc58] sm:$0xff]
    %v541 = vld [vmem:[#allocation2 + $0xc60] sm:$0xff]
    %v542 = vld [vmem:[#allocation2 + $0xc68] sm:$0xff]
    %v543 = vld [vmem:[#allocation2 + $0xc70] sm:$0xff]
    %v544 = vld [vmem:[#allocation2 + $0xc78] sm:$0xff]
    %v545 = vld [vmem:[#allocation2 + $0xc80] sm:$0xff]
    %v546 = vld [vmem:[#allocation2 + $0xc88] sm:$0xff]
    %v547 = vld [vmem:[#allocation2 + $0xc90] sm:$0xff]
    %v548 = vld [vmem:[#allocation2 + $0xc98] sm:$0xff]
    %v549 = vld [vmem:[#allocation2 + $0xca0] sm:$0xff]
    %v550 = vld [vmem:[#allocation2 + $0xca8] sm:$0xff]
    %v551 = vld [vmem:[#allocation2 + $0xcb0] sm:$0xff]
    %v552 = vld [vmem:[#allocation2 + $0xcb8] sm:$0xff]
    %v553 = vld [vmem:[#allocation2 + $0xcc0] sm:$0xff]
    %v554 = vld [vmem:[#allocation2 + $0xcc8] sm:$0xff]
    %v555 = vld [vmem:[#allocation2 + $0xcd0] sm:$0xff]
    %v556 = vld [vmem:[#allocation2 + $0xcd8] sm:$0xff]
    %v557 = vld [vmem:[#allocation2 + $0xce0] sm:$0xff]
    %v558 = vld [vmem:[#allocation2 + $0xce8] sm:$0xff]
    %v559 = vld [vmem:[#allocation2 + $0xcf0] sm:$0xff]
    %v560 = vld [vmem:[#allocation2 + $0xcf8] sm:$0xff]
    %v561 = vld [vmem:[#allocation2 + $0xd00] sm:$0xff]
    %v562 = vld [vmem:[#allocation2 + $0xd08] sm:$0xff]
    %v563 = vld [vmem:[#allocation2 + $0xd10] sm:$0xff]
    %v564 = vld [vmem:[#allocation2 + $0xd18] sm:$0xff]
    %v565 = vld [vmem:[#allocation2 + $0xd20] sm:$0xff]
    %v566 = vld [vmem:[#allocation2 + $0xd28] sm:$0xff]
    %v567 = vld [vmem:[#allocation2 + $0xd30] sm:$0xff]
    %v568 = vld [vmem:[#allocation2 + $0xd38] sm:$0xff]
    %v569 = vld [vmem:[#allocation2 + $0xd40] sm:$0xff]
    %v570 = vld [vmem:[#allocation2 + $0xd48] sm:$0xff]
    %v571 = vld [vmem:[#allocation2 + $0xd50] sm:$0xff]
    %v572 = vld [vmem:[#allocation2 + $0xd58] sm:$0xff]
    %v573 = vld [vmem:[#allocation2 + $0xd60] sm:$0xff]
    %v574 = vld [vmem:[#allocation2 + $0xd68] sm:$0xff]
    %v575 = vld [vmem:[#allocation2 + $0xd70] sm:$0xff]
    %v576 = vld [vmem:[#allocation2 + $0xd78] sm:$0xff]
    %v577 = vld [vmem:[#allocation2 + $0xd80] sm:$0xff]
    %v578 = vld [vmem:[#allocation2 + $0xd88] sm:$0xff]
    %v579 = vld [vmem:[#allocation2 + $0xd90] sm:$0xff]
    %v580 = vld [vmem:[#allocation2 + $0xd98] sm:$0xff]
    %v581 = vld [vmem:[#allocation2 + $0xda0] sm:$0xff]
    %v582 = vld [vmem:[#allocation2 + $0xda8] sm:$0xff]
    %v583 = vld [vmem:[#allocation2 + $0xdb0] sm:$0xff]
    %v584 = vld [vmem:[#allocation2 + $0xdb8] sm:$0xff]
    %v585 = vld [vmem:[#allocation2 + $0xdc0] sm:$0xff]
    %v586 = vld [vmem:[#allocation2 + $0xdc8] sm:$0xff]
    %v587 = vld [vmem:[#allocation2 + $0xdd0] sm:$0xff]
    %v588 = vld [vmem:[#allocation2 + $0xdd8] sm:$0xff]
    %v589 = vld [vmem:[#allocation2 + $0xde0] sm:$0xff]
    %v590 = vld [vmem:[#allocation2 + $0xde8] sm:$0xff]
    %v591 = vld [vmem:[#allocation2 + $0xdf0] sm:$0xff]
    %v592 = vld [vmem:[#allocation2 + $0xdf8] sm:$0xff]
    %v593 = vunpack.c.l.s8.bf16 %v145
    %v594 = vunpack.c.l.s8.bf16 %v146
    %v595 = vunpack.c.h.s8.bf16 %v145
    %v596 = vunpack.c.h.s8.bf16 %v146
    %v597 = vunpack.c.l.s8.bf16 %v147
    %v598 = vunpack.c.l.s8.bf16 %v148
    %v599 = vunpack.c.h.s8.bf16 %v147
    %v600 = vunpack.c.h.s8.bf16 %v148
    %v601 = vunpack.c.l.s8.bf16 %v149
    %v602 = vunpack.c.l.s8.bf16 %v150
    %v603 = vunpack.c.h.s8.bf16 %v149
    %v604 = vunpack.c.h.s8.bf16 %v150
    %v605 = vunpack.c.l.s8.bf16 %v151
    %v606 = vunpack.c.l.s8.bf16 %v152
    %v607 = vunpack.c.h.s8.bf16 %v151
    %v608 = vunpack.c.h.s8.bf16 %v152
    %v609 = vunpack.c.l.s8.bf16 %v153
    %v610 = vunpack.c.l.s8.bf16 %v154
    %v611 = vunpack.c.h.s8.bf16 %v153
    %v612 = vunpack.c.h.s8.bf16 %v154
    %v613 = vunpack.c.l.s8.bf16 %v155
    %v614 = vunpack.c.l.s8.bf16 %v156
    %v615 = vunpack.c.h.s8.bf16 %v155
    %v616 = vunpack.c.h.s8.bf16 %v156
    %v617 = vunpack.c.l.s8.bf16 %v157
    %v618 = vunpack.c.l.s8.bf16 %v158
    %v619 = vunpack.c.h.s8.bf16 %v157
    %v620 = vunpack.c.h.s8.bf16 %v158
    %v621 = vunpack.c.l.s8.bf16 %v159
    %v622 = vunpack.c.l.s8.bf16 %v160
    %v623 = vunpack.c.h.s8.bf16 %v159
    %v624 = vunpack.c.h.s8.bf16 %v160
    %v625 = vunpack.c.l.s8.bf16 %v161
    %v626 = vunpack.c.l.s8.bf16 %v162
    %v627 = vunpack.c.h.s8.bf16 %v161
    %v628 = vunpack.c.h.s8.bf16 %v162
    %v629 = vunpack.c.l.s8.bf16 %v163
    %v630 = vunpack.c.l.s8.bf16 %v164
    %v631 = vunpack.c.h.s8.bf16 %v163
    %v632 = vunpack.c.h.s8.bf16 %v164
    %v633 = vunpack.c.l.s8.bf16 %v165
    %v634 = vunpack.c.l.s8.bf16 %v166
    %v635 = vunpack.c.h.s8.bf16 %v165
    %v636 = vunpack.c.h.s8.bf16 %v166
    %v637 = vunpack.c.l.s8.bf16 %v167
    %v638 = vunpack.c.l.s8.bf16 %v168
    %v639 = vunpack.c.h.s8.bf16 %v167
    %v640 = vunpack.c.h.s8.bf16 %v168
    %v641 = vunpack.c.l.s8.bf16 %v169
    %v642 = vunpack.c.l.s8.bf16 %v170
    %v643 = vunpack.c.h.s8.bf16 %v169
    %v644 = vunpack.c.h.s8.bf16 %v170
    %v645 = vunpack.c.l.s8.bf16 %v171
    %v646 = vunpack.c.l.s8.bf16 %v172
    %v647 = vunpack.c.h.s8.bf16 %v171
    %v648 = vunpack.c.h.s8.bf16 %v172
    %v649 = vunpack.c.l.s8.bf16 %v173
    %v650 = vunpack.c.l.s8.bf16 %v174
    %v651 = vunpack.c.h.s8.bf16 %v173
    %v652 = vunpack.c.h.s8.bf16 %v174
    %v653 = vunpack.c.l.s8.bf16 %v175
    %v654 = vunpack.c.l.s8.bf16 %v176
    %v655 = vunpack.c.h.s8.bf16 %v175
    %v656 = vunpack.c.h.s8.bf16 %v176
    %v657 = vunpack.c.l.s8.bf16 %v177
    %v658 = vunpack.c.l.s8.bf16 %v178
    %v659 = vunpack.c.h.s8.bf16 %v177
    %v660 = vunpack.c.h.s8.bf16 %v178
    %v661 = vunpack.c.l.s8.bf16 %v179
    %v662 = vunpack.c.l.s8.bf16 %v180
    %v663 = vunpack.c.h.s8.bf16 %v179
    %v664 = vunpack.c.h.s8.bf16 %v180
    %v665 = vunpack.c.l.s8.bf16 %v181
    %v666 = vunpack.c.l.s8.bf16 %v182
    %v667 = vunpack.c.h.s8.bf16 %v181
    %v668 = vunpack.c.h.s8.bf16 %v182
    %v669 = vunpack.c.l.s8.bf16 %v183
    %v670 = vunpack.c.l.s8.bf16 %v184
    %v671 = vunpack.c.h.s8.bf16 %v183
    %v672 = vunpack.c.h.s8.bf16 %v184
    %v673 = vunpack.c.l.s8.bf16 %v185
    %v674 = vunpack.c.l.s8.bf16 %v186
    %v675 = vunpack.c.h.s8.bf16 %v185
    %v676 = vunpack.c.h.s8.bf16 %v186
    %v677 = vunpack.c.l.s8.bf16 %v187
    %v678 = vunpack.c.l.s8.bf16 %v188
    %v679 = vunpack.c.h.s8.bf16 %v187
    %v680 = vunpack.c.h.s8.bf16 %v188
    %v681 = vunpack.c.l.s8.bf16 %v189
    %v682 = vunpack.c.l.s8.bf16 %v190
    %v683 = vunpack.c.h.s8.bf16 %v189
    %v684 = vunpack.c.h.s8.bf16 %v190
    %v685 = vunpack.c.l.s8.bf16 %v191
    %v686 = vunpack.c.l.s8.bf16 %v192
    %v687 = vunpack.c.h.s8.bf16 %v191
    %v688 = vunpack.c.h.s8.bf16 %v192
    %v689 = vunpack.c.l.s8.bf16 %v193
    %v690 = vunpack.c.l.s8.bf16 %v194
    %v691 = vunpack.c.h.s8.bf16 %v193
    %v692 = vunpack.c.h.s8.bf16 %v194
    %v693 = vunpack.c.l.s8.bf16 %v195
    %v694 = vunpack.c.l.s8.bf16 %v196
    %v695 = vunpack.c.h.s8.bf16 %v195
    %v696 = vunpack.c.h.s8.bf16 %v196
    %v697 = vunpack.c.l.s8.bf16 %v197
    %v698 = vunpack.c.l.s8.bf16 %v198
    %v699 = vunpack.c.h.s8.bf16 %v197
    %v700 = vunpack.c.h.s8.bf16 %v198
    %v701 = vunpack.c.l.s8.bf16 %v199
    %v702 = vunpack.c.l.s8.bf16 %v200
    %v703 = vunpack.c.h.s8.bf16 %v199
    %v704 = vunpack.c.h.s8.bf16 %v200
    %v705 = vunpack.c.l.s8.bf16 %v201
    %v706 = vunpack.c.l.s8.bf16 %v202
    %v707 = vunpack.c.h.s8.bf16 %v201
    %v708 = vunpack.c.h.s8.bf16 %v202
    %v709 = vunpack.c.l.s8.bf16 %v203
    %v710 = vunpack.c.l.s8.bf16 %v204
    %v711 = vunpack.c.h.s8.bf16 %v203
    %v712 = vunpack.c.h.s8.bf16 %v204
    %v713 = vunpack.c.l.s8.bf16 %v205
    %v714 = vunpack.c.l.s8.bf16 %v206
    %v715 = vunpack.c.h.s8.bf16 %v205
    %v716 = vunpack.c.h.s8.bf16 %v206
    %v717 = vunpack.c.l.s8.bf16 %v207
    %v718 = vunpack.c.l.s8.bf16 %v208
    %v719 = vunpack.c.h.s8.bf16 %v207
    %v720 = vunpack.c.h.s8.bf16 %v208
    %v721 = vunpack.c.l.s8.bf16 %v209
    %v722 = vunpack.c.l.s8.bf16 %v210
    %v723 = vunpack.c.h.s8.bf16 %v209
    %v724 = vunpack.c.h.s8.bf16 %v210
    %v725 = vunpack.c.l.s8.bf16 %v211
    %v726 = vunpack.c.l.s8.bf16 %v212
    %v727 = vunpack.c.h.s8.bf16 %v211
    %v728 = vunpack.c.h.s8.bf16 %v212
    %v729 = vunpack.c.l.s8.bf16 %v213
    %v730 = vunpack.c.l.s8.bf16 %v214
    %v731 = vunpack.c.h.s8.bf16 %v213
    %v732 = vunpack.c.h.s8.bf16 %v214
    %v733 = vunpack.c.l.s8.bf16 %v215
    %v734 = vunpack.c.l.s8.bf16 %v216
    %v735 = vunpack.c.h.s8.bf16 %v215
    %v736 = vunpack.c.h.s8.bf16 %v216
    %v737 = vunpack.c.l.s8.bf16 %v217
    %v738 = vunpack.c.l.s8.bf16 %v218
    %v739 = vunpack.c.h.s8.bf16 %v217
    %v740 = vunpack.c.h.s8.bf16 %v218
    %v741 = vunpack.c.l.s8.bf16 %v219
    %v742 = vunpack.c.l.s8.bf16 %v220
    %v743 = vunpack.c.h.s8.bf16 %v219
    %v744 = vunpack.c.h.s8.bf16 %v220
    %v745 = vunpack.c.l.s8.bf16 %v221
    %v746 = vunpack.c.l.s8.bf16 %v222
    %v747 = vunpack.c.h.s8.bf16 %v221
    %v748 = vunpack.c.h.s8.bf16 %v222
    %v749 = vunpack.c.l.s8.bf16 %v223
    %v750 = vunpack.c.l.s8.bf16 %v224
    %v751 = vunpack.c.h.s8.bf16 %v223
    %v752 = vunpack.c.h.s8.bf16 %v224
    %v753 = vunpack.c.l.s8.bf16 %v225
    %v754 = vunpack.c.l.s8.bf16 %v226
    %v755 = vunpack.c.h.s8.bf16 %v225
    %v756 = vunpack.c.h.s8.bf16 %v226
    %v757 = vunpack.c.l.s8.bf16 %v227
    %v758 = vunpack.c.l.s8.bf16 %v228
    %v759 = vunpack.c.h.s8.bf16 %v227
    %v760 = vunpack.c.h.s8.bf16 %v228
    %v761 = vunpack.c.l.s8.bf16 %v229
    %v762 = vunpack.c.l.s8.bf16 %v230
    %v763 = vunpack.c.h.s8.bf16 %v229
    %v764 = vunpack.c.h.s8.bf16 %v230
    %v765 = vunpack.c.l.s8.bf16 %v231
    %v766 = vunpack.c.l.s8.bf16 %v232
    %v767 = vunpack.c.h.s8.bf16 %v231
    %v768 = vunpack.c.h.s8.bf16 %v232
    %v769 = vunpack.c.l.s8.bf16 %v233
    %v770 = vunpack.c.l.s8.bf16 %v234
    %v771 = vunpack.c.h.s8.bf16 %v233
    %v772 = vunpack.c.h.s8.bf16 %v234
    %v773 = vunpack.c.l.s8.bf16 %v235
    %v774 = vunpack.c.l.s8.bf16 %v236
    %v775 = vunpack.c.h.s8.bf16 %v235
    %v776 = vunpack.c.h.s8.bf16 %v236
    %v777 = vunpack.c.l.s8.bf16 %v237
    %v778 = vunpack.c.l.s8.bf16 %v238
    %v779 = vunpack.c.h.s8.bf16 %v237
    %v780 = vunpack.c.h.s8.bf16 %v238
    %v781 = vunpack.c.l.s8.bf16 %v239
    %v782 = vunpack.c.l.s8.bf16 %v240
    %v783 = vunpack.c.h.s8.bf16 %v239
    %v784 = vunpack.c.h.s8.bf16 %v240
    %v785 = vunpack.c.l.s8.bf16 %v241
    %v786 = vunpack.c.l.s8.bf16 %v242
    %v787 = vunpack.c.h.s8.bf16 %v241
    %v788 = vunpack.c.h.s8.bf16 %v242
    %v789 = vunpack.c.l.s8.bf16 %v243
    %v790 = vunpack.c.l.s8.bf16 %v244
    %v791 = vunpack.c.h.s8.bf16 %v243
    %v792 = vunpack.c.h.s8.bf16 %v244
    %v793 = vunpack.c.l.s8.bf16 %v245
    %v794 = vunpack.c.l.s8.bf16 %v246
    %v795 = vunpack.c.h.s8.bf16 %v245
    %v796 = vunpack.c.h.s8.bf16 %v246
    %v797 = vunpack.c.l.s8.bf16 %v247
    %v798 = vunpack.c.l.s8.bf16 %v248
    %v799 = vunpack.c.h.s8.bf16 %v247
    %v800 = vunpack.c.h.s8.bf16 %v248
    %v801 = vunpack.c.l.s8.bf16 %v249
    %v802 = vunpack.c.l.s8.bf16 %v250
    %v803 = vunpack.c.h.s8.bf16 %v249
    %v804 = vunpack.c.h.s8.bf16 %v250
    %v805 = vunpack.c.l.s8.bf16 %v251
    %v806 = vunpack.c.l.s8.bf16 %v252
    %v807 = vunpack.c.h.s8.bf16 %v251
    %v808 = vunpack.c.h.s8.bf16 %v252
    %v809 = vunpack.c.l.s8.bf16 %v253
    %v810 = vunpack.c.l.s8.bf16 %v254
    %v811 = vunpack.c.h.s8.bf16 %v253
    %v812 = vunpack.c.h.s8.bf16 %v254
    %v813 = vunpack.c.l.s8.bf16 %v255
    %v814 = vunpack.c.l.s8.bf16 %v256
    %v815 = vunpack.c.h.s8.bf16 %v255
    %v816 = vunpack.c.h.s8.bf16 %v256
    %v817 = vunpack.c.l.s8.bf16 %v257
    %v818 = vunpack.c.l.s8.bf16 %v258
    %v819 = vunpack.c.h.s8.bf16 %v257
    %v820 = vunpack.c.h.s8.bf16 %v258
    %v821 = vunpack.c.l.s8.bf16 %v259
    %v822 = vunpack.c.l.s8.bf16 %v260
    %v823 = vunpack.c.h.s8.bf16 %v259
    %v824 = vunpack.c.h.s8.bf16 %v260
    %v825 = vunpack.c.l.s8.bf16 %v261
    %v826 = vunpack.c.l.s8.bf16 %v262
    %v827 = vunpack.c.h.s8.bf16 %v261
    %v828 = vunpack.c.h.s8.bf16 %v262
    %v829 = vunpack.c.l.s8.bf16 %v263
    %v830 = vunpack.c.l.s8.bf16 %v264
    %v831 = vunpack.c.h.s8.bf16 %v263
    %v832 = vunpack.c.h.s8.bf16 %v264
    %v833 = vunpack.c.l.s8.bf16 %v265
    %v834 = vunpack.c.l.s8.bf16 %v266
    %v835 = vunpack.c.h.s8.bf16 %v265
    %v836 = vunpack.c.h.s8.bf16 %v266
    %v837 = vunpack.c.l.s8.bf16 %v267
    %v838 = vunpack.c.l.s8.bf16 %v268
    %v839 = vunpack.c.h.s8.bf16 %v267
    %v840 = vunpack.c.h.s8.bf16 %v268
    %v841 = vunpack.c.l.s8.bf16 %v269
    %v842 = vunpack.c.l.s8.bf16 %v270
    %v843 = vunpack.c.h.s8.bf16 %v269
    %v844 = vunpack.c.h.s8.bf16 %v270
    %v845 = vunpack.c.l.s8.bf16 %v271
    %v846 = vunpack.c.l.s8.bf16 %v272
    %v847 = vunpack.c.h.s8.bf16 %v271
    %v848 = vunpack.c.h.s8.bf16 %v272
    %v849 = vunpack.c.l.s8.bf16 %v273
    %v850 = vunpack.c.l.s8.bf16 %v274
    %v851 = vunpack.c.h.s8.bf16 %v273
    %v852 = vunpack.c.h.s8.bf16 %v274
    %v853 = vunpack.c.l.s8.bf16 %v275
    %v854 = vunpack.c.l.s8.bf16 %v276
    %v855 = vunpack.c.h.s8.bf16 %v275
    %v856 = vunpack.c.h.s8.bf16 %v276
    %v857 = vunpack.c.l.s8.bf16 %v277
    %v858 = vunpack.c.l.s8.bf16 %v278
    %v859 = vunpack.c.h.s8.bf16 %v277
    %v860 = vunpack.c.h.s8.bf16 %v278
    %v861 = vunpack.c.l.s8.bf16 %v279
    %v862 = vunpack.c.l.s8.bf16 %v280
    %v863 = vunpack.c.h.s8.bf16 %v279
    %v864 = vunpack.c.h.s8.bf16 %v280
    %v865 = vunpack.c.l.s8.bf16 %v281
    %v866 = vunpack.c.l.s8.bf16 %v282
    %v867 = vunpack.c.h.s8.bf16 %v281
    %v868 = vunpack.c.h.s8.bf16 %v282
    %v869 = vunpack.c.l.s8.bf16 %v283
    %v870 = vunpack.c.l.s8.bf16 %v284
    %v871 = vunpack.c.h.s8.bf16 %v283
    %v872 = vunpack.c.h.s8.bf16 %v284
    %v873 = vunpack.c.l.s8.bf16 %v285
    %v874 = vunpack.c.l.s8.bf16 %v286
    %v875 = vunpack.c.h.s8.bf16 %v285
    %v876 = vunpack.c.h.s8.bf16 %v286
    %v877 = vunpack.c.l.s8.bf16 %v287
    %v878 = vunpack.c.l.s8.bf16 %v288
    %v879 = vunpack.c.h.s8.bf16 %v287
    %v880 = vunpack.c.h.s8.bf16 %v288
    %v881 = vunpack.c.l.s8.bf16 %v289
    %v882 = vunpack.c.l.s8.bf16 %v290
    %v883 = vunpack.c.h.s8.bf16 %v289
    %v884 = vunpack.c.h.s8.bf16 %v290
    %v885 = vunpack.c.l.s8.bf16 %v291
    %v886 = vunpack.c.l.s8.bf16 %v292
    %v887 = vunpack.c.h.s8.bf16 %v291
    %v888 = vunpack.c.h.s8.bf16 %v292
    %v889 = vunpack.c.l.s8.bf16 %v293
    %v890 = vunpack.c.l.s8.bf16 %v294
    %v891 = vunpack.c.h.s8.bf16 %v293
    %v892 = vunpack.c.h.s8.bf16 %v294
    %v893 = vunpack.c.l.s8.bf16 %v295
    %v894 = vunpack.c.l.s8.bf16 %v296
    %v895 = vunpack.c.h.s8.bf16 %v295
    %v896 = vunpack.c.h.s8.bf16 %v296
    %v897 = vunpack.c.l.s8.bf16 %v297
    %v898 = vunpack.c.l.s8.bf16 %v298
    %v899 = vunpack.c.h.s8.bf16 %v297
    %v900 = vunpack.c.h.s8.bf16 %v298
    %v901 = vunpack.c.l.s8.bf16 %v299
    %v902 = vunpack.c.l.s8.bf16 %v300
    %v903 = vunpack.c.h.s8.bf16 %v299
    %v904 = vunpack.c.h.s8.bf16 %v300
    %v905 = vunpack.c.l.s8.bf16 %v301
    %v906 = vunpack.c.l.s8.bf16 %v302
    %v907 = vunpack.c.h.s8.bf16 %v301
    %v908 = vunpack.c.h.s8.bf16 %v302
    %v909 = vunpack.c.l.s8.bf16 %v303
    %v910 = vunpack.c.l.s8.bf16 %v304
    %v911 = vunpack.c.h.s8.bf16 %v303
    %v912 = vunpack.c.h.s8.bf16 %v304
    %v913 = vunpack.c.l.s8.bf16 %v305
    %v914 = vunpack.c.l.s8.bf16 %v306
    %v915 = vunpack.c.h.s8.bf16 %v305
    %v916 = vunpack.c.h.s8.bf16 %v306
    %v917 = vunpack.c.l.s8.bf16 %v307
    %v918 = vunpack.c.l.s8.bf16 %v308
    %v919 = vunpack.c.h.s8.bf16 %v307
    %v920 = vunpack.c.h.s8.bf16 %v308
    %v921 = vunpack.c.l.s8.bf16 %v309
    %v922 = vunpack.c.l.s8.bf16 %v310
    %v923 = vunpack.c.h.s8.bf16 %v309
    %v924 = vunpack.c.h.s8.bf16 %v310
    %v925 = vunpack.c.l.s8.bf16 %v311
    %v926 = vunpack.c.l.s8.bf16 %v312
    %v927 = vunpack.c.h.s8.bf16 %v311
    %v928 = vunpack.c.h.s8.bf16 %v312
    %v929 = vunpack.c.l.s8.bf16 %v313
    %v930 = vunpack.c.l.s8.bf16 %v314
    %v931 = vunpack.c.h.s8.bf16 %v313
    %v932 = vunpack.c.h.s8.bf16 %v314
    %v933 = vunpack.c.l.s8.bf16 %v315
    %v934 = vunpack.c.l.s8.bf16 %v316
    %v935 = vunpack.c.h.s8.bf16 %v315
    %v936 = vunpack.c.h.s8.bf16 %v316
    %v937 = vunpack.c.l.s8.bf16 %v317
    %v938 = vunpack.c.l.s8.bf16 %v318
    %v939 = vunpack.c.h.s8.bf16 %v317
    %v940 = vunpack.c.h.s8.bf16 %v318
    %v941 = vunpack.c.l.s8.bf16 %v319
    %v942 = vunpack.c.l.s8.bf16 %v320
    %v943 = vunpack.c.h.s8.bf16 %v319
    %v944 = vunpack.c.h.s8.bf16 %v320
    %v945 = vunpack.c.l.s8.bf16 %v321
    %v946 = vunpack.c.l.s8.bf16 %v322
    %v947 = vunpack.c.h.s8.bf16 %v321
    %v948 = vunpack.c.h.s8.bf16 %v322
    %v949 = vunpack.c.l.s8.bf16 %v323
    %v950 = vunpack.c.l.s8.bf16 %v324
    %v951 = vunpack.c.h.s8.bf16 %v323
    %v952 = vunpack.c.h.s8.bf16 %v324
    %v953 = vunpack.c.l.s8.bf16 %v325
    %v954 = vunpack.c.l.s8.bf16 %v326
    %v955 = vunpack.c.h.s8.bf16 %v325
    %v956 = vunpack.c.h.s8.bf16 %v326
    %v957 = vunpack.c.l.s8.bf16 %v327
    %v958 = vunpack.c.l.s8.bf16 %v328
    %v959 = vunpack.c.h.s8.bf16 %v327
    %v960 = vunpack.c.h.s8.bf16 %v328
    %v961 = vunpack.c.l.s8.bf16 %v329
    %v962 = vunpack.c.l.s8.bf16 %v330
    %v963 = vunpack.c.h.s8.bf16 %v329
    %v964 = vunpack.c.h.s8.bf16 %v330
    %v965 = vunpack.c.l.s8.bf16 %v331
    %v966 = vunpack.c.l.s8.bf16 %v332
    %v967 = vunpack.c.h.s8.bf16 %v331
    %v968 = vunpack.c.h.s8.bf16 %v332
    %v969 = vunpack.c.l.s8.bf16 %v333
    %v970 = vunpack.c.l.s8.bf16 %v334
    %v971 = vunpack.c.h.s8.bf16 %v333
    %v972 = vunpack.c.h.s8.bf16 %v334
    %v973 = vunpack.c.l.s8.bf16 %v335
    %v974 = vunpack.c.l.s8.bf16 %v336
    %v975 = vunpack.c.h.s8.bf16 %v335
    %v976 = vunpack.c.h.s8.bf16 %v336
    %v977 = vunpack.c.l.s8.bf16 %v337
    %v978 = vunpack.c.l.s8.bf16 %v338
    %v979 = vunpack.c.h.s8.bf16 %v337
    %v980 = vunpack.c.h.s8.bf16 %v338
    %v981 = vunpack.c.l.s8.bf16 %v339
    %v982 = vunpack.c.l.s8.bf16 %v340
    %v983 = vunpack.c.h.s8.bf16 %v339
    %v984 = vunpack.c.h.s8.bf16 %v340
    %v985 = vunpack.c.l.s8.bf16 %v341
    %v986 = vunpack.c.l.s8.bf16 %v342
    %v987 = vunpack.c.h.s8.bf16 %v341
    %v988 = vunpack.c.h.s8.bf16 %v342
    %v989 = vunpack.c.l.s8.bf16 %v343
    %v990 = vunpack.c.l.s8.bf16 %v344
    %v991 = vunpack.c.h.s8.bf16 %v343
    %v992 = vunpack.c.h.s8.bf16 %v344
    %v993 = vunpack.c.l.s8.bf16 %v345
    %v994 = vunpack.c.l.s8.bf16 %v346
    %v995 = vunpack.c.h.s8.bf16 %v345
    %v996 = vunpack.c.h.s8.bf16 %v346
    %v997 = vunpack.c.l.s8.bf16 %v347
    %v998 = vunpack.c.l.s8.bf16 %v348
    %v999 = vunpack.c.h.s8.bf16 %v347
    %v1000 = vunpack.c.h.s8.bf16 %v348
    %v1001 = vunpack.c.l.s8.bf16 %v349
    %v1002 = vunpack.c.l.s8.bf16 %v350
    %v1003 = vunpack.c.h.s8.bf16 %v349
    %v1004 = vunpack.c.h.s8.bf16 %v350
    %v1005 = vunpack.c.l.s8.bf16 %v351
    %v1006 = vunpack.c.l.s8.bf16 %v352
    %v1007 = vunpack.c.h.s8.bf16 %v351
    %v1008 = vunpack.c.h.s8.bf16 %v352
    %v1009 = vunpack.c.l.s8.bf16 %v353
    %v1010 = vunpack.c.l.s8.bf16 %v354
    %v1011 = vunpack.c.h.s8.bf16 %v353
    %v1012 = vunpack.c.h.s8.bf16 %v354
    %v1013 = vunpack.c.l.s8.bf16 %v355
    %v1014 = vunpack.c.l.s8.bf16 %v356
    %v1015 = vunpack.c.h.s8.bf16 %v355
    %v1016 = vunpack.c.h.s8.bf16 %v356
    %v1017 = vunpack.c.l.s8.bf16 %v357
    %v1018 = vunpack.c.l.s8.bf16 %v358
    %v1019 = vunpack.c.h.s8.bf16 %v357
    %v1020 = vunpack.c.h.s8.bf16 %v358
    %v1021 = vunpack.c.l.s8.bf16 %v359
    %v1022 = vunpack.c.l.s8.bf16 %v360
    %v1023 = vunpack.c.h.s8.bf16 %v359
    %v1024 = vunpack.c.h.s8.bf16 %v360
    %v1025 = vunpack.c.l.s8.bf16 %v361
    %v1026 = vunpack.c.l.s8.bf16 %v362
    %v1027 = vunpack.c.h.s8.bf16 %v361
    %v1028 = vunpack.c.h.s8.bf16 %v362
    %v1029 = vunpack.c.l.s8.bf16 %v363
    %v1030 = vunpack.c.l.s8.bf16 %v364
    %v1031 = vunpack.c.h.s8.bf16 %v363
    %v1032 = vunpack.c.h.s8.bf16 %v364
    %v1033 = vunpack.c.l.s8.bf16 %v365
    %v1034 = vunpack.c.l.s8.bf16 %v366
    %v1035 = vunpack.c.h.s8.bf16 %v365
    %v1036 = vunpack.c.h.s8.bf16 %v366
    %v1037 = vunpack.c.l.s8.bf16 %v367
    %v1038 = vunpack.c.l.s8.bf16 %v368
    %v1039 = vunpack.c.h.s8.bf16 %v367
    %v1040 = vunpack.c.h.s8.bf16 %v368
    %v1041 = vunpack.c.l.s8.bf16 %v369
    %v1042 = vunpack.c.l.s8.bf16 %v370
    %v1043 = vunpack.c.h.s8.bf16 %v369
    %v1044 = vunpack.c.h.s8.bf16 %v370
    %v1045 = vunpack.c.l.s8.bf16 %v371
    %v1046 = vunpack.c.l.s8.bf16 %v372
    %v1047 = vunpack.c.h.s8.bf16 %v371
    %v1048 = vunpack.c.h.s8.bf16 %v372
    %v1049 = vunpack.c.l.s8.bf16 %v373
    %v1050 = vunpack.c.l.s8.bf16 %v374
    %v1051 = vunpack.c.h.s8.bf16 %v373
    %v1052 = vunpack.c.h.s8.bf16 %v374
    %v1053 = vunpack.c.l.s8.bf16 %v375
    %v1054 = vunpack.c.l.s8.bf16 %v376
    %v1055 = vunpack.c.h.s8.bf16 %v375
    %v1056 = vunpack.c.h.s8.bf16 %v376
    %v1057 = vunpack.c.l.s8.bf16 %v377
    %v1058 = vunpack.c.l.s8.bf16 %v378
    %v1059 = vunpack.c.h.s8.bf16 %v377
    %v1060 = vunpack.c.h.s8.bf16 %v378
    %v1061 = vunpack.c.l.s8.bf16 %v379
    %v1062 = vunpack.c.l.s8.bf16 %v380
    %v1063 = vunpack.c.h.s8.bf16 %v379
    %v1064 = vunpack.c.h.s8.bf16 %v380
    %v1065 = vunpack.c.l.s8.bf16 %v381
    %v1066 = vunpack.c.l.s8.bf16 %v382
    %v1067 = vunpack.c.h.s8.bf16 %v381
    %v1068 = vunpack.c.h.s8.bf16 %v382
    %v1069 = vunpack.c.l.s8.bf16 %v383
    %v1070 = vunpack.c.l.s8.bf16 %v384
    %v1071 = vunpack.c.h.s8.bf16 %v383
    %v1072 = vunpack.c.h.s8.bf16 %v384
    %v1073 = vunpack.c.l.s8.bf16 %v385
    %v1074 = vunpack.c.l.s8.bf16 %v386
    %v1075 = vunpack.c.h.s8.bf16 %v385
    %v1076 = vunpack.c.h.s8.bf16 %v386
    %v1077 = vunpack.c.l.s8.bf16 %v387
    %v1078 = vunpack.c.l.s8.bf16 %v388
    %v1079 = vunpack.c.h.s8.bf16 %v387
    %v1080 = vunpack.c.h.s8.bf16 %v388
    %v1081 = vunpack.c.l.s8.bf16 %v389
    %v1082 = vunpack.c.l.s8.bf16 %v390
    %v1083 = vunpack.c.h.s8.bf16 %v389
    %v1084 = vunpack.c.h.s8.bf16 %v390
    %v1085 = vunpack.c.l.s8.bf16 %v391
    %v1086 = vunpack.c.l.s8.bf16 %v392
    %v1087 = vunpack.c.h.s8.bf16 %v391
    %v1088 = vunpack.c.h.s8.bf16 %v392
    %v1089 = vunpack.c.l.s8.bf16 %v393
    %v1090 = vunpack.c.l.s8.bf16 %v394
    %v1091 = vunpack.c.h.s8.bf16 %v393
    %v1092 = vunpack.c.h.s8.bf16 %v394
    %v1093 = vunpack.c.l.s8.bf16 %v395
    %v1094 = vunpack.c.l.s8.bf16 %v396
    %v1095 = vunpack.c.h.s8.bf16 %v395
    %v1096 = vunpack.c.h.s8.bf16 %v396
    %v1097 = vunpack.c.l.s8.bf16 %v397
    %v1098 = vunpack.c.l.s8.bf16 %v398
    %v1099 = vunpack.c.h.s8.bf16 %v397
    %v1100 = vunpack.c.h.s8.bf16 %v398
    %v1101 = vunpack.c.l.s8.bf16 %v399
    %v1102 = vunpack.c.l.s8.bf16 %v400
    %v1103 = vunpack.c.h.s8.bf16 %v399
    %v1104 = vunpack.c.h.s8.bf16 %v400
    %v1105 = vunpack.c.l.s8.bf16 %v401
    %v1106 = vunpack.c.l.s8.bf16 %v402
    %v1107 = vunpack.c.h.s8.bf16 %v401
    %v1108 = vunpack.c.h.s8.bf16 %v402
    %v1109 = vunpack.c.l.s8.bf16 %v403
    %v1110 = vunpack.c.l.s8.bf16 %v404
    %v1111 = vunpack.c.h.s8.bf16 %v403
    %v1112 = vunpack.c.h.s8.bf16 %v404
    %v1113 = vunpack.c.l.s8.bf16 %v405
    %v1114 = vunpack.c.l.s8.bf16 %v406
    %v1115 = vunpack.c.h.s8.bf16 %v405
    %v1116 = vunpack.c.h.s8.bf16 %v406
    %v1117 = vunpack.c.l.s8.bf16 %v407
    %v1118 = vunpack.c.l.s8.bf16 %v408
    %v1119 = vunpack.c.h.s8.bf16 %v407
    %v1120 = vunpack.c.h.s8.bf16 %v408
    %v1121 = vunpack.c.l.s8.bf16 %v409
    %v1122 = vunpack.c.l.s8.bf16 %v410
    %v1123 = vunpack.c.h.s8.bf16 %v409
    %v1124 = vunpack.c.h.s8.bf16 %v410
    %v1125 = vunpack.c.l.s8.bf16 %v411
    %v1126 = vunpack.c.l.s8.bf16 %v412
    %v1127 = vunpack.c.h.s8.bf16 %v411
    %v1128 = vunpack.c.h.s8.bf16 %v412
    %v1129 = vunpack.c.l.s8.bf16 %v413
    %v1130 = vunpack.c.l.s8.bf16 %v414
    %v1131 = vunpack.c.h.s8.bf16 %v413
    %v1132 = vunpack.c.h.s8.bf16 %v414
    %v1133 = vunpack.c.l.s8.bf16 %v415
    %v1134 = vunpack.c.l.s8.bf16 %v416
    %v1135 = vunpack.c.h.s8.bf16 %v415
    %v1136 = vunpack.c.h.s8.bf16 %v416
    %v1137 = vunpack.c.l.s8.bf16 %v417
    %v1138 = vunpack.c.l.s8.bf16 %v418
    %v1139 = vunpack.c.h.s8.bf16 %v417
    %v1140 = vunpack.c.h.s8.bf16 %v418
    %v1141 = vunpack.c.l.s8.bf16 %v419
    %v1142 = vunpack.c.l.s8.bf16 %v420
    %v1143 = vunpack.c.h.s8.bf16 %v419
    %v1144 = vunpack.c.h.s8.bf16 %v420
    %v1145 = vunpack.c.l.s8.bf16 %v421
    %v1146 = vunpack.c.l.s8.bf16 %v422
    %v1147 = vunpack.c.h.s8.bf16 %v421
    %v1148 = vunpack.c.h.s8.bf16 %v422
    %v1149 = vunpack.c.l.s8.bf16 %v423
    %v1150 = vunpack.c.l.s8.bf16 %v424
    %v1151 = vunpack.c.h.s8.bf16 %v423
    %v1152 = vunpack.c.h.s8.bf16 %v424
    %v1153 = vunpack.c.l.s8.bf16 %v425
    %v1154 = vunpack.c.l.s8.bf16 %v426
    %v1155 = vunpack.c.h.s8.bf16 %v425
    %v1156 = vunpack.c.h.s8.bf16 %v426
    %v1157 = vunpack.c.l.s8.bf16 %v427
    %v1158 = vunpack.c.l.s8.bf16 %v428
    %v1159 = vunpack.c.h.s8.bf16 %v427
    %v1160 = vunpack.c.h.s8.bf16 %v428
    %v1161 = vunpack.c.l.s8.bf16 %v429
    %v1162 = vunpack.c.l.s8.bf16 %v430
    %v1163 = vunpack.c.h.s8.bf16 %v429
    %v1164 = vunpack.c.h.s8.bf16 %v430
    %v1165 = vunpack.c.l.s8.bf16 %v431
    %v1166 = vunpack.c.l.s8.bf16 %v432
    %v1167 = vunpack.c.h.s8.bf16 %v431
    %v1168 = vunpack.c.h.s8.bf16 %v432
    %v1169 = vunpack.c.l.s8.bf16 %v433
    %v1170 = vunpack.c.l.s8.bf16 %v434
    %v1171 = vunpack.c.h.s8.bf16 %v433
    %v1172 = vunpack.c.h.s8.bf16 %v434
    %v1173 = vunpack.c.l.s8.bf16 %v435
    %v1174 = vunpack.c.l.s8.bf16 %v436
    %v1175 = vunpack.c.h.s8.bf16 %v435
    %v1176 = vunpack.c.h.s8.bf16 %v436
    %v1177 = vunpack.c.l.s8.bf16 %v437
    %v1178 = vunpack.c.l.s8.bf16 %v438
    %v1179 = vunpack.c.h.s8.bf16 %v437
    %v1180 = vunpack.c.h.s8.bf16 %v438
    %v1181 = vunpack.c.l.s8.bf16 %v439
    %v1182 = vunpack.c.l.s8.bf16 %v440
    %v1183 = vunpack.c.h.s8.bf16 %v439
    %v1184 = vunpack.c.h.s8.bf16 %v440
    %v1185 = vunpack.c.l.s8.bf16 %v441
    %v1186 = vunpack.c.l.s8.bf16 %v442
    %v1187 = vunpack.c.h.s8.bf16 %v441
    %v1188 = vunpack.c.h.s8.bf16 %v442
    %v1189 = vunpack.c.l.s8.bf16 %v443
    %v1190 = vunpack.c.l.s8.bf16 %v444
    %v1191 = vunpack.c.h.s8.bf16 %v443
    %v1192 = vunpack.c.h.s8.bf16 %v444
    %v1193 = vunpack.c.l.s8.bf16 %v445
    %v1194 = vunpack.c.l.s8.bf16 %v446
    %v1195 = vunpack.c.h.s8.bf16 %v445
    %v1196 = vunpack.c.h.s8.bf16 %v446
    %v1197 = vunpack.c.l.s8.bf16 %v447
    %v1198 = vunpack.c.l.s8.bf16 %v448
    %v1199 = vunpack.c.h.s8.bf16 %v447
    %v1200 = vunpack.c.h.s8.bf16 %v448
    %v1201 = vunpack.c.l.s8.bf16 %v449
    %v1202 = vunpack.c.l.s8.bf16 %v450
    %v1203 = vunpack.c.h.s8.bf16 %v449
    %v1204 = vunpack.c.h.s8.bf16 %v450
    %v1205 = vunpack.c.l.s8.bf16 %v451
    %v1206 = vunpack.c.l.s8.bf16 %v452
    %v1207 = vunpack.c.h.s8.bf16 %v451
    %v1208 = vunpack.c.h.s8.bf16 %v452
    %v1209 = vunpack.c.l.s8.bf16 %v453
    %v1210 = vunpack.c.l.s8.bf16 %v454
    %v1211 = vunpack.c.h.s8.bf16 %v453
    %v1212 = vunpack.c.h.s8.bf16 %v454
    %v1213 = vunpack.c.l.s8.bf16 %v455
    %v1214 = vunpack.c.l.s8.bf16 %v456
    %v1215 = vunpack.c.h.s8.bf16 %v455
    %v1216 = vunpack.c.h.s8.bf16 %v456
    %v1217 = vunpack.c.l.s8.bf16 %v457
    %v1218 = vunpack.c.l.s8.bf16 %v458
    %v1219 = vunpack.c.h.s8.bf16 %v457
    %v1220 = vunpack.c.h.s8.bf16 %v458
    %v1221 = vunpack.c.l.s8.bf16 %v459
    %v1222 = vunpack.c.l.s8.bf16 %v460
    %v1223 = vunpack.c.h.s8.bf16 %v459
    %v1224 = vunpack.c.h.s8.bf16 %v460
    %v1225 = vunpack.c.l.s8.bf16 %v461
    %v1226 = vunpack.c.l.s8.bf16 %v462
    %v1227 = vunpack.c.h.s8.bf16 %v461
    %v1228 = vunpack.c.h.s8.bf16 %v462
    %v1229 = vunpack.c.l.s8.bf16 %v463
    %v1230 = vunpack.c.l.s8.bf16 %v464
    %v1231 = vunpack.c.h.s8.bf16 %v463
    %v1232 = vunpack.c.h.s8.bf16 %v464
    %v1233 = vunpack.c.l.s8.bf16 %v465
    %v1234 = vunpack.c.l.s8.bf16 %v466
    %v1235 = vunpack.c.h.s8.bf16 %v465
    %v1236 = vunpack.c.h.s8.bf16 %v466
    %v1237 = vunpack.c.l.s8.bf16 %v467
    %v1238 = vunpack.c.l.s8.bf16 %v468
    %v1239 = vunpack.c.h.s8.bf16 %v467
    %v1240 = vunpack.c.h.s8.bf16 %v468
    %v1241 = vunpack.c.l.s8.bf16 %v469
    %v1242 = vunpack.c.l.s8.bf16 %v470
    %v1243 = vunpack.c.h.s8.bf16 %v469
    %v1244 = vunpack.c.h.s8.bf16 %v470
    %v1245 = vunpack.c.l.s8.bf16 %v471
    %v1246 = vunpack.c.l.s8.bf16 %v472
    %v1247 = vunpack.c.h.s8.bf16 %v471
    %v1248 = vunpack.c.h.s8.bf16 %v472
    %v1249 = vunpack.c.l.s8.bf16 %v473
    %v1250 = vunpack.c.l.s8.bf16 %v474
    %v1251 = vunpack.c.h.s8.bf16 %v473
    %v1252 = vunpack.c.h.s8.bf16 %v474
    %v1253 = vunpack.c.l.s8.bf16 %v475
    %v1254 = vunpack.c.l.s8.bf16 %v476
    %v1255 = vunpack.c.h.s8.bf16 %v475
    %v1256 = vunpack.c.h.s8.bf16 %v476
    %v1257 = vunpack.c.l.s8.bf16 %v477
    %v1258 = vunpack.c.l.s8.bf16 %v478
    %v1259 = vunpack.c.h.s8.bf16 %v477
    %v1260 = vunpack.c.h.s8.bf16 %v478
    %v1261 = vunpack.c.l.s8.bf16 %v479
    %v1262 = vunpack.c.l.s8.bf16 %v480
    %v1263 = vunpack.c.h.s8.bf16 %v479
    %v1264 = vunpack.c.h.s8.bf16 %v480
    %v1265 = vunpack.c.l.s8.bf16 %v481
    %v1266 = vunpack.c.l.s8.bf16 %v482
    %v1267 = vunpack.c.h.s8.bf16 %v481
    %v1268 = vunpack.c.h.s8.bf16 %v482
    %v1269 = vunpack.c.l.s8.bf16 %v483
    %v1270 = vunpack.c.l.s8.bf16 %v484
    %v1271 = vunpack.c.h.s8.bf16 %v483
    %v1272 = vunpack.c.h.s8.bf16 %v484
    %v1273 = vunpack.c.l.s8.bf16 %v485
    %v1274 = vunpack.c.l.s8.bf16 %v486
    %v1275 = vunpack.c.h.s8.bf16 %v485
    %v1276 = vunpack.c.h.s8.bf16 %v486
    %v1277 = vunpack.c.l.s8.bf16 %v487
    %v1278 = vunpack.c.l.s8.bf16 %v488
    %v1279 = vunpack.c.h.s8.bf16 %v487
    %v1280 = vunpack.c.h.s8.bf16 %v488
    %v1281 = vunpack.c.l.s8.bf16 %v489
    %v1282 = vunpack.c.l.s8.bf16 %v490
    %v1283 = vunpack.c.h.s8.bf16 %v489
    %v1284 = vunpack.c.h.s8.bf16 %v490
    %v1285 = vunpack.c.l.s8.bf16 %v491
    %v1286 = vunpack.c.l.s8.bf16 %v492
    %v1287 = vunpack.c.h.s8.bf16 %v491
    %v1288 = vunpack.c.h.s8.bf16 %v492
    %v1289 = vunpack.c.l.s8.bf16 %v493
    %v1290 = vunpack.c.l.s8.bf16 %v494
    %v1291 = vunpack.c.h.s8.bf16 %v493
    %v1292 = vunpack.c.h.s8.bf16 %v494
    %v1293 = vunpack.c.l.s8.bf16 %v495
    %v1294 = vunpack.c.l.s8.bf16 %v496
    %v1295 = vunpack.c.h.s8.bf16 %v495
    %v1296 = vunpack.c.h.s8.bf16 %v496
    %v1297 = vunpack.c.l.s8.bf16 %v497
    %v1298 = vunpack.c.l.s8.bf16 %v498
    %v1299 = vunpack.c.h.s8.bf16 %v497
    %v1300 = vunpack.c.h.s8.bf16 %v498
    %v1301 = vunpack.c.l.s8.bf16 %v499
    %v1302 = vunpack.c.l.s8.bf16 %v500
    %v1303 = vunpack.c.h.s8.bf16 %v499
    %v1304 = vunpack.c.h.s8.bf16 %v500
    %v1305 = vunpack.c.l.s8.bf16 %v501
    %v1306 = vunpack.c.l.s8.bf16 %v502
    %v1307 = vunpack.c.h.s8.bf16 %v501
    %v1308 = vunpack.c.h.s8.bf16 %v502
    %v1309 = vunpack.c.l.s8.bf16 %v503
    %v1310 = vunpack.c.l.s8.bf16 %v504
    %v1311 = vunpack.c.h.s8.bf16 %v503
    %v1312 = vunpack.c.h.s8.bf16 %v504
    %v1313 = vunpack.c.l.s8.bf16 %v505
    %v1314 = vunpack.c.l.s8.bf16 %v506
    %v1315 = vunpack.c.h.s8.bf16 %v505
    %v1316 = vunpack.c.h.s8.bf16 %v506
    %v1317 = vunpack.c.l.s8.bf16 %v507
    %v1318 = vunpack.c.l.s8.bf16 %v508
    %v1319 = vunpack.c.h.s8.bf16 %v507
    %v1320 = vunpack.c.h.s8.bf16 %v508
    %v1321 = vunpack.c.l.s8.bf16 %v509
    %v1322 = vunpack.c.l.s8.bf16 %v510
    %v1323 = vunpack.c.h.s8.bf16 %v509
    %v1324 = vunpack.c.h.s8.bf16 %v510
    %v1325 = vunpack.c.l.s8.bf16 %v511
    %v1326 = vunpack.c.l.s8.bf16 %v512
    %v1327 = vunpack.c.h.s8.bf16 %v511
    %v1328 = vunpack.c.h.s8.bf16 %v512
    %v1329 = vunpack.c.l.s8.bf16 %v513
    %v1330 = vunpack.c.l.s8.bf16 %v514
    %v1331 = vunpack.c.h.s8.bf16 %v513
    %v1332 = vunpack.c.h.s8.bf16 %v514
    %v1333 = vunpack.c.l.s8.bf16 %v515
    %v1334 = vunpack.c.l.s8.bf16 %v516
    %v1335 = vunpack.c.h.s8.bf16 %v515
    %v1336 = vunpack.c.h.s8.bf16 %v516
    %v1337 = vunpack.c.l.s8.bf16 %v517
    %v1338 = vunpack.c.l.s8.bf16 %v518
    %v1339 = vunpack.c.h.s8.bf16 %v517
    %v1340 = vunpack.c.h.s8.bf16 %v518
    %v1341 = vunpack.c.l.s8.bf16 %v519
    %v1342 = vunpack.c.l.s8.bf16 %v520
    %v1343 = vunpack.c.h.s8.bf16 %v519
    %v1344 = vunpack.c.h.s8.bf16 %v520
    %v1345 = vunpack.c.l.s8.bf16 %v521
    %v1346 = vunpack.c.l.s8.bf16 %v522
    %v1347 = vunpack.c.h.s8.bf16 %v521
    %v1348 = vunpack.c.h.s8.bf16 %v522
    %v1349 = vunpack.c.l.s8.bf16 %v523
    %v1350 = vunpack.c.l.s8.bf16 %v524
    %v1351 = vunpack.c.h.s8.bf16 %v523
    %v1352 = vunpack.c.h.s8.bf16 %v524
    %v1353 = vunpack.c.l.s8.bf16 %v525
    %v1354 = vunpack.c.l.s8.bf16 %v526
    %v1355 = vunpack.c.h.s8.bf16 %v525
    %v1356 = vunpack.c.h.s8.bf16 %v526
    %v1357 = vunpack.c.l.s8.bf16 %v527
    %v1358 = vunpack.c.l.s8.bf16 %v528
    %v1359 = vunpack.c.h.s8.bf16 %v527
    %v1360 = vunpack.c.h.s8.bf16 %v528
    %v1361 = vunpack.c.l.s8.bf16 %v529
    %v1362 = vunpack.c.l.s8.bf16 %v530
    %v1363 = vunpack.c.h.s8.bf16 %v529
    %v1364 = vunpack.c.h.s8.bf16 %v530
    %v1365 = vunpack.c.l.s8.bf16 %v531
    %v1366 = vunpack.c.l.s8.bf16 %v532
    %v1367 = vunpack.c.h.s8.bf16 %v531
    %v1368 = vunpack.c.h.s8.bf16 %v532
    %v1369 = vunpack.c.l.s8.bf16 %v533
    %v1370 = vunpack.c.l.s8.bf16 %v534
    %v1371 = vunpack.c.h.s8.bf16 %v533
    %v1372 = vunpack.c.h.s8.bf16 %v534
    %v1373 = vunpack.c.l.s8.bf16 %v535
    %v1374 = vunpack.c.l.s8.bf16 %v536
    %v1375 = vunpack.c.h.s8.bf16 %v535
    %v1376 = vunpack.c.h.s8.bf16 %v536
    %v1377 = vunpack.c.l.s8.bf16 %v537
    %v1378 = vunpack.c.l.s8.bf16 %v538
    %v1379 = vunpack.c.h.s8.bf16 %v537
    %v1380 = vunpack.c.h.s8.bf16 %v538
    %v1381 = vunpack.c.l.s8.bf16 %v539
    %v1382 = vunpack.c.l.s8.bf16 %v540
    %v1383 = vunpack.c.h.s8.bf16 %v539
    %v1384 = vunpack.c.h.s8.bf16 %v540
    %v1385 = vunpack.c.l.s8.bf16 %v541
    %v1386 = vunpack.c.l.s8.bf16 %v542
    %v1387 = vunpack.c.h.s8.bf16 %v541
    %v1388 = vunpack.c.h.s8.bf16 %v542
    %v1389 = vunpack.c.l.s8.bf16 %v543
    %v1390 = vunpack.c.l.s8.bf16 %v544
    %v1391 = vunpack.c.h.s8.bf16 %v543
    %v1392 = vunpack.c.h.s8.bf16 %v544
    %v1393 = vunpack.c.l.s8.bf16 %v545
    %v1394 = vunpack.c.l.s8.bf16 %v546
    %v1395 = vunpack.c.h.s8.bf16 %v545
    %v1396 = vunpack.c.h.s8.bf16 %v546
    %v1397 = vunpack.c.l.s8.bf16 %v547
    %v1398 = vunpack.c.l.s8.bf16 %v548
    %v1399 = vunpack.c.h.s8.bf16 %v547
    %v1400 = vunpack.c.h.s8.bf16 %v548
    %v1401 = vunpack.c.l.s8.bf16 %v549
    %v1402 = vunpack.c.l.s8.bf16 %v550
    %v1403 = vunpack.c.h.s8.bf16 %v549
    %v1404 = vunpack.c.h.s8.bf16 %v550
    %v1405 = vunpack.c.l.s8.bf16 %v551
    %v1406 = vunpack.c.l.s8.bf16 %v552
    %v1407 = vunpack.c.h.s8.bf16 %v551
    %v1408 = vunpack.c.h.s8.bf16 %v552
    %v1409 = vunpack.c.l.s8.bf16 %v553
    %v1410 = vunpack.c.l.s8.bf16 %v554
    %v1411 = vunpack.c.h.s8.bf16 %v553
    %v1412 = vunpack.c.h.s8.bf16 %v554
    %v1413 = vunpack.c.l.s8.bf16 %v555
    %v1414 = vunpack.c.l.s8.bf16 %v556
    %v1415 = vunpack.c.h.s8.bf16 %v555
    %v1416 = vunpack.c.h.s8.bf16 %v556
    %v1417 = vunpack.c.l.s8.bf16 %v557
    %v1418 = vunpack.c.l.s8.bf16 %v558
    %v1419 = vunpack.c.h.s8.bf16 %v557
    %v1420 = vunpack.c.h.s8.bf16 %v558
    %v1421 = vunpack.c.l.s8.bf16 %v559
    %v1422 = vunpack.c.l.s8.bf16 %v560
    %v1423 = vunpack.c.h.s8.bf16 %v559
    %v1424 = vunpack.c.h.s8.bf16 %v560
    %v1425 = vunpack.c.l.s8.bf16 %v561
    %v1426 = vunpack.c.l.s8.bf16 %v562
    %v1427 = vunpack.c.h.s8.bf16 %v561
    %v1428 = vunpack.c.h.s8.bf16 %v562
    %v1429 = vunpack.c.l.s8.bf16 %v563
    %v1430 = vunpack.c.l.s8.bf16 %v564
    %v1431 = vunpack.c.h.s8.bf16 %v563
    %v1432 = vunpack.c.h.s8.bf16 %v564
    %v1433 = vunpack.c.l.s8.bf16 %v565
    %v1434 = vunpack.c.l.s8.bf16 %v566
    %v1435 = vunpack.c.h.s8.bf16 %v565
    %v1436 = vunpack.c.h.s8.bf16 %v566
    %v1437 = vunpack.c.l.s8.bf16 %v567
    %v1438 = vunpack.c.l.s8.bf16 %v568
    %v1439 = vunpack.c.h.s8.bf16 %v567
    %v1440 = vunpack.c.h.s8.bf16 %v568
    %v1441 = vunpack.c.l.s8.bf16 %v569
    %v1442 = vunpack.c.l.s8.bf16 %v570
    %v1443 = vunpack.c.h.s8.bf16 %v569
    %v1444 = vunpack.c.h.s8.bf16 %v570
    %v1445 = vunpack.c.l.s8.bf16 %v571
    %v1446 = vunpack.c.l.s8.bf16 %v572
    %v1447 = vunpack.c.h.s8.bf16 %v571
    %v1448 = vunpack.c.h.s8.bf16 %v572
    %v1449 = vunpack.c.l.s8.bf16 %v573
    %v1450 = vunpack.c.l.s8.bf16 %v574
    %v1451 = vunpack.c.h.s8.bf16 %v573
    %v1452 = vunpack.c.h.s8.bf16 %v574
    %v1453 = vunpack.c.l.s8.bf16 %v575
    %v1454 = vunpack.c.l.s8.bf16 %v576
    %v1455 = vunpack.c.h.s8.bf16 %v575
    %v1456 = vunpack.c.h.s8.bf16 %v576
    %v1457 = vunpack.c.l.s8.bf16 %v577
    %v1458 = vunpack.c.l.s8.bf16 %v578
    %v1459 = vunpack.c.h.s8.bf16 %v577
    %v1460 = vunpack.c.h.s8.bf16 %v578
    %v1461 = vunpack.c.l.s8.bf16 %v579
    %v1462 = vunpack.c.l.s8.bf16 %v580
    %v1463 = vunpack.c.h.s8.bf16 %v579
    %v1464 = vunpack.c.h.s8.bf16 %v580
    %v1465 = vunpack.c.l.s8.bf16 %v581
    %v1466 = vunpack.c.l.s8.bf16 %v582
    %v1467 = vunpack.c.h.s8.bf16 %v581
    %v1468 = vunpack.c.h.s8.bf16 %v582
    %v1469 = vunpack.c.l.s8.bf16 %v583
    %v1470 = vunpack.c.l.s8.bf16 %v584
    %v1471 = vunpack.c.h.s8.bf16 %v583
    %v1472 = vunpack.c.h.s8.bf16 %v584
    %v1473 = vunpack.c.l.s8.bf16 %v585
    %v1474 = vunpack.c.l.s8.bf16 %v586
    %v1475 = vunpack.c.h.s8.bf16 %v585
    %v1476 = vunpack.c.h.s8.bf16 %v586
    %v1477 = vunpack.c.l.s8.bf16 %v587
    %v1478 = vunpack.c.l.s8.bf16 %v588
    %v1479 = vunpack.c.h.s8.bf16 %v587
    %v1480 = vunpack.c.h.s8.bf16 %v588
    %v1481 = vunpack.c.l.s8.bf16 %v589
    %v1482 = vunpack.c.l.s8.bf16 %v590
    %v1483 = vunpack.c.h.s8.bf16 %v589
    %v1484 = vunpack.c.h.s8.bf16 %v590
    %v1485 = vunpack.c.l.s8.bf16 %v591
    %v1486 = vunpack.c.l.s8.bf16 %v592
    %v1487 = vunpack.c.h.s8.bf16 %v591
    %v1488 = vunpack.c.h.s8.bf16 %v592
    %v1517 = vunpack.c.l.b16 %v117
    %v1518 = vunpack.c.h.b16 %v117
    %v1519 = vunpack.c.l.b16 %v118
    %v1520 = vunpack.c.h.b16 %v118
    %v1521 = vunpack.c.l.b16 %v119
    %v1522 = vunpack.c.h.b16 %v119
    %v1523 = vunpack.c.l.b16 %v120
    %v1524 = vunpack.c.h.b16 %v120
    %v1525 = vunpack.c.l.b16 %v121
    %v1526 = vunpack.c.h.b16 %v121
    %v1527 = vunpack.c.l.b16 %v122
    %v1528 = vunpack.c.h.b16 %v122
    %v1529 = vunpack.c.l.b16 %v123
    %v1530 = vunpack.c.h.b16 %v123
    %v1531 = vunpack.c.l.b16 %v124
    %v1532 = vunpack.c.h.b16 %v124
    %v1533 = vunpack.c.l.b16 %v125
    %v1534 = vunpack.c.h.b16 %v125
    %v1535 = vunpack.c.l.b16 %v126
    %v1536 = vunpack.c.h.b16 %v126
    %v1537 = vunpack.c.l.b16 %v127
    %v1538 = vunpack.c.h.b16 %v127
    %v1539 = vunpack.c.l.b16 %v128
    %v1540 = vunpack.c.h.b16 %v128
    %v1541 = vunpack.c.l.b16 %v129
    %v1542 = vunpack.c.h.b16 %v129
    %v1543 = vunpack.c.l.b16 %v130
    %v1544 = vunpack.c.h.b16 %v130
    %v1545 = vunpack.c.l.b16 %v131
    %v1546 = vunpack.c.h.b16 %v131
    %v1547 = vunpack.c.l.b16 %v132
    %v1548 = vunpack.c.h.b16 %v132
    %v1549 = vunpack.c.l.b16 %v133
    %v1550 = vunpack.c.h.b16 %v133
    %v1551 = vunpack.c.l.b16 %v134
    %v1552 = vunpack.c.h.b16 %v134
    %v1553 = vunpack.c.l.b16 %v135
    %v1554 = vunpack.c.h.b16 %v135
    %v1555 = vunpack.c.l.b16 %v136
    %v1556 = vunpack.c.h.b16 %v136
    %v1557 = vunpack.c.l.b16 %v137
    %v1558 = vunpack.c.h.b16 %v137
    %v1559 = vunpack.c.l.b16 %v138
    %v1560 = vunpack.c.h.b16 %v138
    %v1561 = vunpack.c.l.b16 %v139
    %v1562 = vunpack.c.h.b16 %v139
    %v1563 = vunpack.c.l.b16 %v140
    %v1564 = vunpack.c.h.b16 %v140
    %v1565 = vunpack.c.l.b16 %v141
    %v1566 = vunpack.c.h.b16 %v141
    %v1567 = vunpack.c.l.b16 %v142
    %v1568 = vunpack.c.h.b16 %v142
    %v1569 = vunpack.c.l.b16 %v143
    %v1570 = vunpack.c.h.b16 %v143
    %v1571 = vunpack.c.l.b16 %v144
    %v1572 = vunpack.c.h.b16 %v144
    %v1573 = vpack.c.b16 %v1517, %v1517
    %v1574 = vpack.c.b16 %v1518, %v1518
    %v1575 = vpack.c.b16 %v1519, %v1519
    %v1576 = vpack.c.b16 %v1520, %v1520
    %v1577 = vpack.c.b16 %v1521, %v1521
    %v1578 = vpack.c.b16 %v1522, %v1522
    %v1579 = vpack.c.b16 %v1523, %v1523
    %v1580 = vpack.c.b16 %v1524, %v1524
    %v1581 = vpack.c.b16 %v1525, %v1525
    %v1582 = vpack.c.b16 %v1526, %v1526
    %v1583 = vpack.c.b16 %v1527, %v1527
    %v1584 = vpack.c.b16 %v1528, %v1528
    %v1585 = vpack.c.b16 %v1529, %v1529
    %v1586 = vpack.c.b16 %v1530, %v1530
    %v1587 = vpack.c.b16 %v1531, %v1531
    %v1588 = vpack.c.b16 %v1532, %v1532
    %v1589 = vpack.c.b16 %v1533, %v1533
    %v1590 = vpack.c.b16 %v1534, %v1534
    %v1591 = vpack.c.b16 %v1535, %v1535
    %v1592 = vpack.c.b16 %v1536, %v1536
    %v1593 = vpack.c.b16 %v1537, %v1537
    %v1594 = vpack.c.b16 %v1538, %v1538
    %v1595 = vpack.c.b16 %v1539, %v1539
    %v1596 = vpack.c.b16 %v1540, %v1540
    %v1597 = vpack.c.b16 %v1541, %v1541
    %v1598 = vpack.c.b16 %v1542, %v1542
    %v1599 = vpack.c.b16 %v1543, %v1543
    %v1600 = vpack.c.b16 %v1544, %v1544
    %v1601 = vpack.c.b16 %v1545, %v1545
    %v1602 = vpack.c.b16 %v1546, %v1546
    %v1603 = vpack.c.b16 %v1547, %v1547
    %v1604 = vpack.c.b16 %v1548, %v1548
    %v1605 = vpack.c.b16 %v1549, %v1549
    %v1606 = vpack.c.b16 %v1550, %v1550
    %v1607 = vpack.c.b16 %v1551, %v1551
    %v1608 = vpack.c.b16 %v1552, %v1552
    %v1609 = vpack.c.b16 %v1553, %v1553
    %v1610 = vpack.c.b16 %v1554, %v1554
    %v1611 = vpack.c.b16 %v1555, %v1555
    %v1612 = vpack.c.b16 %v1556, %v1556
    %v1613 = vpack.c.b16 %v1557, %v1557
    %v1614 = vpack.c.b16 %v1558, %v1558
    %v1615 = vpack.c.b16 %v1559, %v1559
    %v1616 = vpack.c.b16 %v1560, %v1560
    %v1617 = vpack.c.b16 %v1561, %v1561
    %v1618 = vpack.c.b16 %v1562, %v1562
    %v1619 = vpack.c.b16 %v1563, %v1563
    %v1620 = vpack.c.b16 %v1564, %v1564
    %v1621 = vpack.c.b16 %v1565, %v1565
    %v1622 = vpack.c.b16 %v1566, %v1566
    %v1623 = vpack.c.b16 %v1567, %v1567
    %v1624 = vpack.c.b16 %v1568, %v1568
    %v1625 = vpack.c.b16 %v1569, %v1569
    %v1626 = vpack.c.b16 %v1570, %v1570
    %v1627 = vpack.c.b16 %v1571, %v1571
    %v1628 = vpack.c.b16 %v1572, %v1572
    %1685 = vmatprep.subr.bf16.mxu0 %v608
    %1686 = vmatpush1.bf16.msra.mxu0 %v607
    %1687 = vmatprep.subr.bf16.mxu0 %v606
    %1688 = vmatpush1.bf16.msra.mxu0 %v605
    %1689 = vmatprep.subr.bf16.mxu0 %v604
    %1690 = vmatpush1.bf16.msra.mxu0 %v603
    %1691 = vmatprep.subr.bf16.mxu0 %v602
    %1692 = vmatpush1.bf16.msra.mxu0 %v601
    %1693 = vmatprep.subr.bf16.mxu0 %v600
    %1694 = vmatpush1.bf16.msra.mxu0 %v599
    %1695 = vmatprep.subr.bf16.mxu0 %v598
    %1696 = vmatpush1.bf16.msra.mxu0 %v597
    %1697 = vmatprep.subr.bf16.mxu0 %v596
    %1698 = vmatpush1.bf16.msra.mxu0 %v595
    %1699 = vmatprep.subr.bf16.mxu0 %v594
    %1700 = vmatpush1.bf16.msra.mxu0 %v593
    %1701 = vmatprep.subr.bf16.mxu0 %v624
    %1702 = vmatpush2.bf16.msra.mxu0 %v623
    %1703 = vmatprep.subr.bf16.mxu0 %v622
    %1704 = vmatpush2.bf16.msra.mxu0 %v621
    %1705 = vmatprep.subr.bf16.mxu0 %v620
    %1706 = vmatpush2.bf16.msra.mxu0 %v619
    %1707 = vmatprep.subr.bf16.mxu0 %v618
    %1708 = vmatpush2.bf16.msra.mxu0 %v617
    %1709 = vmatprep.subr.bf16.mxu0 %v616
    %1710 = vmatpush2.bf16.msra.mxu0 %v615
    %1711 = vmatprep.subr.bf16.mxu0 %v614
    %1712 = vmatpush2.bf16.msra.mxu0 %v613
    %1713 = vmatprep.subr.bf16.mxu0 %v612
    %1714 = vmatpush2.bf16.msra.mxu0 %v611
    %1715 = vmatprep.subr.bf16.mxu0 %v610
    %1716 = vmatpush2.bf16.msra.mxu0 %v609
    %1717 = vmatprep.mubr.bf16.mxu0 %v1574
    %1718 = vmatmul.mubr.bf16.gmra.mxu0 %v1573
    %v1719 = vpop.f32.mrf.mxu0
    %v1720 = vadd.f32 0.0, %v1719
    %v1721 = vpop.f32.mrf.mxu0
    %v1722 = vadd.f32 0.0, %v1721
    %v1723 = vpop.f32.mrf.mxu0
    %v1724 = vpop.f32.mrf.mxu0
    %1725 = vdwg.mxu0
    %1726 = vmatprep.subr.bf16.mxu0 %v640
    %1727 = vmatpush1.bf16.msra.mxu0 %v639
    %1728 = vmatprep.subr.bf16.mxu0 %v638
    %1729 = vmatpush1.bf16.msra.mxu0 %v637
    %1730 = vmatprep.subr.bf16.mxu0 %v636
    %1731 = vmatpush1.bf16.msra.mxu0 %v635
    %1732 = vmatprep.subr.bf16.mxu0 %v634
    %1733 = vmatpush1.bf16.msra.mxu0 %v633
    %1734 = vmatprep.subr.bf16.mxu0 %v632
    %1735 = vmatpush1.bf16.msra.mxu0 %v631
    %1736 = vmatprep.subr.bf16.mxu0 %v630
    %1737 = vmatpush1.bf16.msra.mxu0 %v629
    %1738 = vmatprep.subr.bf16.mxu0 %v628
    %1739 = vmatpush1.bf16.msra.mxu0 %v627
    %1740 = vmatprep.subr.bf16.mxu0 %v626
    %1741 = vmatpush1.bf16.msra.mxu0 %v625
    %1742 = vmatprep.subr.bf16.mxu0 %v656
    %1743 = vmatpush2.bf16.msra.mxu0 %v655
    %1744 = vmatprep.subr.bf16.mxu0 %v654
    %1745 = vmatpush2.bf16.msra.mxu0 %v653
    %1746 = vmatprep.subr.bf16.mxu0 %v652
    %1747 = vmatpush2.bf16.msra.mxu0 %v651
    %1748 = vmatprep.subr.bf16.mxu0 %v650
    %1749 = vmatpush2.bf16.msra.mxu0 %v649
    %1750 = vmatprep.subr.bf16.mxu0 %v648
    %1751 = vmatpush2.bf16.msra.mxu0 %v647
    %1752 = vmatprep.subr.bf16.mxu0 %v646
    %1753 = vmatpush2.bf16.msra.mxu0 %v645
    %1754 = vmatprep.subr.bf16.mxu0 %v644
    %1755 = vmatpush2.bf16.msra.mxu0 %v643
    %1756 = vmatprep.subr.bf16.mxu0 %v642
    %1757 = vmatpush2.bf16.msra.mxu0 %v641
    %1758 = vmatprep.mubr.bf16.mxu0 %v1576
    %1759 = vmatmul.mubr.bf16.gmra.mxu0 %v1575
    %v1760 = vpop.f32.mrf.mxu0
    %v1761 = vadd.f32 %v1720, %v1760
    %v1762 = vpop.f32.mrf.mxu0
    %v1763 = vadd.f32 %v1722, %v1762
    %v1764 = vpop.f32.mrf.mxu0
    %v1765 = vpop.f32.mrf.mxu0
    %1766 = vdwg.mxu0
    %1767 = vmatprep.subr.bf16.mxu0 %v672
    %1768 = vmatpush1.bf16.msra.mxu0 %v671
    %1769 = vmatprep.subr.bf16.mxu0 %v670
    %1770 = vmatpush1.bf16.msra.mxu0 %v669
    %1771 = vmatprep.subr.bf16.mxu0 %v668
    %1772 = vmatpush1.bf16.msra.mxu0 %v667
    %1773 = vmatprep.subr.bf16.mxu0 %v666
    %1774 = vmatpush1.bf16.msra.mxu0 %v665
    %1775 = vmatprep.subr.bf16.mxu0 %v664
    %1776 = vmatpush1.bf16.msra.mxu0 %v663
    %1777 = vmatprep.subr.bf16.mxu0 %v662
    %1778 = vmatpush1.bf16.msra.mxu0 %v661
    %1779 = vmatprep.subr.bf16.mxu0 %v660
    %1780 = vmatpush1.bf16.msra.mxu0 %v659
    %1781 = vmatprep.subr.bf16.mxu0 %v658
    %1782 = vmatpush1.bf16.msra.mxu0 %v657
    %1783 = vmatprep.subr.bf16.mxu0 %v688
    %1784 = vmatpush2.bf16.msra.mxu0 %v687
    %1785 = vmatprep.subr.bf16.mxu0 %v686
    %1786 = vmatpush2.bf16.msra.mxu0 %v685
    %1787 = vmatprep.subr.bf16.mxu0 %v684
    %1788 = vmatpush2.bf16.msra.mxu0 %v683
    %1789 = vmatprep.subr.bf16.mxu0 %v682
    %1790 = vmatpush2.bf16.msra.mxu0 %v681
    %1791 = vmatprep.subr.bf16.mxu0 %v680
    %1792 = vmatpush2.bf16.msra.mxu0 %v679
    %1793 = vmatprep.subr.bf16.mxu0 %v678
    %1794 = vmatpush2.bf16.msra.mxu0 %v677
    %1795 = vmatprep.subr.bf16.mxu0 %v676
    %1796 = vmatpush2.bf16.msra.mxu0 %v675
    %1797 = vmatprep.subr.bf16.mxu0 %v674
    %1798 = vmatpush2.bf16.msra.mxu0 %v673
    %1799 = vmatprep.mubr.bf16.mxu0 %v1578
    %1800 = vmatmul.mubr.bf16.gmra.mxu0 %v1577
    %v1801 = vpop.f32.mrf.mxu0
    %v1802 = vadd.f32 %v1761, %v1801
    %v1803 = vpop.f32.mrf.mxu0
    %v1804 = vadd.f32 %v1763, %v1803
    %v1805 = vpop.f32.mrf.mxu0
    %v1806 = vpop.f32.mrf.mxu0
    %1807 = vdwg.mxu0
    %1808 = vmatprep.subr.bf16.mxu0 %v704
    %1809 = vmatpush1.bf16.msra.mxu0 %v703
    %1810 = vmatprep.subr.bf16.mxu0 %v702
    %1811 = vmatpush1.bf16.msra.mxu0 %v701
    %1812 = vmatprep.subr.bf16.mxu0 %v700
    %1813 = vmatpush1.bf16.msra.mxu0 %v699
    %1814 = vmatprep.subr.bf16.mxu0 %v698
    %1815 = vmatpush1.bf16.msra.mxu0 %v697
    %1816 = vmatprep.subr.bf16.mxu0 %v696
    %1817 = vmatpush1.bf16.msra.mxu0 %v695
    %1818 = vmatprep.subr.bf16.mxu0 %v694
    %1819 = vmatpush1.bf16.msra.mxu0 %v693
    %1820 = vmatprep.subr.bf16.mxu0 %v692
    %1821 = vmatpush1.bf16.msra.mxu0 %v691
    %1822 = vmatprep.subr.bf16.mxu0 %v690
    %1823 = vmatpush1.bf16.msra.mxu0 %v689
    %1824 = vmatprep.subr.bf16.mxu0 %v720
    %1825 = vmatpush2.bf16.msra.mxu0 %v719
    %1826 = vmatprep.subr.bf16.mxu0 %v718
    %1827 = vmatpush2.bf16.msra.mxu0 %v717
    %1828 = vmatprep.subr.bf16.mxu0 %v716
    %1829 = vmatpush2.bf16.msra.mxu0 %v715
    %1830 = vmatprep.subr.bf16.mxu0 %v714
    %1831 = vmatpush2.bf16.msra.mxu0 %v713
    %1832 = vmatprep.subr.bf16.mxu0 %v712
    %1833 = vmatpush2.bf16.msra.mxu0 %v711
    %1834 = vmatprep.subr.bf16.mxu0 %v710
    %1835 = vmatpush2.bf16.msra.mxu0 %v709
    %1836 = vmatprep.subr.bf16.mxu0 %v708
    %1837 = vmatpush2.bf16.msra.mxu0 %v707
    %1838 = vmatprep.subr.bf16.mxu0 %v706
    %1839 = vmatpush2.bf16.msra.mxu0 %v705
    %1840 = vmatprep.mubr.bf16.mxu0 %v1580
    %1841 = vmatmul.mubr.bf16.gmra.mxu0 %v1579
    %v1842 = vpop.f32.mrf.mxu0
    %v1843 = vadd.f32 %v1802, %v1842
    %v1844 = vpop.f32.mrf.mxu0
    %v1845 = vadd.f32 %v1804, %v1844
    %v1846 = vpop.f32.mrf.mxu0
    %v1847 = vpop.f32.mrf.mxu0
    %1848 = vdwg.mxu0
    %1849 = vmatprep.subr.bf16.mxu0 %v736
    %1850 = vmatpush1.bf16.msra.mxu0 %v735
    %1851 = vmatprep.subr.bf16.mxu0 %v734
    %1852 = vmatpush1.bf16.msra.mxu0 %v733
    %1853 = vmatprep.subr.bf16.mxu0 %v732
    %1854 = vmatpush1.bf16.msra.mxu0 %v731
    %1855 = vmatprep.subr.bf16.mxu0 %v730
    %1856 = vmatpush1.bf16.msra.mxu0 %v729
    %1857 = vmatprep.subr.bf16.mxu0 %v728
    %1858 = vmatpush1.bf16.msra.mxu0 %v727
    %1859 = vmatprep.subr.bf16.mxu0 %v726
    %1860 = vmatpush1.bf16.msra.mxu0 %v725
    %1861 = vmatprep.subr.bf16.mxu0 %v724
    %1862 = vmatpush1.bf16.msra.mxu0 %v723
    %1863 = vmatprep.subr.bf16.mxu0 %v722
    %1864 = vmatpush1.bf16.msra.mxu0 %v721
    %1865 = vmatprep.subr.bf16.mxu0 %v752
    %1866 = vmatpush2.bf16.msra.mxu0 %v751
    %1867 = vmatprep.subr.bf16.mxu0 %v750
    %1868 = vmatpush2.bf16.msra.mxu0 %v749
    %1869 = vmatprep.subr.bf16.mxu0 %v748
    %1870 = vmatpush2.bf16.msra.mxu0 %v747
    %1871 = vmatprep.subr.bf16.mxu0 %v746
    %1872 = vmatpush2.bf16.msra.mxu0 %v745
    %1873 = vmatprep.subr.bf16.mxu0 %v744
    %1874 = vmatpush2.bf16.msra.mxu0 %v743
    %1875 = vmatprep.subr.bf16.mxu0 %v742
    %1876 = vmatpush2.bf16.msra.mxu0 %v741
    %1877 = vmatprep.subr.bf16.mxu0 %v740
    %1878 = vmatpush2.bf16.msra.mxu0 %v739
    %1879 = vmatprep.subr.bf16.mxu0 %v738
    %1880 = vmatpush2.bf16.msra.mxu0 %v737
    %1881 = vmatprep.mubr.bf16.mxu0 %v1582
    %1882 = vmatmul.mubr.bf16.gmra.mxu0 %v1581
    %v1883 = vpop.f32.mrf.mxu0
    %v1884 = vadd.f32 %v1843, %v1883
    %v1885 = vpop.f32.mrf.mxu0
    %v1886 = vadd.f32 %v1845, %v1885
    %v1887 = vpop.f32.mrf.mxu0
    %v1888 = vpop.f32.mrf.mxu0
    %1889 = vdwg.mxu0
    %1890 = vmatprep.subr.bf16.mxu0 %v768
    %1891 = vmatpush1.bf16.msra.mxu0 %v767
    %1892 = vmatprep.subr.bf16.mxu0 %v766
    %1893 = vmatpush1.bf16.msra.mxu0 %v765
    %1894 = vmatprep.subr.bf16.mxu0 %v764
    %1895 = vmatpush1.bf16.msra.mxu0 %v763
    %1896 = vmatprep.subr.bf16.mxu0 %v762
    %1897 = vmatpush1.bf16.msra.mxu0 %v761
    %1898 = vmatprep.subr.bf16.mxu0 %v760
    %1899 = vmatpush1.bf16.msra.mxu0 %v759
    %1900 = vmatprep.subr.bf16.mxu0 %v758
    %1901 = vmatpush1.bf16.msra.mxu0 %v757
    %1902 = vmatprep.subr.bf16.mxu0 %v756
    %1903 = vmatpush1.bf16.msra.mxu0 %v755
    %1904 = vmatprep.subr.bf16.mxu0 %v754
    %1905 = vmatpush1.bf16.msra.mxu0 %v753
    %1906 = vmatprep.subr.bf16.mxu0 %v784
    %1907 = vmatpush2.bf16.msra.mxu0 %v783
    %1908 = vmatprep.subr.bf16.mxu0 %v782
    %1909 = vmatpush2.bf16.msra.mxu0 %v781
    %1910 = vmatprep.subr.bf16.mxu0 %v780
    %1911 = vmatpush2.bf16.msra.mxu0 %v779
    %1912 = vmatprep.subr.bf16.mxu0 %v778
    %1913 = vmatpush2.bf16.msra.mxu0 %v777
    %1914 = vmatprep.subr.bf16.mxu0 %v776
    %1915 = vmatpush2.bf16.msra.mxu0 %v775
    %1916 = vmatprep.subr.bf16.mxu0 %v774
    %1917 = vmatpush2.bf16.msra.mxu0 %v773
    %1918 = vmatprep.subr.bf16.mxu0 %v772
    %1919 = vmatpush2.bf16.msra.mxu0 %v771
    %1920 = vmatprep.subr.bf16.mxu0 %v770
    %1921 = vmatpush2.bf16.msra.mxu0 %v769
    %1922 = vmatprep.mubr.bf16.mxu0 %v1584
    %1923 = vmatmul.mubr.bf16.gmra.mxu0 %v1583
    %v1924 = vpop.f32.mrf.mxu0
    %v1925 = vadd.f32 %v1884, %v1924
    %v1926 = vpop.f32.mrf.mxu0
    %v1927 = vadd.f32 %v1886, %v1926
    %v1928 = vpop.f32.mrf.mxu0
    %v1929 = vpop.f32.mrf.mxu0
    %1930 = vdwg.mxu0
    %1931 = vmatprep.subr.bf16.mxu0 %v800
    %1932 = vmatpush1.bf16.msra.mxu0 %v799
    %1933 = vmatprep.subr.bf16.mxu0 %v798
    %1934 = vmatpush1.bf16.msra.mxu0 %v797
    %1935 = vmatprep.subr.bf16.mxu0 %v796
    %1936 = vmatpush1.bf16.msra.mxu0 %v795
    %1937 = vmatprep.subr.bf16.mxu0 %v794
    %1938 = vmatpush1.bf16.msra.mxu0 %v793
    %1939 = vmatprep.subr.bf16.mxu0 %v792
    %1940 = vmatpush1.bf16.msra.mxu0 %v791
    %1941 = vmatprep.subr.bf16.mxu0 %v790
    %1942 = vmatpush1.bf16.msra.mxu0 %v789
    %1943 = vmatprep.subr.bf16.mxu0 %v788
    %1944 = vmatpush1.bf16.msra.mxu0 %v787
    %1945 = vmatprep.subr.bf16.mxu0 %v786
    %1946 = vmatpush1.bf16.msra.mxu0 %v785
    %1947 = vmatprep.subr.bf16.mxu0 %v816
    %1948 = vmatpush2.bf16.msra.mxu0 %v815
    %1949 = vmatprep.subr.bf16.mxu0 %v814
    %1950 = vmatpush2.bf16.msra.mxu0 %v813
    %1951 = vmatprep.subr.bf16.mxu0 %v812
    %1952 = vmatpush2.bf16.msra.mxu0 %v811
    %1953 = vmatprep.subr.bf16.mxu0 %v810
    %1954 = vmatpush2.bf16.msra.mxu0 %v809
    %1955 = vmatprep.subr.bf16.mxu0 %v808
    %1956 = vmatpush2.bf16.msra.mxu0 %v807
    %1957 = vmatprep.subr.bf16.mxu0 %v806
    %1958 = vmatpush2.bf16.msra.mxu0 %v805
    %1959 = vmatprep.subr.bf16.mxu0 %v804
    %1960 = vmatpush2.bf16.msra.mxu0 %v803
    %1961 = vmatprep.subr.bf16.mxu0 %v802
    %1962 = vmatpush2.bf16.msra.mxu0 %v801
    %1963 = vmatprep.mubr.bf16.mxu0 %v1586
    %1964 = vmatmul.mubr.bf16.gmra.mxu0 %v1585
    %v1965 = vpop.f32.mrf.mxu0
    %v1966 = vadd.f32 %v1925, %v1965
    %v1967 = vpop.f32.mrf.mxu0
    %v1968 = vadd.f32 %v1927, %v1967
    %v1969 = vpop.f32.mrf.mxu0
    %v1970 = vpop.f32.mrf.mxu0
    %1971 = vdwg.mxu0
    %1972 = vmatprep.subr.bf16.mxu0 %v832
    %1973 = vmatpush1.bf16.msra.mxu0 %v831
    %1974 = vmatprep.subr.bf16.mxu0 %v830
    %1975 = vmatpush1.bf16.msra.mxu0 %v829
    %1976 = vmatprep.subr.bf16.mxu0 %v828
    %1977 = vmatpush1.bf16.msra.mxu0 %v827
    %1978 = vmatprep.subr.bf16.mxu0 %v826
    %1979 = vmatpush1.bf16.msra.mxu0 %v825
    %1980 = vmatprep.subr.bf16.mxu0 %v824
    %1981 = vmatpush1.bf16.msra.mxu0 %v823
    %1982 = vmatprep.subr.bf16.mxu0 %v822
    %1983 = vmatpush1.bf16.msra.mxu0 %v821
    %1984 = vmatprep.subr.bf16.mxu0 %v820
    %1985 = vmatpush1.bf16.msra.mxu0 %v819
    %1986 = vmatprep.subr.bf16.mxu0 %v818
    %1987 = vmatpush1.bf16.msra.mxu0 %v817
    %1988 = vmatprep.subr.bf16.mxu0 %v848
    %1989 = vmatpush2.bf16.msra.mxu0 %v847
    %1990 = vmatprep.subr.bf16.mxu0 %v846
    %1991 = vmatpush2.bf16.msra.mxu0 %v845
    %1992 = vmatprep.subr.bf16.mxu0 %v844
    %1993 = vmatpush2.bf16.msra.mxu0 %v843
    %1994 = vmatprep.subr.bf16.mxu0 %v842
    %1995 = vmatpush2.bf16.msra.mxu0 %v841
    %1996 = vmatprep.subr.bf16.mxu0 %v840
    %1997 = vmatpush2.bf16.msra.mxu0 %v839
    %1998 = vmatprep.subr.bf16.mxu0 %v838
    %1999 = vmatpush2.bf16.msra.mxu0 %v837
    %2000 = vmatprep.subr.bf16.mxu0 %v836
    %2001 = vmatpush2.bf16.msra.mxu0 %v835
    %2002 = vmatprep.subr.bf16.mxu0 %v834
    %2003 = vmatpush2.bf16.msra.mxu0 %v833
    %2004 = vmatprep.mubr.bf16.mxu0 %v1588
    %2005 = vmatmul.mubr.bf16.gmra.mxu0 %v1587
    %v2006 = vpop.f32.mrf.mxu0
    %v2007 = vadd.f32 %v1966, %v2006
    %v2008 = vpop.f32.mrf.mxu0
    %v2009 = vadd.f32 %v1968, %v2008
    %v2010 = vpop.f32.mrf.mxu0
    %v2011 = vpop.f32.mrf.mxu0
    %2012 = vdwg.mxu0
    %2013 = vmatprep.subr.bf16.mxu0 %v864
    %2014 = vmatpush1.bf16.msra.mxu0 %v863
    %2015 = vmatprep.subr.bf16.mxu0 %v862
    %2016 = vmatpush1.bf16.msra.mxu0 %v861
    %2017 = vmatprep.subr.bf16.mxu0 %v860
    %2018 = vmatpush1.bf16.msra.mxu0 %v859
    %2019 = vmatprep.subr.bf16.mxu0 %v858
    %2020 = vmatpush1.bf16.msra.mxu0 %v857
    %2021 = vmatprep.subr.bf16.mxu0 %v856
    %2022 = vmatpush1.bf16.msra.mxu0 %v855
    %2023 = vmatprep.subr.bf16.mxu0 %v854
    %2024 = vmatpush1.bf16.msra.mxu0 %v853
    %2025 = vmatprep.subr.bf16.mxu0 %v852
    %2026 = vmatpush1.bf16.msra.mxu0 %v851
    %2027 = vmatprep.subr.bf16.mxu0 %v850
    %2028 = vmatpush1.bf16.msra.mxu0 %v849
    %2029 = vmatprep.subr.bf16.mxu0 %v880
    %2030 = vmatpush2.bf16.msra.mxu0 %v879
    %2031 = vmatprep.subr.bf16.mxu0 %v878
    %2032 = vmatpush2.bf16.msra.mxu0 %v877
    %2033 = vmatprep.subr.bf16.mxu0 %v876
    %2034 = vmatpush2.bf16.msra.mxu0 %v875
    %2035 = vmatprep.subr.bf16.mxu0 %v874
    %2036 = vmatpush2.bf16.msra.mxu0 %v873
    %2037 = vmatprep.subr.bf16.mxu0 %v872
    %2038 = vmatpush2.bf16.msra.mxu0 %v871
    %2039 = vmatprep.subr.bf16.mxu0 %v870
    %2040 = vmatpush2.bf16.msra.mxu0 %v869
    %2041 = vmatprep.subr.bf16.mxu0 %v868
    %2042 = vmatpush2.bf16.msra.mxu0 %v867
    %2043 = vmatprep.subr.bf16.mxu0 %v866
    %2044 = vmatpush2.bf16.msra.mxu0 %v865
    %2045 = vmatprep.mubr.bf16.mxu0 %v1590
    %2046 = vmatmul.mubr.bf16.gmra.mxu0 %v1589
    %v2047 = vpop.f32.mrf.mxu0
    %v2048 = vadd.f32 %v2007, %v2047
    %v2049 = vpop.f32.mrf.mxu0
    %v2050 = vadd.f32 %v2009, %v2049
    %v2051 = vpop.f32.mrf.mxu0
    %v2052 = vpop.f32.mrf.mxu0
    %2053 = vdwg.mxu0
    %2054 = vmatprep.subr.bf16.mxu0 %v896
    %2055 = vmatpush1.bf16.msra.mxu0 %v895
    %2056 = vmatprep.subr.bf16.mxu0 %v894
    %2057 = vmatpush1.bf16.msra.mxu0 %v893
    %2058 = vmatprep.subr.bf16.mxu0 %v892
    %2059 = vmatpush1.bf16.msra.mxu0 %v891
    %2060 = vmatprep.subr.bf16.mxu0 %v890
    %2061 = vmatpush1.bf16.msra.mxu0 %v889
    %2062 = vmatprep.subr.bf16.mxu0 %v888
    %2063 = vmatpush1.bf16.msra.mxu0 %v887
    %2064 = vmatprep.subr.bf16.mxu0 %v886
    %2065 = vmatpush1.bf16.msra.mxu0 %v885
    %2066 = vmatprep.subr.bf16.mxu0 %v884
    %2067 = vmatpush1.bf16.msra.mxu0 %v883
    %2068 = vmatprep.subr.bf16.mxu0 %v882
    %2069 = vmatpush1.bf16.msra.mxu0 %v881
    %2070 = vmatprep.subr.bf16.mxu0 %v912
    %2071 = vmatpush2.bf16.msra.mxu0 %v911
    %2072 = vmatprep.subr.bf16.mxu0 %v910
    %2073 = vmatpush2.bf16.msra.mxu0 %v909
    %2074 = vmatprep.subr.bf16.mxu0 %v908
    %2075 = vmatpush2.bf16.msra.mxu0 %v907
    %2076 = vmatprep.subr.bf16.mxu0 %v906
    %2077 = vmatpush2.bf16.msra.mxu0 %v905
    %2078 = vmatprep.subr.bf16.mxu0 %v904
    %2079 = vmatpush2.bf16.msra.mxu0 %v903
    %2080 = vmatprep.subr.bf16.mxu0 %v902
    %2081 = vmatpush2.bf16.msra.mxu0 %v901
    %2082 = vmatprep.subr.bf16.mxu0 %v900
    %2083 = vmatpush2.bf16.msra.mxu0 %v899
    %2084 = vmatprep.subr.bf16.mxu0 %v898
    %2085 = vmatpush2.bf16.msra.mxu0 %v897
    %2086 = vmatprep.mubr.bf16.mxu0 %v1592
    %2087 = vmatmul.mubr.bf16.gmra.mxu0 %v1591
    %v2088 = vpop.f32.mrf.mxu0
    %v2089 = vadd.f32 %v2048, %v2088
    %v2090 = vpop.f32.mrf.mxu0
    %v2091 = vadd.f32 %v2050, %v2090
    %v2092 = vpop.f32.mrf.mxu0
    %v2093 = vpop.f32.mrf.mxu0
    %2094 = vdwg.mxu0
    %2095 = vmatprep.subr.bf16.mxu0 %v928
    %2096 = vmatpush1.bf16.msra.mxu0 %v927
    %2097 = vmatprep.subr.bf16.mxu0 %v926
    %2098 = vmatpush1.bf16.msra.mxu0 %v925
    %2099 = vmatprep.subr.bf16.mxu0 %v924
    %2100 = vmatpush1.bf16.msra.mxu0 %v923
    %2101 = vmatprep.subr.bf16.mxu0 %v922
    %2102 = vmatpush1.bf16.msra.mxu0 %v921
    %2103 = vmatprep.subr.bf16.mxu0 %v920
    %2104 = vmatpush1.bf16.msra.mxu0 %v919
    %2105 = vmatprep.subr.bf16.mxu0 %v918
    %2106 = vmatpush1.bf16.msra.mxu0 %v917
    %2107 = vmatprep.subr.bf16.mxu0 %v916
    %2108 = vmatpush1.bf16.msra.mxu0 %v915
    %2109 = vmatprep.subr.bf16.mxu0 %v914
    %2110 = vmatpush1.bf16.msra.mxu0 %v913
    %2111 = vmatprep.subr.bf16.mxu0 %v944
    %2112 = vmatpush2.bf16.msra.mxu0 %v943
    %2113 = vmatprep.subr.bf16.mxu0 %v942
    %2114 = vmatpush2.bf16.msra.mxu0 %v941
    %2115 = vmatprep.subr.bf16.mxu0 %v940
    %2116 = vmatpush2.bf16.msra.mxu0 %v939
    %2117 = vmatprep.subr.bf16.mxu0 %v938
    %2118 = vmatpush2.bf16.msra.mxu0 %v937
    %2119 = vmatprep.subr.bf16.mxu0 %v936
    %2120 = vmatpush2.bf16.msra.mxu0 %v935
    %2121 = vmatprep.subr.bf16.mxu0 %v934
    %2122 = vmatpush2.bf16.msra.mxu0 %v933
    %2123 = vmatprep.subr.bf16.mxu0 %v932
    %2124 = vmatpush2.bf16.msra.mxu0 %v931
    %2125 = vmatprep.subr.bf16.mxu0 %v930
    %2126 = vmatpush2.bf16.msra.mxu0 %v929
    %2127 = vmatprep.mubr.bf16.mxu0 %v1594
    %2128 = vmatmul.mubr.bf16.gmra.mxu0 %v1593
    %v2129 = vpop.f32.mrf.mxu0
    %v2130 = vadd.f32 %v2089, %v2129
    %v2131 = vpop.f32.mrf.mxu0
    %v2132 = vadd.f32 %v2091, %v2131
    %v2133 = vpop.f32.mrf.mxu0
    %v2134 = vpop.f32.mrf.mxu0
    %2135 = vdwg.mxu0
    %2136 = vmatprep.subr.bf16.mxu0 %v960
    %2137 = vmatpush1.bf16.msra.mxu0 %v959
    %2138 = vmatprep.subr.bf16.mxu0 %v958
    %2139 = vmatpush1.bf16.msra.mxu0 %v957
    %2140 = vmatprep.subr.bf16.mxu0 %v956
    %2141 = vmatpush1.bf16.msra.mxu0 %v955
    %2142 = vmatprep.subr.bf16.mxu0 %v954
    %2143 = vmatpush1.bf16.msra.mxu0 %v953
    %2144 = vmatprep.subr.bf16.mxu0 %v952
    %2145 = vmatpush1.bf16.msra.mxu0 %v951
    %2146 = vmatprep.subr.bf16.mxu0 %v950
    %2147 = vmatpush1.bf16.msra.mxu0 %v949
    %2148 = vmatprep.subr.bf16.mxu0 %v948
    %2149 = vmatpush1.bf16.msra.mxu0 %v947
    %2150 = vmatprep.subr.bf16.mxu0 %v946
    %2151 = vmatpush1.bf16.msra.mxu0 %v945
    %2152 = vmatprep.subr.bf16.mxu0 %v976
    %2153 = vmatpush2.bf16.msra.mxu0 %v975
    %2154 = vmatprep.subr.bf16.mxu0 %v974
    %2155 = vmatpush2.bf16.msra.mxu0 %v973
    %2156 = vmatprep.subr.bf16.mxu0 %v972
    %2157 = vmatpush2.bf16.msra.mxu0 %v971
    %2158 = vmatprep.subr.bf16.mxu0 %v970
    %2159 = vmatpush2.bf16.msra.mxu0 %v969
    %2160 = vmatprep.subr.bf16.mxu0 %v968
    %2161 = vmatpush2.bf16.msra.mxu0 %v967
    %2162 = vmatprep.subr.bf16.mxu0 %v966
    %2163 = vmatpush2.bf16.msra.mxu0 %v965
    %2164 = vmatprep.subr.bf16.mxu0 %v964
    %2165 = vmatpush2.bf16.msra.mxu0 %v963
    %2166 = vmatprep.subr.bf16.mxu0 %v962
    %2167 = vmatpush2.bf16.msra.mxu0 %v961
    %2168 = vmatprep.mubr.bf16.mxu0 %v1596
    %2169 = vmatmul.mubr.bf16.gmra.mxu0 %v1595
    %v2170 = vpop.f32.mrf.mxu0
    %v2171 = vadd.f32 %v2130, %v2170
    %v2172 = vpop.f32.mrf.mxu0
    %v2173 = vadd.f32 %v2132, %v2172
    %v2174 = vpop.f32.mrf.mxu0
    %v2175 = vpop.f32.mrf.mxu0
    %2176 = vdwg.mxu0
    %2177 = vmatprep.subr.bf16.mxu0 %v992
    %2178 = vmatpush1.bf16.msra.mxu0 %v991
    %2179 = vmatprep.subr.bf16.mxu0 %v990
    %2180 = vmatpush1.bf16.msra.mxu0 %v989
    %2181 = vmatprep.subr.bf16.mxu0 %v988
    %2182 = vmatpush1.bf16.msra.mxu0 %v987
    %2183 = vmatprep.subr.bf16.mxu0 %v986
    %2184 = vmatpush1.bf16.msra.mxu0 %v985
    %2185 = vmatprep.subr.bf16.mxu0 %v984
    %2186 = vmatpush1.bf16.msra.mxu0 %v983
    %2187 = vmatprep.subr.bf16.mxu0 %v982
    %2188 = vmatpush1.bf16.msra.mxu0 %v981
    %2189 = vmatprep.subr.bf16.mxu0 %v980
    %2190 = vmatpush1.bf16.msra.mxu0 %v979
    %2191 = vmatprep.subr.bf16.mxu0 %v978
    %2192 = vmatpush1.bf16.msra.mxu0 %v977
    %2193 = vmatprep.subr.bf16.mxu0 %v1008
    %2194 = vmatpush2.bf16.msra.mxu0 %v1007
    %2195 = vmatprep.subr.bf16.mxu0 %v1006
    %2196 = vmatpush2.bf16.msra.mxu0 %v1005
    %2197 = vmatprep.subr.bf16.mxu0 %v1004
    %2198 = vmatpush2.bf16.msra.mxu0 %v1003
    %2199 = vmatprep.subr.bf16.mxu0 %v1002
    %2200 = vmatpush2.bf16.msra.mxu0 %v1001
    %2201 = vmatprep.subr.bf16.mxu0 %v1000
    %2202 = vmatpush2.bf16.msra.mxu0 %v999
    %2203 = vmatprep.subr.bf16.mxu0 %v998
    %2204 = vmatpush2.bf16.msra.mxu0 %v997
    %2205 = vmatprep.subr.bf16.mxu0 %v996
    %2206 = vmatpush2.bf16.msra.mxu0 %v995
    %2207 = vmatprep.subr.bf16.mxu0 %v994
    %2208 = vmatpush2.bf16.msra.mxu0 %v993
    %2209 = vmatprep.mubr.bf16.mxu0 %v1598
    %2210 = vmatmul.mubr.bf16.gmra.mxu0 %v1597
    %v2211 = vpop.f32.mrf.mxu0
    %v2212 = vadd.f32 %v2171, %v2211
    %v2213 = vpop.f32.mrf.mxu0
    %v2214 = vadd.f32 %v2173, %v2213
    %v2215 = vpop.f32.mrf.mxu0
    %v2216 = vpop.f32.mrf.mxu0
    %2217 = vdwg.mxu0
    %2218 = vmatprep.subr.bf16.mxu0 %v1024
    %2219 = vmatpush1.bf16.msra.mxu0 %v1023
    %2220 = vmatprep.subr.bf16.mxu0 %v1022
    %2221 = vmatpush1.bf16.msra.mxu0 %v1021
    %2222 = vmatprep.subr.bf16.mxu0 %v1020
    %2223 = vmatpush1.bf16.msra.mxu0 %v1019
    %2224 = vmatprep.subr.bf16.mxu0 %v1018
    %2225 = vmatpush1.bf16.msra.mxu0 %v1017
    %2226 = vmatprep.subr.bf16.mxu0 %v1016
    %2227 = vmatpush1.bf16.msra.mxu0 %v1015
    %2228 = vmatprep.subr.bf16.mxu0 %v1014
    %2229 = vmatpush1.bf16.msra.mxu0 %v1013
    %2230 = vmatprep.subr.bf16.mxu0 %v1012
    %2231 = vmatpush1.bf16.msra.mxu0 %v1011
    %2232 = vmatprep.subr.bf16.mxu0 %v1010
    %2233 = vmatpush1.bf16.msra.mxu0 %v1009
    %2234 = vmatprep.subr.bf16.mxu0 %v1040
    %2235 = vmatpush2.bf16.msra.mxu0 %v1039
    %2236 = vmatprep.subr.bf16.mxu0 %v1038
    %2237 = vmatpush2.bf16.msra.mxu0 %v1037
    %2238 = vmatprep.subr.bf16.mxu0 %v1036
    %2239 = vmatpush2.bf16.msra.mxu0 %v1035
    %2240 = vmatprep.subr.bf16.mxu0 %v1034
    %2241 = vmatpush2.bf16.msra.mxu0 %v1033
    %2242 = vmatprep.subr.bf16.mxu0 %v1032
    %2243 = vmatpush2.bf16.msra.mxu0 %v1031
    %2244 = vmatprep.subr.bf16.mxu0 %v1030
    %2245 = vmatpush2.bf16.msra.mxu0 %v1029
    %2246 = vmatprep.subr.bf16.mxu0 %v1028
    %2247 = vmatpush2.bf16.msra.mxu0 %v1027
    %2248 = vmatprep.subr.bf16.mxu0 %v1026
    %2249 = vmatpush2.bf16.msra.mxu0 %v1025
    %2250 = vmatprep.mubr.bf16.mxu0 %v1600
    %2251 = vmatmul.mubr.bf16.gmra.mxu0 %v1599
    %v2252 = vpop.f32.mrf.mxu0
    %v2253 = vadd.f32 %v2212, %v2252
    %v2254 = vpop.f32.mrf.mxu0
    %v2255 = vadd.f32 %v2214, %v2254
    %v2256 = vpop.f32.mrf.mxu0
    %v2257 = vpop.f32.mrf.mxu0
    %2258 = vdwg.mxu0
    %2259 = vmatprep.subr.bf16.mxu0 %v1056
    %2260 = vmatpush1.bf16.msra.mxu0 %v1055
    %2261 = vmatprep.subr.bf16.mxu0 %v1054
    %2262 = vmatpush1.bf16.msra.mxu0 %v1053
    %2263 = vmatprep.subr.bf16.mxu0 %v1052
    %2264 = vmatpush1.bf16.msra.mxu0 %v1051
    %2265 = vmatprep.subr.bf16.mxu0 %v1050
    %2266 = vmatpush1.bf16.msra.mxu0 %v1049
    %2267 = vmatprep.subr.bf16.mxu0 %v1048
    %2268 = vmatpush1.bf16.msra.mxu0 %v1047
    %2269 = vmatprep.subr.bf16.mxu0 %v1046
    %2270 = vmatpush1.bf16.msra.mxu0 %v1045
    %2271 = vmatprep.subr.bf16.mxu0 %v1044
    %2272 = vmatpush1.bf16.msra.mxu0 %v1043
    %2273 = vmatprep.subr.bf16.mxu0 %v1042
    %2274 = vmatpush1.bf16.msra.mxu0 %v1041
    %2275 = vmatprep.subr.bf16.mxu0 %v1072
    %2276 = vmatpush2.bf16.msra.mxu0 %v1071
    %2277 = vmatprep.subr.bf16.mxu0 %v1070
    %2278 = vmatpush2.bf16.msra.mxu0 %v1069
    %2279 = vmatprep.subr.bf16.mxu0 %v1068
    %2280 = vmatpush2.bf16.msra.mxu0 %v1067
    %2281 = vmatprep.subr.bf16.mxu0 %v1066
    %2282 = vmatpush2.bf16.msra.mxu0 %v1065
    %2283 = vmatprep.subr.bf16.mxu0 %v1064
    %2284 = vmatpush2.bf16.msra.mxu0 %v1063
    %2285 = vmatprep.subr.bf16.mxu0 %v1062
    %2286 = vmatpush2.bf16.msra.mxu0 %v1061
    %2287 = vmatprep.subr.bf16.mxu0 %v1060
    %2288 = vmatpush2.bf16.msra.mxu0 %v1059
    %2289 = vmatprep.subr.bf16.mxu0 %v1058
    %2290 = vmatpush2.bf16.msra.mxu0 %v1057
    %2291 = vmatprep.mubr.bf16.mxu0 %v1602
    %2292 = vmatmul.mubr.bf16.gmra.mxu0 %v1601
    %v2293 = vpop.f32.mrf.mxu0
    %v2294 = vadd.f32 %v2253, %v2293
    %v2295 = vpop.f32.mrf.mxu0
    %v2296 = vadd.f32 %v2255, %v2295
    %v2297 = vpop.f32.mrf.mxu0
    %v2298 = vpop.f32.mrf.mxu0
    %2299 = vdwg.mxu0
    %2300 = vmatprep.subr.bf16.mxu0 %v1088
    %2301 = vmatpush1.bf16.msra.mxu0 %v1087
    %2302 = vmatprep.subr.bf16.mxu0 %v1086
    %2303 = vmatpush1.bf16.msra.mxu0 %v1085
    %2304 = vmatprep.subr.bf16.mxu0 %v1084
    %2305 = vmatpush1.bf16.msra.mxu0 %v1083
    %2306 = vmatprep.subr.bf16.mxu0 %v1082
    %2307 = vmatpush1.bf16.msra.mxu0 %v1081
    %2308 = vmatprep.subr.bf16.mxu0 %v1080
    %2309 = vmatpush1.bf16.msra.mxu0 %v1079
    %2310 = vmatprep.subr.bf16.mxu0 %v1078
    %2311 = vmatpush1.bf16.msra.mxu0 %v1077
    %2312 = vmatprep.subr.bf16.mxu0 %v1076
    %2313 = vmatpush1.bf16.msra.mxu0 %v1075
    %2314 = vmatprep.subr.bf16.mxu0 %v1074
    %2315 = vmatpush1.bf16.msra.mxu0 %v1073
    %2316 = vmatprep.subr.bf16.mxu0 %v1104
    %2317 = vmatpush2.bf16.msra.mxu0 %v1103
    %2318 = vmatprep.subr.bf16.mxu0 %v1102
    %2319 = vmatpush2.bf16.msra.mxu0 %v1101
    %2320 = vmatprep.subr.bf16.mxu0 %v1100
    %2321 = vmatpush2.bf16.msra.mxu0 %v1099
    %2322 = vmatprep.subr.bf16.mxu0 %v1098
    %2323 = vmatpush2.bf16.msra.mxu0 %v1097
    %2324 = vmatprep.subr.bf16.mxu0 %v1096
    %2325 = vmatpush2.bf16.msra.mxu0 %v1095
    %2326 = vmatprep.subr.bf16.mxu0 %v1094
    %2327 = vmatpush2.bf16.msra.mxu0 %v1093
    %2328 = vmatprep.subr.bf16.mxu0 %v1092
    %2329 = vmatpush2.bf16.msra.mxu0 %v1091
    %2330 = vmatprep.subr.bf16.mxu0 %v1090
    %2331 = vmatpush2.bf16.msra.mxu0 %v1089
    %2332 = vmatprep.mubr.bf16.mxu0 %v1604
    %2333 = vmatmul.mubr.bf16.gmra.mxu0 %v1603
    %v2334 = vpop.f32.mrf.mxu0
    %v2335 = vadd.f32 %v2294, %v2334
    %v2336 = vpop.f32.mrf.mxu0
    %v2337 = vadd.f32 %v2296, %v2336
    %v2338 = vpop.f32.mrf.mxu0
    %v2339 = vpop.f32.mrf.mxu0
    %2340 = vdwg.mxu0
    %2341 = vmatprep.subr.bf16.mxu0 %v1120
    %2342 = vmatpush1.bf16.msra.mxu0 %v1119
    %2343 = vmatprep.subr.bf16.mxu0 %v1118
    %2344 = vmatpush1.bf16.msra.mxu0 %v1117
    %2345 = vmatprep.subr.bf16.mxu0 %v1116
    %2346 = vmatpush1.bf16.msra.mxu0 %v1115
    %2347 = vmatprep.subr.bf16.mxu0 %v1114
    %2348 = vmatpush1.bf16.msra.mxu0 %v1113
    %2349 = vmatprep.subr.bf16.mxu0 %v1112
    %2350 = vmatpush1.bf16.msra.mxu0 %v1111
    %2351 = vmatprep.subr.bf16.mxu0 %v1110
    %2352 = vmatpush1.bf16.msra.mxu0 %v1109
    %2353 = vmatprep.subr.bf16.mxu0 %v1108
    %2354 = vmatpush1.bf16.msra.mxu0 %v1107
    %2355 = vmatprep.subr.bf16.mxu0 %v1106
    %2356 = vmatpush1.bf16.msra.mxu0 %v1105
    %2357 = vmatprep.subr.bf16.mxu0 %v1136
    %2358 = vmatpush2.bf16.msra.mxu0 %v1135
    %2359 = vmatprep.subr.bf16.mxu0 %v1134
    %2360 = vmatpush2.bf16.msra.mxu0 %v1133
    %2361 = vmatprep.subr.bf16.mxu0 %v1132
    %2362 = vmatpush2.bf16.msra.mxu0 %v1131
    %2363 = vmatprep.subr.bf16.mxu0 %v1130
    %2364 = vmatpush2.bf16.msra.mxu0 %v1129
    %2365 = vmatprep.subr.bf16.mxu0 %v1128
    %2366 = vmatpush2.bf16.msra.mxu0 %v1127
    %2367 = vmatprep.subr.bf16.mxu0 %v1126
    %2368 = vmatpush2.bf16.msra.mxu0 %v1125
    %2369 = vmatprep.subr.bf16.mxu0 %v1124
    %2370 = vmatpush2.bf16.msra.mxu0 %v1123
    %2371 = vmatprep.subr.bf16.mxu0 %v1122
    %2372 = vmatpush2.bf16.msra.mxu0 %v1121
    %2373 = vmatprep.mubr.bf16.mxu0 %v1606
    %2374 = vmatmul.mubr.bf16.gmra.mxu0 %v1605
    %v2375 = vpop.f32.mrf.mxu0
    %v2376 = vadd.f32 %v2335, %v2375
    %v2377 = vpop.f32.mrf.mxu0
    %v2378 = vadd.f32 %v2337, %v2377
    %v2379 = vpop.f32.mrf.mxu0
    %v2380 = vpop.f32.mrf.mxu0
    %2381 = vdwg.mxu0
    %2382 = vmatprep.subr.bf16.mxu0 %v1152
    %2383 = vmatpush1.bf16.msra.mxu0 %v1151
    %2384 = vmatprep.subr.bf16.mxu0 %v1150
    %2385 = vmatpush1.bf16.msra.mxu0 %v1149
    %2386 = vmatprep.subr.bf16.mxu0 %v1148
    %2387 = vmatpush1.bf16.msra.mxu0 %v1147
    %2388 = vmatprep.subr.bf16.mxu0 %v1146
    %2389 = vmatpush1.bf16.msra.mxu0 %v1145
    %2390 = vmatprep.subr.bf16.mxu0 %v1144
    %2391 = vmatpush1.bf16.msra.mxu0 %v1143
    %2392 = vmatprep.subr.bf16.mxu0 %v1142
    %2393 = vmatpush1.bf16.msra.mxu0 %v1141
    %2394 = vmatprep.subr.bf16.mxu0 %v1140
    %2395 = vmatpush1.bf16.msra.mxu0 %v1139
    %2396 = vmatprep.subr.bf16.mxu0 %v1138
    %2397 = vmatpush1.bf16.msra.mxu0 %v1137
    %2398 = vmatprep.subr.bf16.mxu0 %v1168
    %2399 = vmatpush2.bf16.msra.mxu0 %v1167
    %2400 = vmatprep.subr.bf16.mxu0 %v1166
    %2401 = vmatpush2.bf16.msra.mxu0 %v1165
    %2402 = vmatprep.subr.bf16.mxu0 %v1164
    %2403 = vmatpush2.bf16.msra.mxu0 %v1163
    %2404 = vmatprep.subr.bf16.mxu0 %v1162
    %2405 = vmatpush2.bf16.msra.mxu0 %v1161
    %2406 = vmatprep.subr.bf16.mxu0 %v1160
    %2407 = vmatpush2.bf16.msra.mxu0 %v1159
    %2408 = vmatprep.subr.bf16.mxu0 %v1158
    %2409 = vmatpush2.bf16.msra.mxu0 %v1157
    %2410 = vmatprep.subr.bf16.mxu0 %v1156
    %2411 = vmatpush2.bf16.msra.mxu0 %v1155
    %2412 = vmatprep.subr.bf16.mxu0 %v1154
    %2413 = vmatpush2.bf16.msra.mxu0 %v1153
    %2414 = vmatprep.mubr.bf16.mxu0 %v1608
    %2415 = vmatmul.mubr.bf16.gmra.mxu0 %v1607
    %v2416 = vpop.f32.mrf.mxu0
    %v2417 = vadd.f32 %v2376, %v2416
    %v2418 = vpop.f32.mrf.mxu0
    %v2419 = vadd.f32 %v2378, %v2418
    %v2420 = vpop.f32.mrf.mxu0
    %v2421 = vpop.f32.mrf.mxu0
    %2422 = vdwg.mxu0
    %2423 = vmatprep.subr.bf16.mxu0 %v1184
    %2424 = vmatpush1.bf16.msra.mxu0 %v1183
    %2425 = vmatprep.subr.bf16.mxu0 %v1182
    %2426 = vmatpush1.bf16.msra.mxu0 %v1181
    %2427 = vmatprep.subr.bf16.mxu0 %v1180
    %2428 = vmatpush1.bf16.msra.mxu0 %v1179
    %2429 = vmatprep.subr.bf16.mxu0 %v1178
    %2430 = vmatpush1.bf16.msra.mxu0 %v1177
    %2431 = vmatprep.subr.bf16.mxu0 %v1176
    %2432 = vmatpush1.bf16.msra.mxu0 %v1175
    %2433 = vmatprep.subr.bf16.mxu0 %v1174
    %2434 = vmatpush1.bf16.msra.mxu0 %v1173
    %2435 = vmatprep.subr.bf16.mxu0 %v1172
    %2436 = vmatpush1.bf16.msra.mxu0 %v1171
    %2437 = vmatprep.subr.bf16.mxu0 %v1170
    %2438 = vmatpush1.bf16.msra.mxu0 %v1169
    %2439 = vmatprep.subr.bf16.mxu0 %v1200
    %2440 = vmatpush2.bf16.msra.mxu0 %v1199
    %2441 = vmatprep.subr.bf16.mxu0 %v1198
    %2442 = vmatpush2.bf16.msra.mxu0 %v1197
    %2443 = vmatprep.subr.bf16.mxu0 %v1196
    %2444 = vmatpush2.bf16.msra.mxu0 %v1195
    %2445 = vmatprep.subr.bf16.mxu0 %v1194
    %2446 = vmatpush2.bf16.msra.mxu0 %v1193
    %2447 = vmatprep.subr.bf16.mxu0 %v1192
    %2448 = vmatpush2.bf16.msra.mxu0 %v1191
    %2449 = vmatprep.subr.bf16.mxu0 %v1190
    %2450 = vmatpush2.bf16.msra.mxu0 %v1189
    %2451 = vmatprep.subr.bf16.mxu0 %v1188
    %2452 = vmatpush2.bf16.msra.mxu0 %v1187
    %2453 = vmatprep.subr.bf16.mxu0 %v1186
    %2454 = vmatpush2.bf16.msra.mxu0 %v1185
    %2455 = vmatprep.mubr.bf16.mxu0 %v1610
    %2456 = vmatmul.mubr.bf16.gmra.mxu0 %v1609
    %v2457 = vpop.f32.mrf.mxu0
    %v2458 = vadd.f32 %v2417, %v2457
    %v2459 = vpop.f32.mrf.mxu0
    %v2460 = vadd.f32 %v2419, %v2459
    %v2461 = vpop.f32.mrf.mxu0
    %v2462 = vpop.f32.mrf.mxu0
    %2463 = vdwg.mxu0
    %2464 = vmatprep.subr.bf16.mxu0 %v1216
    %2465 = vmatpush1.bf16.msra.mxu0 %v1215
    %2466 = vmatprep.subr.bf16.mxu0 %v1214
    %2467 = vmatpush1.bf16.msra.mxu0 %v1213
    %2468 = vmatprep.subr.bf16.mxu0 %v1212
    %2469 = vmatpush1.bf16.msra.mxu0 %v1211
    %2470 = vmatprep.subr.bf16.mxu0 %v1210
    %2471 = vmatpush1.bf16.msra.mxu0 %v1209
    %2472 = vmatprep.subr.bf16.mxu0 %v1208
    %2473 = vmatpush1.bf16.msra.mxu0 %v1207
    %2474 = vmatprep.subr.bf16.mxu0 %v1206
    %2475 = vmatpush1.bf16.msra.mxu0 %v1205
    %2476 = vmatprep.subr.bf16.mxu0 %v1204
    %2477 = vmatpush1.bf16.msra.mxu0 %v1203
    %2478 = vmatprep.subr.bf16.mxu0 %v1202
    %2479 = vmatpush1.bf16.msra.mxu0 %v1201
    %2480 = vmatprep.subr.bf16.mxu0 %v1232
    %2481 = vmatpush2.bf16.msra.mxu0 %v1231
    %2482 = vmatprep.subr.bf16.mxu0 %v1230
    %2483 = vmatpush2.bf16.msra.mxu0 %v1229
    %2484 = vmatprep.subr.bf16.mxu0 %v1228
    %2485 = vmatpush2.bf16.msra.mxu0 %v1227
    %2486 = vmatprep.subr.bf16.mxu0 %v1226
    %2487 = vmatpush2.bf16.msra.mxu0 %v1225
    %2488 = vmatprep.subr.bf16.mxu0 %v1224
    %2489 = vmatpush2.bf16.msra.mxu0 %v1223
    %2490 = vmatprep.subr.bf16.mxu0 %v1222
    %2491 = vmatpush2.bf16.msra.mxu0 %v1221
    %2492 = vmatprep.subr.bf16.mxu0 %v1220
    %2493 = vmatpush2.bf16.msra.mxu0 %v1219
    %2494 = vmatprep.subr.bf16.mxu0 %v1218
    %2495 = vmatpush2.bf16.msra.mxu0 %v1217
    %2496 = vmatprep.mubr.bf16.mxu0 %v1612
    %2497 = vmatmul.mubr.bf16.gmra.mxu0 %v1611
    %v2498 = vpop.f32.mrf.mxu0
    %v2499 = vadd.f32 %v2458, %v2498
    %v2500 = vpop.f32.mrf.mxu0
    %v2501 = vadd.f32 %v2460, %v2500
    %v2502 = vpop.f32.mrf.mxu0
    %v2503 = vpop.f32.mrf.mxu0
    %2504 = vdwg.mxu0
    %2505 = vmatprep.subr.bf16.mxu0 %v1248
    %2506 = vmatpush1.bf16.msra.mxu0 %v1247
    %2507 = vmatprep.subr.bf16.mxu0 %v1246
    %2508 = vmatpush1.bf16.msra.mxu0 %v1245
    %2509 = vmatprep.subr.bf16.mxu0 %v1244
    %2510 = vmatpush1.bf16.msra.mxu0 %v1243
    %2511 = vmatprep.subr.bf16.mxu0 %v1242
    %2512 = vmatpush1.bf16.msra.mxu0 %v1241
    %2513 = vmatprep.subr.bf16.mxu0 %v1240
    %2514 = vmatpush1.bf16.msra.mxu0 %v1239
    %2515 = vmatprep.subr.bf16.mxu0 %v1238
    %2516 = vmatpush1.bf16.msra.mxu0 %v1237
    %2517 = vmatprep.subr.bf16.mxu0 %v1236
    %2518 = vmatpush1.bf16.msra.mxu0 %v1235
    %2519 = vmatprep.subr.bf16.mxu0 %v1234
    %2520 = vmatpush1.bf16.msra.mxu0 %v1233
    %2521 = vmatprep.subr.bf16.mxu0 %v1264
    %2522 = vmatpush2.bf16.msra.mxu0 %v1263
    %2523 = vmatprep.subr.bf16.mxu0 %v1262
    %2524 = vmatpush2.bf16.msra.mxu0 %v1261
    %2525 = vmatprep.subr.bf16.mxu0 %v1260
    %2526 = vmatpush2.bf16.msra.mxu0 %v1259
    %2527 = vmatprep.subr.bf16.mxu0 %v1258
    %2528 = vmatpush2.bf16.msra.mxu0 %v1257
    %2529 = vmatprep.subr.bf16.mxu0 %v1256
    %2530 = vmatpush2.bf16.msra.mxu0 %v1255
    %2531 = vmatprep.subr.bf16.mxu0 %v1254
    %2532 = vmatpush2.bf16.msra.mxu0 %v1253
    %2533 = vmatprep.subr.bf16.mxu0 %v1252
    %2534 = vmatpush2.bf16.msra.mxu0 %v1251
    %2535 = vmatprep.subr.bf16.mxu0 %v1250
    %2536 = vmatpush2.bf16.msra.mxu0 %v1249
    %2537 = vmatprep.mubr.bf16.mxu0 %v1614
    %2538 = vmatmul.mubr.bf16.gmra.mxu0 %v1613
    %v2539 = vpop.f32.mrf.mxu0
    %v2540 = vadd.f32 %v2499, %v2539
    %v2541 = vpop.f32.mrf.mxu0
    %v2542 = vadd.f32 %v2501, %v2541
    %v2543 = vpop.f32.mrf.mxu0
    %v2544 = vpop.f32.mrf.mxu0
    %2545 = vdwg.mxu0
    %2546 = vmatprep.subr.bf16.mxu0 %v1280
    %2547 = vmatpush1.bf16.msra.mxu0 %v1279
    %2548 = vmatprep.subr.bf16.mxu0 %v1278
    %2549 = vmatpush1.bf16.msra.mxu0 %v1277
    %2550 = vmatprep.subr.bf16.mxu0 %v1276
    %2551 = vmatpush1.bf16.msra.mxu0 %v1275
    %2552 = vmatprep.subr.bf16.mxu0 %v1274
    %2553 = vmatpush1.bf16.msra.mxu0 %v1273
    %2554 = vmatprep.subr.bf16.mxu0 %v1272
    %2555 = vmatpush1.bf16.msra.mxu0 %v1271
    %2556 = vmatprep.subr.bf16.mxu0 %v1270
    %2557 = vmatpush1.bf16.msra.mxu0 %v1269
    %2558 = vmatprep.subr.bf16.mxu0 %v1268
    %2559 = vmatpush1.bf16.msra.mxu0 %v1267
    %2560 = vmatprep.subr.bf16.mxu0 %v1266
    %2561 = vmatpush1.bf16.msra.mxu0 %v1265
    %2562 = vmatprep.subr.bf16.mxu0 %v1296
    %2563 = vmatpush2.bf16.msra.mxu0 %v1295
    %2564 = vmatprep.subr.bf16.mxu0 %v1294
    %2565 = vmatpush2.bf16.msra.mxu0 %v1293
    %2566 = vmatprep.subr.bf16.mxu0 %v1292
    %2567 = vmatpush2.bf16.msra.mxu0 %v1291
    %2568 = vmatprep.subr.bf16.mxu0 %v1290
    %2569 = vmatpush2.bf16.msra.mxu0 %v1289
    %2570 = vmatprep.subr.bf16.mxu0 %v1288
    %2571 = vmatpush2.bf16.msra.mxu0 %v1287
    %2572 = vmatprep.subr.bf16.mxu0 %v1286
    %2573 = vmatpush2.bf16.msra.mxu0 %v1285
    %2574 = vmatprep.subr.bf16.mxu0 %v1284
    %2575 = vmatpush2.bf16.msra.mxu0 %v1283
    %2576 = vmatprep.subr.bf16.mxu0 %v1282
    %2577 = vmatpush2.bf16.msra.mxu0 %v1281
    %2578 = vmatprep.mubr.bf16.mxu0 %v1616
    %2579 = vmatmul.mubr.bf16.gmra.mxu0 %v1615
    %v2580 = vpop.f32.mrf.mxu0
    %v2581 = vadd.f32 %v2540, %v2580
    %v2582 = vpop.f32.mrf.mxu0
    %v2583 = vadd.f32 %v2542, %v2582
    %v2584 = vpop.f32.mrf.mxu0
    %v2585 = vpop.f32.mrf.mxu0
    %2586 = vdwg.mxu0
    %2587 = vmatprep.subr.bf16.mxu0 %v1312
    %2588 = vmatpush1.bf16.msra.mxu0 %v1311
    %2589 = vmatprep.subr.bf16.mxu0 %v1310
    %2590 = vmatpush1.bf16.msra.mxu0 %v1309
    %2591 = vmatprep.subr.bf16.mxu0 %v1308
    %2592 = vmatpush1.bf16.msra.mxu0 %v1307
    %2593 = vmatprep.subr.bf16.mxu0 %v1306
    %2594 = vmatpush1.bf16.msra.mxu0 %v1305
    %2595 = vmatprep.subr.bf16.mxu0 %v1304
    %2596 = vmatpush1.bf16.msra.mxu0 %v1303
    %2597 = vmatprep.subr.bf16.mxu0 %v1302
    %2598 = vmatpush1.bf16.msra.mxu0 %v1301
    %2599 = vmatprep.subr.bf16.mxu0 %v1300
    %2600 = vmatpush1.bf16.msra.mxu0 %v1299
    %2601 = vmatprep.subr.bf16.mxu0 %v1298
    %2602 = vmatpush1.bf16.msra.mxu0 %v1297
    %2603 = vmatprep.subr.bf16.mxu0 %v1328
    %2604 = vmatpush2.bf16.msra.mxu0 %v1327
    %2605 = vmatprep.subr.bf16.mxu0 %v1326
    %2606 = vmatpush2.bf16.msra.mxu0 %v1325
    %2607 = vmatprep.subr.bf16.mxu0 %v1324
    %2608 = vmatpush2.bf16.msra.mxu0 %v1323
    %2609 = vmatprep.subr.bf16.mxu0 %v1322
    %2610 = vmatpush2.bf16.msra.mxu0 %v1321
    %2611 = vmatprep.subr.bf16.mxu0 %v1320
    %2612 = vmatpush2.bf16.msra.mxu0 %v1319
    %2613 = vmatprep.subr.bf16.mxu0 %v1318
    %2614 = vmatpush2.bf16.msra.mxu0 %v1317
    %2615 = vmatprep.subr.bf16.mxu0 %v1316
    %2616 = vmatpush2.bf16.msra.mxu0 %v1315
    %2617 = vmatprep.subr.bf16.mxu0 %v1314
    %2618 = vmatpush2.bf16.msra.mxu0 %v1313
    %2619 = vmatprep.mubr.bf16.mxu0 %v1618
    %2620 = vmatmul.mubr.bf16.gmra.mxu0 %v1617
    %v2621 = vpop.f32.mrf.mxu0
    %v2622 = vadd.f32 %v2581, %v2621
    %v2623 = vpop.f32.mrf.mxu0
    %v2624 = vadd.f32 %v2583, %v2623
    %v2625 = vpop.f32.mrf.mxu0
    %v2626 = vpop.f32.mrf.mxu0
    %2627 = vdwg.mxu0
    %2628 = vmatprep.subr.bf16.mxu0 %v1344
    %2629 = vmatpush1.bf16.msra.mxu0 %v1343
    %2630 = vmatprep.subr.bf16.mxu0 %v1342
    %2631 = vmatpush1.bf16.msra.mxu0 %v1341
    %2632 = vmatprep.subr.bf16.mxu0 %v1340
    %2633 = vmatpush1.bf16.msra.mxu0 %v1339
    %2634 = vmatprep.subr.bf16.mxu0 %v1338
    %2635 = vmatpush1.bf16.msra.mxu0 %v1337
    %2636 = vmatprep.subr.bf16.mxu0 %v1336
    %2637 = vmatpush1.bf16.msra.mxu0 %v1335
    %2638 = vmatprep.subr.bf16.mxu0 %v1334
    %2639 = vmatpush1.bf16.msra.mxu0 %v1333
    %2640 = vmatprep.subr.bf16.mxu0 %v1332
    %2641 = vmatpush1.bf16.msra.mxu0 %v1331
    %2642 = vmatprep.subr.bf16.mxu0 %v1330
    %2643 = vmatpush1.bf16.msra.mxu0 %v1329
    %2644 = vmatprep.subr.bf16.mxu0 %v1360
    %2645 = vmatpush2.bf16.msra.mxu0 %v1359
    %2646 = vmatprep.subr.bf16.mxu0 %v1358
    %2647 = vmatpush2.bf16.msra.mxu0 %v1357
    %2648 = vmatprep.subr.bf16.mxu0 %v1356
    %2649 = vmatpush2.bf16.msra.mxu0 %v1355
    %2650 = vmatprep.subr.bf16.mxu0 %v1354
    %2651 = vmatpush2.bf16.msra.mxu0 %v1353
    %2652 = vmatprep.subr.bf16.mxu0 %v1352
    %2653 = vmatpush2.bf16.msra.mxu0 %v1351
    %2654 = vmatprep.subr.bf16.mxu0 %v1350
    %2655 = vmatpush2.bf16.msra.mxu0 %v1349
    %2656 = vmatprep.subr.bf16.mxu0 %v1348
    %2657 = vmatpush2.bf16.msra.mxu0 %v1347
    %2658 = vmatprep.subr.bf16.mxu0 %v1346
    %2659 = vmatpush2.bf16.msra.mxu0 %v1345
    %2660 = vmatprep.mubr.bf16.mxu0 %v1620
    %2661 = vmatmul.mubr.bf16.gmra.mxu0 %v1619
    %v2662 = vpop.f32.mrf.mxu0
    %v2663 = vadd.f32 %v2622, %v2662
    %v2664 = vpop.f32.mrf.mxu0
    %v2665 = vadd.f32 %v2624, %v2664
    %v2666 = vpop.f32.mrf.mxu0
    %v2667 = vpop.f32.mrf.mxu0
    %2668 = vdwg.mxu0
    %2669 = vmatprep.subr.bf16.mxu0 %v1376
    %2670 = vmatpush1.bf16.msra.mxu0 %v1375
    %2671 = vmatprep.subr.bf16.mxu0 %v1374
    %2672 = vmatpush1.bf16.msra.mxu0 %v1373
    %2673 = vmatprep.subr.bf16.mxu0 %v1372
    %2674 = vmatpush1.bf16.msra.mxu0 %v1371
    %2675 = vmatprep.subr.bf16.mxu0 %v1370
    %2676 = vmatpush1.bf16.msra.mxu0 %v1369
    %2677 = vmatprep.subr.bf16.mxu0 %v1368
    %2678 = vmatpush1.bf16.msra.mxu0 %v1367
    %2679 = vmatprep.subr.bf16.mxu0 %v1366
    %2680 = vmatpush1.bf16.msra.mxu0 %v1365
    %2681 = vmatprep.subr.bf16.mxu0 %v1364
    %2682 = vmatpush1.bf16.msra.mxu0 %v1363
    %2683 = vmatprep.subr.bf16.mxu0 %v1362
    %2684 = vmatpush1.bf16.msra.mxu0 %v1361
    %2685 = vmatprep.subr.bf16.mxu0 %v1392
    %2686 = vmatpush2.bf16.msra.mxu0 %v1391
    %2687 = vmatprep.subr.bf16.mxu0 %v1390
    %2688 = vmatpush2.bf16.msra.mxu0 %v1389
    %2689 = vmatprep.subr.bf16.mxu0 %v1388
    %2690 = vmatpush2.bf16.msra.mxu0 %v1387
    %2691 = vmatprep.subr.bf16.mxu0 %v1386
    %2692 = vmatpush2.bf16.msra.mxu0 %v1385
    %2693 = vmatprep.subr.bf16.mxu0 %v1384
    %2694 = vmatpush2.bf16.msra.mxu0 %v1383
    %2695 = vmatprep.subr.bf16.mxu0 %v1382
    %2696 = vmatpush2.bf16.msra.mxu0 %v1381
    %2697 = vmatprep.subr.bf16.mxu0 %v1380
    %2698 = vmatpush2.bf16.msra.mxu0 %v1379
    %2699 = vmatprep.subr.bf16.mxu0 %v1378
    %2700 = vmatpush2.bf16.msra.mxu0 %v1377
    %2701 = vmatprep.mubr.bf16.mxu0 %v1622
    %2702 = vmatmul.mubr.bf16.gmra.mxu0 %v1621
    %v2703 = vpop.f32.mrf.mxu0
    %v2704 = vadd.f32 %v2663, %v2703
    %v2705 = vpop.f32.mrf.mxu0
    %v2706 = vadd.f32 %v2665, %v2705
    %v2707 = vpop.f32.mrf.mxu0
    %v2708 = vpop.f32.mrf.mxu0
    %2709 = vdwg.mxu0
    %2710 = vmatprep.subr.bf16.mxu0 %v1408
    %2711 = vmatpush1.bf16.msra.mxu0 %v1407
    %2712 = vmatprep.subr.bf16.mxu0 %v1406
    %2713 = vmatpush1.bf16.msra.mxu0 %v1405
    %2714 = vmatprep.subr.bf16.mxu0 %v1404
    %2715 = vmatpush1.bf16.msra.mxu0 %v1403
    %2716 = vmatprep.subr.bf16.mxu0 %v1402
    %2717 = vmatpush1.bf16.msra.mxu0 %v1401
    %2718 = vmatprep.subr.bf16.mxu0 %v1400
    %2719 = vmatpush1.bf16.msra.mxu0 %v1399
    %2720 = vmatprep.subr.bf16.mxu0 %v1398
    %2721 = vmatpush1.bf16.msra.mxu0 %v1397
    %2722 = vmatprep.subr.bf16.mxu0 %v1396
    %2723 = vmatpush1.bf16.msra.mxu0 %v1395
    %2724 = vmatprep.subr.bf16.mxu0 %v1394
    %2725 = vmatpush1.bf16.msra.mxu0 %v1393
    %2726 = vmatprep.subr.bf16.mxu0 %v1424
    %2727 = vmatpush2.bf16.msra.mxu0 %v1423
    %2728 = vmatprep.subr.bf16.mxu0 %v1422
    %2729 = vmatpush2.bf16.msra.mxu0 %v1421
    %2730 = vmatprep.subr.bf16.mxu0 %v1420
    %2731 = vmatpush2.bf16.msra.mxu0 %v1419
    %2732 = vmatprep.subr.bf16.mxu0 %v1418
    %2733 = vmatpush2.bf16.msra.mxu0 %v1417
    %2734 = vmatprep.subr.bf16.mxu0 %v1416
    %2735 = vmatpush2.bf16.msra.mxu0 %v1415
    %2736 = vmatprep.subr.bf16.mxu0 %v1414
    %2737 = vmatpush2.bf16.msra.mxu0 %v1413
    %2738 = vmatprep.subr.bf16.mxu0 %v1412
    %2739 = vmatpush2.bf16.msra.mxu0 %v1411
    %2740 = vmatprep.subr.bf16.mxu0 %v1410
    %2741 = vmatpush2.bf16.msra.mxu0 %v1409
    %2742 = vmatprep.mubr.bf16.mxu0 %v1624
    %2743 = vmatmul.mubr.bf16.gmra.mxu0 %v1623
    %v2744 = vpop.f32.mrf.mxu0
    %v2745 = vadd.f32 %v2704, %v2744
    %v2746 = vpop.f32.mrf.mxu0
    %v2747 = vadd.f32 %v2706, %v2746
    %v2748 = vpop.f32.mrf.mxu0
    %v2749 = vpop.f32.mrf.mxu0
    %2750 = vdwg.mxu0
    %2751 = vmatprep.subr.bf16.mxu0 %v1440
    %2752 = vmatpush1.bf16.msra.mxu0 %v1439
    %2753 = vmatprep.subr.bf16.mxu0 %v1438
    %2754 = vmatpush1.bf16.msra.mxu0 %v1437
    %2755 = vmatprep.subr.bf16.mxu0 %v1436
    %2756 = vmatpush1.bf16.msra.mxu0 %v1435
    %2757 = vmatprep.subr.bf16.mxu0 %v1434
    %2758 = vmatpush1.bf16.msra.mxu0 %v1433
    %2759 = vmatprep.subr.bf16.mxu0 %v1432
    %2760 = vmatpush1.bf16.msra.mxu0 %v1431
    %2761 = vmatprep.subr.bf16.mxu0 %v1430
    %2762 = vmatpush1.bf16.msra.mxu0 %v1429
    %2763 = vmatprep.subr.bf16.mxu0 %v1428
    %2764 = vmatpush1.bf16.msra.mxu0 %v1427
    %2765 = vmatprep.subr.bf16.mxu0 %v1426
    %2766 = vmatpush1.bf16.msra.mxu0 %v1425
    %2767 = vmatprep.subr.bf16.mxu0 %v1456
    %2768 = vmatpush2.bf16.msra.mxu0 %v1455
    %2769 = vmatprep.subr.bf16.mxu0 %v1454
    %2770 = vmatpush2.bf16.msra.mxu0 %v1453
    %2771 = vmatprep.subr.bf16.mxu0 %v1452
    %2772 = vmatpush2.bf16.msra.mxu0 %v1451
    %2773 = vmatprep.subr.bf16.mxu0 %v1450
    %2774 = vmatpush2.bf16.msra.mxu0 %v1449
    %2775 = vmatprep.subr.bf16.mxu0 %v1448
    %2776 = vmatpush2.bf16.msra.mxu0 %v1447
    %2777 = vmatprep.subr.bf16.mxu0 %v1446
    %2778 = vmatpush2.bf16.msra.mxu0 %v1445
    %2779 = vmatprep.subr.bf16.mxu0 %v1444
    %2780 = vmatpush2.bf16.msra.mxu0 %v1443
    %2781 = vmatprep.subr.bf16.mxu0 %v1442
    %2782 = vmatpush2.bf16.msra.mxu0 %v1441
    %2783 = vmatprep.mubr.bf16.mxu0 %v1626
    %2784 = vmatmul.mubr.bf16.gmra.mxu0 %v1625
    %v2785 = vpop.f32.mrf.mxu0
    %v2786 = vadd.f32 %v2745, %v2785
    %v2787 = vpop.f32.mrf.mxu0
    %v2788 = vadd.f32 %v2747, %v2787
    %v2789 = vpop.f32.mrf.mxu0
    %v2790 = vpop.f32.mrf.mxu0
    %2791 = vdwg.mxu0
    %2792 = vmatprep.subr.bf16.mxu0 %v1472
    %2793 = vmatpush1.bf16.msra.mxu0 %v1471
    %2794 = vmatprep.subr.bf16.mxu0 %v1470
    %2795 = vmatpush1.bf16.msra.mxu0 %v1469
    %2796 = vmatprep.subr.bf16.mxu0 %v1468
    %2797 = vmatpush1.bf16.msra.mxu0 %v1467
    %2798 = vmatprep.subr.bf16.mxu0 %v1466
    %2799 = vmatpush1.bf16.msra.mxu0 %v1465
    %2800 = vmatprep.subr.bf16.mxu0 %v1464
    %2801 = vmatpush1.bf16.msra.mxu0 %v1463
    %2802 = vmatprep.subr.bf16.mxu0 %v1462
    %2803 = vmatpush1.bf16.msra.mxu0 %v1461
    %2804 = vmatprep.subr.bf16.mxu0 %v1460
    %2805 = vmatpush1.bf16.msra.mxu0 %v1459
    %2806 = vmatprep.subr.bf16.mxu0 %v1458
    %2807 = vmatpush1.bf16.msra.mxu0 %v1457
    %2808 = vmatprep.subr.bf16.mxu0 %v1488
    %2809 = vmatpush2.bf16.msra.mxu0 %v1487
    %2810 = vmatprep.subr.bf16.mxu0 %v1486
    %2811 = vmatpush2.bf16.msra.mxu0 %v1485
    %2812 = vmatprep.subr.bf16.mxu0 %v1484
    %2813 = vmatpush2.bf16.msra.mxu0 %v1483
    %2814 = vmatprep.subr.bf16.mxu0 %v1482
    %2815 = vmatpush2.bf16.msra.mxu0 %v1481
    %2816 = vmatprep.subr.bf16.mxu0 %v1480
    %2817 = vmatpush2.bf16.msra.mxu0 %v1479
    %2818 = vmatprep.subr.bf16.mxu0 %v1478
    %2819 = vmatpush2.bf16.msra.mxu0 %v1477
    %2820 = vmatprep.subr.bf16.mxu0 %v1476
    %2821 = vmatpush2.bf16.msra.mxu0 %v1475
    %2822 = vmatprep.subr.bf16.mxu0 %v1474
    %2823 = vmatpush2.bf16.msra.mxu0 %v1473
    %2824 = vmatprep.mubr.bf16.mxu0 %v1628
    %2825 = vmatmul.mubr.bf16.gmra.mxu0 %v1627
    %v2826 = vpop.f32.mrf.mxu0
    %v2827 = vadd.f32 %v2786, %v2826
    %v2828 = vpop.f32.mrf.mxu0
    %v2829 = vadd.f32 %v2788, %v2828
    %v2830 = vpop.f32.mrf.mxu0
    %v2831 = vpop.f32.mrf.mxu0
    %2832 = vdwg.mxu0
    %v2833 = vld [vmem:[#allocation4] sm:$0x3]
    %v2835 = vlaneseq
    %v2836 = vshrl.u32 %v2835, 7
    %v2837 = vsub.s32 0, %v2836
    %v2838 = vrot.slane %v2833, %v2837
    %v2839 = vlaneseq
    %v2840 = vshrl.u32 %v2839, 7
    %v2841 = vsub.s32 1, %v2840
    %v2842 = vrot.slane %v2833, %v2841
    %v2845 = vmul.f32 %v2827, %v2838
    %v2846 = vmul.f32 %v2829, %v2842
    %v2847 = vld [vmem:[#allocation6] sm:$0x3]
    %v2849 = vlaneseq
    %v2850 = vshrl.u32 %v2849, 7
    %v2851 = vsub.s32 0, %v2850
    %v2852 = vrot.slane %v2847, %v2851
    %v2853 = vlaneseq
    %v2854 = vshrl.u32 %v2853, 7
    %v2855 = vsub.s32 1, %v2854
    %v2856 = vrot.slane %v2847, %v2855
    %v2859 = vadd.f32 %v2845, %v2852
    %v2860 = vadd.f32 %v2846, %v2856
    %v2861 = vmax.f32 %v2859, 0.0
    %v2862 = vmax.f32 %v2860, 0.0
    %v2863 = vpack.c.bf16 %v2861, %v2861
    %v2864 = vpack.c.bf16 %v2862, %v2862
    %v2865 = vld [vmem:[#allocation7] sm:$0xff]
    %v2866 = vld [vmem:[#allocation7 + $0x8] sm:$0xff]
    %v2867 = vld [vmem:[#allocation7 + $0x10] sm:$0xff]
    %v2868 = vld [vmem:[#allocation7 + $0x18] sm:$0xff]
    %v2869 = vld [vmem:[#allocation7 + $0x20] sm:$0xff]
    %v2870 = vld [vmem:[#allocation7 + $0x28] sm:$0xff]
    %v2871 = vld [vmem:[#allocation7 + $0x30] sm:$0xff]
    %v2872 = vld [vmem:[#allocation7 + $0x38] sm:$0xff]
    %v2873 = vld [vmem:[#allocation7 + $0x40] sm:$0xff]
    %v2874 = vld [vmem:[#allocation7 + $0x48] sm:$0xff]
    %v2875 = vld [vmem:[#allocation7 + $0x50] sm:$0xff]
    %v2876 = vld [vmem:[#allocation7 + $0x58] sm:$0xff]
    %v2877 = vld [vmem:[#allocation7 + $0x60] sm:$0xff]
    %v2878 = vld [vmem:[#allocation7 + $0x68] sm:$0xff]
    %v2879 = vld [vmem:[#allocation7 + $0x70] sm:$0xff]
    %v2880 = vld [vmem:[#allocation7 + $0x78] sm:$0xff]
    %v2881 = vld [vmem:[#allocation7 + $0x80] sm:$0xff]
    %v2882 = vld [vmem:[#allocation7 + $0x88] sm:$0xff]
    %v2883 = vld [vmem:[#allocation7 + $0x90] sm:$0xff]
    %v2884 = vld [vmem:[#allocation7 + $0x98] sm:$0xff]
    %v2885 = vld [vmem:[#allocation7 + $0xa0] sm:$0xff]
    %v2886 = vld [vmem:[#allocation7 + $0xa8] sm:$0xff]
    %v2887 = vld [vmem:[#allocation7 + $0xb0] sm:$0xff]
    %v2888 = vld [vmem:[#allocation7 + $0xb8] sm:$0xff]
    %v2889 = vld [vmem:[#allocation7 + $0xc0] sm:$0xff]
    %v2890 = vld [vmem:[#allocation7 + $0xc8] sm:$0xff]
    %v2891 = vld [vmem:[#allocation7 + $0xd0] sm:$0xff]
    %v2892 = vld [vmem:[#allocation7 + $0xd8] sm:$0xff]
    %v2893 = vld [vmem:[#allocation7 + $0xe0] sm:$0xff]
    %v2894 = vld [vmem:[#allocation7 + $0xe8] sm:$0xff]
    %v2895 = vld [vmem:[#allocation7 + $0xf0] sm:$0xff]
    %v2896 = vld [vmem:[#allocation7 + $0xf8] sm:$0xff]
    %v2897 = vld [vmem:[#allocation9] sm:$0x3]
    %v2899 = vlaneseq
    %v2900 = vshrl.u32 %v2899, 7
    %v2901 = vsub.s32 0, %v2900
    %v2902 = vrot.slane %v2897, %v2901
    %v2903 = vlaneseq
    %v2904 = vshrl.u32 %v2903, 7
    %v2905 = vsub.s32 1, %v2904
    %v2906 = vrot.slane %v2897, %v2905
    %v2941 = vunpack.c.l.b16 %v2865
    %v2942 = vunpack.c.h.b16 %v2865
    %v2943 = vunpack.c.l.b16 %v2866
    %v2944 = vunpack.c.h.b16 %v2866
    %v2945 = vunpack.c.l.b16 %v2867
    %v2946 = vunpack.c.h.b16 %v2867
    %v2947 = vunpack.c.l.b16 %v2868
    %v2948 = vunpack.c.h.b16 %v2868
    %v2949 = vunpack.c.l.b16 %v2869
    %v2950 = vunpack.c.h.b16 %v2869
    %v2951 = vunpack.c.l.b16 %v2870
    %v2952 = vunpack.c.h.b16 %v2870
    %v2953 = vunpack.c.l.b16 %v2871
    %v2954 = vunpack.c.h.b16 %v2871
    %v2955 = vunpack.c.l.b16 %v2872
    %v2956 = vunpack.c.h.b16 %v2872
    %v2957 = vunpack.c.l.b16 %v2873
    %v2958 = vunpack.c.h.b16 %v2873
    %v2959 = vunpack.c.l.b16 %v2874
    %v2960 = vunpack.c.h.b16 %v2874
    %v2961 = vunpack.c.l.b16 %v2875
    %v2962 = vunpack.c.h.b16 %v2875
    %v2963 = vunpack.c.l.b16 %v2876
    %v2964 = vunpack.c.h.b16 %v2876
    %v2965 = vunpack.c.l.b16 %v2877
    %v2966 = vunpack.c.h.b16 %v2877
    %v2967 = vunpack.c.l.b16 %v2878
    %v2968 = vunpack.c.h.b16 %v2878
    %v2969 = vunpack.c.l.b16 %v2879
    %v2970 = vunpack.c.h.b16 %v2879
    %v2971 = vunpack.c.l.b16 %v2880
    %v2972 = vunpack.c.h.b16 %v2880
    %v2973 = vunpack.c.l.b16 %v2881
    %v2974 = vunpack.c.h.b16 %v2881
    %v2975 = vunpack.c.l.b16 %v2882
    %v2976 = vunpack.c.h.b16 %v2882
    %v2977 = vunpack.c.l.b16 %v2883
    %v2978 = vunpack.c.h.b16 %v2883
    %v2979 = vunpack.c.l.b16 %v2884
    %v2980 = vunpack.c.h.b16 %v2884
    %v2981 = vunpack.c.l.b16 %v2885
    %v2982 = vunpack.c.h.b16 %v2885
    %v2983 = vunpack.c.l.b16 %v2886
    %v2984 = vunpack.c.h.b16 %v2886
    %v2985 = vunpack.c.l.b16 %v2887
    %v2986 = vunpack.c.h.b16 %v2887
    %v2987 = vunpack.c.l.b16 %v2888
    %v2988 = vunpack.c.h.b16 %v2888
    %v2989 = vunpack.c.l.b16 %v2889
    %v2990 = vunpack.c.h.b16 %v2889
    %v2991 = vunpack.c.l.b16 %v2890
    %v2992 = vunpack.c.h.b16 %v2890
    %v2993 = vunpack.c.l.b16 %v2891
    %v2994 = vunpack.c.h.b16 %v2891
    %v2995 = vunpack.c.l.b16 %v2892
    %v2996 = vunpack.c.h.b16 %v2892
    %v2997 = vunpack.c.l.b16 %v2893
    %v2998 = vunpack.c.h.b16 %v2893
    %v2999 = vunpack.c.l.b16 %v2894
    %v3000 = vunpack.c.h.b16 %v2894
    %v3001 = vunpack.c.l.b16 %v2895
    %v3002 = vunpack.c.h.b16 %v2895
    %v3003 = vunpack.c.l.b16 %v2896
    %v3004 = vunpack.c.h.b16 %v2896
    %v3005 = vpack.c.b16 %v2943, %v2941
    %v3006 = vpack.c.b16 %v2944, %v2942
    %v3007 = vpack.c.b16 %v2947, %v2945
    %v3008 = vpack.c.b16 %v2948, %v2946
    %v3009 = vpack.c.b16 %v2951, %v2949
    %v3010 = vpack.c.b16 %v2952, %v2950
    %v3011 = vpack.c.b16 %v2955, %v2953
    %v3012 = vpack.c.b16 %v2956, %v2954
    %v3013 = vpack.c.b16 %v2959, %v2957
    %v3014 = vpack.c.b16 %v2960, %v2958
    %v3015 = vpack.c.b16 %v2963, %v2961
    %v3016 = vpack.c.b16 %v2964, %v2962
    %v3017 = vpack.c.b16 %v2967, %v2965
    %v3018 = vpack.c.b16 %v2968, %v2966
    %v3019 = vpack.c.b16 %v2971, %v2969
    %v3020 = vpack.c.b16 %v2972, %v2970
    %v3021 = vpack.c.b16 %v2975, %v2973
    %v3022 = vpack.c.b16 %v2976, %v2974
    %v3023 = vpack.c.b16 %v2979, %v2977
    %v3024 = vpack.c.b16 %v2980, %v2978
    %v3025 = vpack.c.b16 %v2983, %v2981
    %v3026 = vpack.c.b16 %v2984, %v2982
    %v3027 = vpack.c.b16 %v2987, %v2985
    %v3028 = vpack.c.b16 %v2988, %v2986
    %v3029 = vpack.c.b16 %v2991, %v2989
    %v3030 = vpack.c.b16 %v2992, %v2990
    %v3031 = vpack.c.b16 %v2995, %v2993
    %v3032 = vpack.c.b16 %v2996, %v2994
    %v3033 = vpack.c.b16 %v2999, %v2997
    %v3034 = vpack.c.b16 %v3000, %v2998
    %v3035 = vpack.c.b16 %v3003, %v3001
    %v3036 = vpack.c.b16 %v3004, %v3002
    %3069 = vmatprep.subr.bf16.mxu0 %v3020
    %3070 = vmatpush1.bf16.msra.mxu0 %v3019
    %3071 = vmatprep.subr.bf16.mxu0 %v3018
    %3072 = vmatpush1.bf16.msra.mxu0 %v3017
    %3073 = vmatprep.subr.bf16.mxu0 %v3016
    %3074 = vmatpush1.bf16.msra.mxu0 %v3015
    %3075 = vmatprep.subr.bf16.mxu0 %v3014
    %3076 = vmatpush1.bf16.msra.mxu0 %v3013
    %3077 = vmatprep.subr.bf16.mxu0 %v3012
    %3078 = vmatpush1.bf16.msra.mxu0 %v3011
    %3079 = vmatprep.subr.bf16.mxu0 %v3010
    %3080 = vmatpush1.bf16.msra.mxu0 %v3009
    %3081 = vmatprep.subr.bf16.mxu0 %v3008
    %3082 = vmatpush1.bf16.msra.mxu0 %v3007
    %3083 = vmatprep.subr.bf16.mxu0 %v3006
    %3084 = vmatpush1.bf16.msra.mxu0 %v3005
    %3085 = vmatprep.subr.bf16.mxu0 %v3036
    %3086 = vmatpush2.bf16.msra.mxu0 %v3035
    %3087 = vmatprep.subr.bf16.mxu0 %v3034
    %3088 = vmatpush2.bf16.msra.mxu0 %v3033
    %3089 = vmatprep.subr.bf16.mxu0 %v3032
    %3090 = vmatpush2.bf16.msra.mxu0 %v3031
    %3091 = vmatprep.subr.bf16.mxu0 %v3030
    %3092 = vmatpush2.bf16.msra.mxu0 %v3029
    %3093 = vmatprep.subr.bf16.mxu0 %v3028
    %3094 = vmatpush2.bf16.msra.mxu0 %v3027
    %3095 = vmatprep.subr.bf16.mxu0 %v3026
    %3096 = vmatpush2.bf16.msra.mxu0 %v3025
    %3097 = vmatprep.subr.bf16.mxu0 %v3024
    %3098 = vmatpush2.bf16.msra.mxu0 %v3023
    %3099 = vmatprep.subr.bf16.mxu0 %v3022
    %3100 = vmatpush2.bf16.msra.mxu0 %v3021
    %3101 = vmatprep.mubr.bf16.mxu0 %v2864
    %3102 = vmatmul.mubr.bf16.gmra.mxu0 %v2863
    %v3103 = vpop.f32.mrf.mxu0
    %v3104 = vadd.f32 %v2902, %v3103
    %v3105 = vpop.f32.mrf.mxu0
    %v3106 = vadd.f32 %v2906, %v3105
    %v3107 = vpop.f32.mrf.mxu0
    %v3108 = vpop.f32.mrf.mxu0
    %3109 = vdwg.mxu0
    %v3110 = vmax.f32 %v3104, 0.0
    %v3111 = vmax.f32 %v3106, 0.0
    %v3112 = vpack.c.bf16 %v3110, %v3110
    %v3113 = vpack.c.bf16 %v3111, %v3111
    %v3114 = vld [vmem:[#allocation10] sm:$0xf]
    %v3115 = vld [vmem:[#allocation10 + $0x4] sm:$0xf]
    %v3116 = vld [vmem:[#allocation10 + $0x8] sm:$0xf]
    %v3117 = vld [vmem:[#allocation10 + $0xc] sm:$0xf]
    %v3118 = vld [vmem:[#allocation10 + $0x10] sm:$0xf]
    %v3119 = vld [vmem:[#allocation10 + $0x14] sm:$0xf]
    %v3120 = vld [vmem:[#allocation10 + $0x18] sm:$0xf]
    %v3121 = vld [vmem:[#allocation10 + $0x1c] sm:$0xf]
    %v3122 = vld [vmem:[#allocation10 + $0x20] sm:$0xf]
    %v3123 = vld [vmem:[#allocation10 + $0x24] sm:$0xf]
    %v3124 = vld [vmem:[#allocation10 + $0x28] sm:$0xf]
    %v3125 = vld [vmem:[#allocation10 + $0x2c] sm:$0xf]
    %v3126 = vld [vmem:[#allocation10 + $0x30] sm:$0xf]
    %v3127 = vld [vmem:[#allocation10 + $0x34] sm:$0xf]
    %v3128 = vld [vmem:[#allocation10 + $0x38] sm:$0xf]
    %v3129 = vld [vmem:[#allocation10 + $0x3c] sm:$0xf]
    %v3130 = vld [vmem:[#allocation10 + $0x40] sm:$0xf]
    %v3131 = vld [vmem:[#allocation10 + $0x44] sm:$0xf]
    %v3132 = vld [vmem:[#allocation10 + $0x48] sm:$0xf]
    %v3133 = vld [vmem:[#allocation10 + $0x4c] sm:$0xf]
    %v3134 = vld [vmem:[#allocation10 + $0x50] sm:$0xf]
    %v3135 = vld [vmem:[#allocation10 + $0x54] sm:$0xf]
    %v3136 = vld [vmem:[#allocation10 + $0x58] sm:$0xf]
    %v3137 = vld [vmem:[#allocation10 + $0x5c] sm:$0xf]
    %v3138 = vld [vmem:[#allocation10 + $0x60] sm:$0xf]
    %v3139 = vld [vmem:[#allocation10 + $0x64] sm:$0xf]
    %v3140 = vld [vmem:[#allocation10 + $0x68] sm:$0xf]
    %v3141 = vld [vmem:[#allocation10 + $0x6c] sm:$0xf]
    %v3142 = vld [vmem:[#allocation10 + $0x70] sm:$0xf]
    %v3143 = vld [vmem:[#allocation10 + $0x74] sm:$0xf]
    %v3144 = vld [vmem:[#allocation10 + $0x78] sm:$0xf]
    %v3145 = vld [vmem:[#allocation10 + $0x7c] sm:$0xf]
    %v3146 = vld [vmem:[#allocation12] sm:$0x1]
    %v3148 = vlaneseq
    %v3149 = vshrl.u32 %v3148, 7
    %v3150 = vsub.s32 0, %v3149
    %v3151 = vrot.slane %v3146, %v3150
    %v3185 = vunpack.c.l.b16 %v3114
    %v3186 = vunpack.c.l.b16 %v3115
    %v3187 = vunpack.c.l.b16 %v3116
    %v3188 = vunpack.c.l.b16 %v3117
    %v3189 = vunpack.c.l.b16 %v3118
    %v3190 = vunpack.c.l.b16 %v3119
    %v3191 = vunpack.c.l.b16 %v3120
    %v3192 = vunpack.c.l.b16 %v3121
    %v3193 = vunpack.c.l.b16 %v3122
    %v3194 = vunpack.c.l.b16 %v3123
    %v3195 = vunpack.c.l.b16 %v3124
    %v3196 = vunpack.c.l.b16 %v3125
    %v3197 = vunpack.c.l.b16 %v3126
    %v3198 = vunpack.c.l.b16 %v3127
    %v3199 = vunpack.c.l.b16 %v3128
    %v3200 = vunpack.c.l.b16 %v3129
    %v3201 = vunpack.c.l.b16 %v3130
    %v3202 = vunpack.c.l.b16 %v3131
    %v3203 = vunpack.c.l.b16 %v3132
    %v3204 = vunpack.c.l.b16 %v3133
    %v3205 = vunpack.c.l.b16 %v3134
    %v3206 = vunpack.c.l.b16 %v3135
    %v3207 = vunpack.c.l.b16 %v3136
    %v3208 = vunpack.c.l.b16 %v3137
    %v3209 = vunpack.c.l.b16 %v3138
    %v3210 = vunpack.c.l.b16 %v3139
    %v3211 = vunpack.c.l.b16 %v3140
    %v3212 = vunpack.c.l.b16 %v3141
    %v3213 = vunpack.c.l.b16 %v3142
    %v3214 = vunpack.c.l.b16 %v3143
    %v3215 = vunpack.c.l.b16 %v3144
    %v3216 = vunpack.c.l.b16 %v3145
    %v3217 = vpack.c.b16 %v3186, %v3185
    %v3218 = vpack.c.b16 %v3188, %v3187
    %v3219 = vpack.c.b16 %v3190, %v3189
    %v3220 = vpack.c.b16 %v3192, %v3191
    %v3221 = vpack.c.b16 %v3194, %v3193
    %v3222 = vpack.c.b16 %v3196, %v3195
    %v3223 = vpack.c.b16 %v3198, %v3197
    %v3224 = vpack.c.b16 %v3200, %v3199
    %v3225 = vpack.c.b16 %v3202, %v3201
    %v3226 = vpack.c.b16 %v3204, %v3203
    %v3227 = vpack.c.b16 %v3206, %v3205
    %v3228 = vpack.c.b16 %v3208, %v3207
    %v3229 = vpack.c.b16 %v3210, %v3209
    %v3230 = vpack.c.b16 %v3212, %v3211
    %v3231 = vpack.c.b16 %v3214, %v3213
    %v3232 = vpack.c.b16 %v3216, %v3215
    %3249 = vmatprep.subr.bf16.mxu0 0
    %3250 = vmatpush1.bf16.msra.mxu0 %v3224
    %3251 = vmatprep.subr.bf16.mxu0 0
    %3252 = vmatpush1.bf16.msra.mxu0 %v3223
    %3253 = vmatprep.subr.bf16.mxu0 0
    %3254 = vmatpush1.bf16.msra.mxu0 %v3222
    %3255 = vmatprep.subr.bf16.mxu0 0
    %3256 = vmatpush1.bf16.msra.mxu0 %v3221
    %3257 = vmatprep.subr.bf16.mxu0 0
    %3258 = vmatpush1.bf16.msra.mxu0 %v3220
    %3259 = vmatprep.subr.bf16.mxu0 0
    %3260 = vmatpush1.bf16.msra.mxu0 %v3219
    %3261 = vmatprep.subr.bf16.mxu0 0
    %3262 = vmatpush1.bf16.msra.mxu0 %v3218
    %3263 = vmatprep.subr.bf16.mxu0 0
    %3264 = vmatpush1.bf16.msra.mxu0 %v3217
    %3265 = vmatprep.subr.bf16.mxu0 0
    %3266 = vmatpush2.bf16.msra.mxu0 %v3232
    %3267 = vmatprep.subr.bf16.mxu0 0
    %3268 = vmatpush2.bf16.msra.mxu0 %v3231
    %3269 = vmatprep.subr.bf16.mxu0 0
    %3270 = vmatpush2.bf16.msra.mxu0 %v3230
    %3271 = vmatprep.subr.bf16.mxu0 0
    %3272 = vmatpush2.bf16.msra.mxu0 %v3229
    %3273 = vmatprep.subr.bf16.mxu0 0
    %3274 = vmatpush2.bf16.msra.mxu0 %v3228
    %3275 = vmatprep.subr.bf16.mxu0 0
    %3276 = vmatpush2.bf16.msra.mxu0 %v3227
    %3277 = vmatprep.subr.bf16.mxu0 0
    %3278 = vmatpush2.bf16.msra.mxu0 %v3226
    %3279 = vmatprep.subr.bf16.mxu0 0
    %3280 = vmatpush2.bf16.msra.mxu0 %v3225
    %3281 = vmatprep.mubr.bf16.mxu0 %v3113
    %3282 = vmatmul.mubr.bf16.gmra.mxu0 %v3112
    %v3283 = vpop.f32.mrf.mxu0
    %v3284 = vadd.f32 %v3151, %v3283
    %v3285 = vpop.f32.mrf.mxu0
    %v3286 = vpop.f32.mrf.mxu0
    %v3287 = vpop.f32.mrf.mxu0
    %3288 = vdwg.mxu0
    %3289 = vmax.xlane.f32.xlu0 %v3284
    %v3290 = vpop.xlane.xlu0 %3289
    %v3291 = vsub.f32 %v3284, %v3290
    %v3292 = vmul.f32 %v3291, 1.442695
    %v3293 = vpow.pop %v3292
    %3294 = vadd.xlane.f32.xlu0 %v3293
    %v3295 = vpop.xlane.xlu0 %3294
    %v3296 = vrcp.pop %v3295
    %v3297 = vmul.f32 %v3293, %v3296
    %3298 = vst [vmem:[%s8] sm:$0xff] %v3297
    // Predicated region
    $region62: #{pong_policy_forward.1} parent=1 // pred_check
      _
    $region63: #{pong_policy_forward.1} parent=1 // pred_check_branch
      %3300 = sbr.rel (0) target = $region65
    $region64: #{pong_policy_forward.1} parent=1 // pred_region
      _
    $region65: #{pong_policy_forward.1} parent=1 // pred_fallthru
      _
    // Predicated region
    $region66: #{pong_policy_forward.1} parent=1 // pred_check
      _
    $region67: #{pong_policy_forward.1} parent=1 // pred_check_branch
      %3302 = sbr.rel (0) target = $region69
    $region68: #{pong_policy_forward.1} parent=1 // pred_region
      _
    $region69: #{pong_policy_forward.1} parent=1 // pred_fallthru
      _
    %3303 = vsyncpa [#allocation3], 1
    %3304 = vsyncpa [#allocation5], 1
    %3305 = vsyncpa [#allocation8], 1
    %3306 = vsyncpa [#allocation11], 1

</llo_original>
